<compile_context>
chip_gen: v5e
topology: v5e:2x2
jax: 0.10.0
libtpu: 0.0.40
codegen_flags: <defaults>
</compile_context>

<pallas_src>
import functools

import jax
import jax.numpy as jnp
import numpy as np
from jax import lax
from jax.experimental import pallas as pl
from jax.experimental.pallas import tpu as pltpu


# ----------------------------- Pallas kernel ---------------------------------
def convlstm_kernel(px_ref, hpad_ref, c_ref, wx_ref, wh_ref, bias_ref, out_ref,
                    *, ho, wo, hk):
    """Fused ConvLSTM cell for a block of `nb` images.

    px_ref  : (nb*ho*wo, K*K*Cin)     bf16  im2col patches of the input frame
    hpad_ref: (nb, ho+2p, wo+2p, Ch)  bf16  halo ('same')-padded hidden state
    c_ref   : (nb*ho*wo, Ch)          f32   current cell state
    wx_ref  : (K*K*Cin, 4*Ch)         bf16  input-conv weights (matmul layout)
    wh_ref  : (K*K, Ch, 4*Ch)         bf16  hidden-conv weights, one slab / tap
    bias_ref: (1, 4*Ch)               f32   folded conv biases + per-gate biases
    out_ref : (nb*ho*wo, 2*Ch)        f32   [h_next | c_next]
    """
    nb = hpad_ref.shape[0]
    ch = c_ref.shape[-1]
    m = nb * ho * wo

    # Input conv: one bf16 MXU matmul, f32 accumulation; biases folded in once.
    gates = jnp.dot(px_ref[...], wx_ref[...], preferred_element_type=jnp.float32)
    gates = gates + bias_ref[...]                      # broadcast (1, 4*Ch)

    # Hidden conv: accumulate K*K shifted taps straight from the halo-padded
    # NHWC hidden block -- the hidden im2col is never materialized in HBM.
    for kh in range(hk):
        for kw in range(hk):
            tap = hpad_ref[:, kh:kh + ho, kw:kw + wo, :]       # (nb, ho, wo, Ch) bf16
            tap = tap.reshape(m, ch)                           # bf16 MXU operand
            gates = gates + jnp.dot(tap, wh_ref[kh * hk + kw],
                                    preferred_element_type=jnp.float32)

    # Gate math, all in f32, on contiguous lane slabs.
    ifo = jax.nn.sigmoid(gates[:, : 3 * ch])           # i, f, o together
    g = jnp.tanh(gates[:, 3 * ch:])
    i = ifo[:, 0 * ch:1 * ch]
    f = ifo[:, 1 * ch:2 * ch]
    o = ifo[:, 2 * ch:3 * ch]

    c_next = f * c_ref[...] + i * g
    h_next = o * jnp.tanh(c_next)

    # Single fused (m, 2*Ch) output block; split back into h / c in the wrapper.
    out_ref[:, 0 * ch:1 * ch] = h_next
    out_ref[:, 1 * ch:2 * ch] = c_next


# ------------------------------- glue ----------------------------------------
def _im2col(x_nhwc, k, stride, pad, dil):
    """(kh, kw, c)-ordered patches; returns ([B*Ho*Wo, K*K*C], (Ho, Wo))."""
    b, h, w, c = x_nhwc.shape
    xp = jnp.pad(x_nhwc, ((0, 0), (pad, pad), (pad, pad), (0, 0)))
    ho = (h + 2 * pad - dil * (k - 1) - 1) // stride + 1
    wo = (w + 2 * pad - dil * (k - 1) - 1) // stride + 1
    cols = []
    for kh in range(k):
        for kw in range(k):
            cols.append(
                xp[:,
                   kh * dil: kh * dil + stride * (ho - 1) + 1: stride,
                   kw * dil: kw * dil + stride * (wo - 1) + 1: stride,
                   :])
    patches = jnp.concatenate(cols, axis=-1)           # (B, Ho, Wo, K*K*C)
    return patches.reshape(b * ho * wo, k * k * c), (ho, wo)


def _pick_batch_block(b, rows_per_batch, target_rows=1024):
    """Largest per-step batch block (whole images) such that:
       * rows per block is sublane-aligned (multiple of 8), unless the block
         covers the full array (full-dim blocks are always legal),
       * >= 2 grid steps remain whenever possible (megacore / v7x: 2 TCs),
       * rows per block stays near `target_rows` (big DMA bursts, low per-step
         overhead) whenever achievable."""
    candidates = []
    for d in range(1, b + 1):
        if b % d:
            continue
        rows = d * rows_per_batch
        if d != b and rows % 8 != 0:
            continue
        candidates.append(d)
    multi = [d for d in candidates if b // d >= 2]
    pool = multi if multi else candidates
    small = [d for d in pool
             if d * rows_per_batch <= max(target_rows, rows_per_batch)]
    return max(small) if small else min(pool)


def conv_lstm_cell_pallas(params, x_nchw, h_nchw, c_nchw, *,
                          inp_kernel_size, hid_kernel_size,
                          inp_stride=1, inp_padding=0, ik_dilation=1):
    # NOTE: for a T-step rollout, keep h/c in NHWC across steps and only do the
    # NCHW<->NHWC conversion at the rollout boundaries -- the transposes below
    # are interface glue on an HBM-bound op.
    b, cin = x_nchw.shape[0], x_nchw.shape[1]
    hidden = h_nchw.shape[1]
    assert hid_kernel_size % 2 == 1, "'same' hidden padding assumes odd kernel"
    # TODO(synk): even hid_kernel_size needs PyTorch-style asymmetric 'same' padding.

    x_nhwc = jnp.transpose(x_nchw, (0, 2, 3, 1)).astype(jnp.bfloat16)
    # Hidden state is only an MXU operand -> ship it bf16 (halves its HBM/VMEM
    # traffic); all accumulation and gate math stay f32 in the kernel.
    h_nhwc = jnp.transpose(h_nchw, (0, 2, 3, 1)).astype(jnp.bfloat16)
    c_nhwc = jnp.transpose(c_nchw, (0, 2, 3, 1)).astype(jnp.float32)

    # Input conv -> im2col (cheap: only K*K*Cin columns).  Hidden state stays
    # raw NHWC + halo padding; its im2col happens implicitly inside the kernel.
    px, (ho, wo) = _im2col(x_nhwc, inp_kernel_size, inp_stride,
                           inp_padding, ik_dilation)
    assert (ho, wo) == (h_nhwc.shape[1], h_nhwc.shape[2]), \
        "input-conv output must match hidden spatial dims"

    hp = (hid_kernel_size - 1) // 2
    h_pad = jnp.pad(h_nhwc, ((0, 0), (hp, hp), (hp, hp), (0, 0)))

    m = b * ho * wo
    kx_dim = inp_kernel_size * inp_kernel_size * cin
    taps = hid_kernel_size * hid_kernel_size

    # OIHW -> (kh, kw, in, out): input conv as one (K*K*Cin, 4*Ch) matrix,
    # hidden conv as K*K per-tap (Ch, 4*Ch) slabs.  bf16 for the MXU.
    wx_mat = jnp.transpose(params["wx"], (2, 3, 1, 0)) \
        .reshape(kx_dim, 4 * hidden).astype(jnp.bfloat16)
    wh_stk = jnp.transpose(params["wh"], (2, 3, 1, 0)) \
        .reshape(taps, hidden, 4 * hidden).astype(jnp.bfloat16)

    gate_bias = jnp.concatenate([params["i_bias"].reshape(hidden),
                                 params["f_bias"].reshape(hidden),
                                 params["o_bias"].reshape(hidden),
                                 params["g_bias"].reshape(hidden)])
    bias = (params["bx"] + params["bh"] + gate_bias).reshape(1, 4 * hidden)
    bias = bias.astype(jnp.float32)

    c_flat = c_nhwc.reshape(m, hidden)

    bb = _pick_batch_block(b, ho * wo)
    rows = bb * ho * wo
    grid = (b // bb,)
    hp2 = 2 * hp

    kernel = functools.partial(convlstm_kernel,
                               ho=ho, wo=wo, hk=hid_kernel_size)

    out = pl.pallas_call(
        kernel,
        out_shape=jax.ShapeDtypeStruct((m, 2 * hidden), jnp.float32),
        grid_spec=pltpu.PrefetchScalarGridSpec(
            num_scalar_prefetch=0,
            grid=grid,
            in_specs=[
                pl.BlockSpec((rows, kx_dim), lambda i: (i, 0)),
                pl.BlockSpec((bb, ho + hp2, wo + hp2, hidden),
                             lambda i: (i, 0, 0, 0)),
                pl.BlockSpec((rows, hidden), lambda i: (i, 0)),
                # Constant-index blocks: pipeline keeps one resident VMEM copy.
                pl.BlockSpec((kx_dim, 4 * hidden), lambda i: (0, 0)),
                pl.BlockSpec((taps, hidden, 4 * hidden), lambda i: (0, 0, 0)),
                pl.BlockSpec((1, 4 * hidden), lambda i: (0, 0)),
            ],
            out_specs=pl.BlockSpec((rows, 2 * hidden), lambda i: (i, 0)),
        ),
        compiler_params=pltpu.CompilerParams(
            dimension_semantics=("parallel",),
            vmem_limit_bytes=32 * 1024 * 1024),
    )(px, h_pad, c_flat, wx_mat, wh_stk, bias)

    h_flat, c_next_flat = out[:, :hidden], out[:, hidden:]
    h_next = jnp.transpose(h_flat.reshape(b, ho, wo, hidden), (0, 3, 1, 2))
    c_next = jnp.transpose(c_next_flat.reshape(b, ho, wo, hidden), (0, 3, 1, 2))
    return h_next, c_next


# --------------------------- pure-JAX reference -------------------------------
def conv_lstm_cell_ref(params, x, h, c, *, inp_kernel_size, hid_kernel_size,
                       inp_stride, inp_padding, ik_dilation):
    dn = ("NCHW", "OIHW", "NCHW")
    inp_convs = lax.conv_general_dilated(
        x, params["wx"], window_strides=(inp_stride, inp_stride),
        padding=[(inp_padding, inp_padding)] * 2,
        rhs_dilation=(ik_dilation, ik_dilation),
        dimension_numbers=dn) + params["bx"].reshape(1, -1, 1, 1)
    hp = (hid_kernel_size - 1) // 2
    hid_convs = lax.conv_general_dilated(
        h, params["wh"], window_strides=(1, 1),
        padding=[(hp, hp)] * 2,
        dimension_numbers=dn) + params["bh"].reshape(1, -1, 1, 1)
    ic, fc, oc, gc = jnp.split(inp_convs + hid_convs, 4, axis=1)
    i = jax.nn.sigmoid(ic + params["i_bias"][None])
    f = jax.nn.sigmoid(fc + params["f_bias"][None])
    o = jax.nn.sigmoid(oc + params["o_bias"][None])
    g = jnp.tanh(gc + params["g_bias"][None])
    c_next = f * c + i * g
    h_next = o * jnp.tanh(c_next)
    return h_next, c_next


# ---------------------------------- main --------------------------------------
if __name__ == "__main__":
    # Module hyperparameters (chosen so hid_shape(input) == input spatial dims).
    B, Cin, H, W = 2, 4, 16, 16
    HIDDEN = 32
    IK, HK = 3, 3
    STRIDE, PAD, DIL = 1, 1, 1

    key = jax.random.PRNGKey(0)
    ks = jax.random.split(key, 10)
    params = {
        # nn.Conv2d weight layout: (out_ch, in_ch, kH, kW)
        "wx": 0.1 * jax.random.normal(ks[0], (4 * HIDDEN, Cin, IK, IK), jnp.float32),
        "bx": 0.1 * jax.random.normal(ks[1], (4 * HIDDEN,), jnp.float32),
        "wh": 0.1 * jax.random.normal(ks[2], (4 * HIDDEN, HIDDEN, HK, HK), jnp.float32),
        "bh": 0.1 * jax.random.normal(ks[3], (4 * HIDDEN,), jnp.float32),
        # gate biases (hidden_channels, 1, 1); zeros in the module, randomized
        # here to exercise the add path.
        "i_bias": 0.1 * jax.random.normal(ks[4], (HIDDEN, 1, 1), jnp.float32),
        "f_bias": 0.1 * jax.random.normal(ks[5], (HIDDEN, 1, 1), jnp.float32),
        "o_bias": 0.1 * jax.random.normal(ks[6], (HIDDEN, 1, 1), jnp.float32),
        "g_bias": 0.1 * jax.random.normal(ks[7], (HIDDEN, 1, 1), jnp.float32),
    }

    x = jax.random.normal(ks[8], (B, Cin, H, W), jnp.float32)
    hk_, ck_ = jax.random.split(ks[9])
    h_cur = 0.05 * jax.random.normal(hk_, (B, HIDDEN, H, W), jnp.float32)
    c_cur = 0.05 * jax.random.normal(ck_, (B, HIDDEN, H, W), jnp.float32)

    cell = jax.jit(functools.partial(
        conv_lstm_cell_pallas,
        inp_kernel_size=IK, hid_kernel_size=HK,
        inp_stride=STRIDE, inp_padding=PAD, ik_dilation=DIL))

    h_next, c_next = cell(params, x, h_cur, c_cur)
    jax.block_until_ready((h_next, c_next))

    h_ref, c_ref = conv_lstm_cell_ref(
        params, x, h_cur, c_cur,
        inp_kernel_size=IK, hid_kernel_size=HK,
        inp_stride=STRIDE, inp_padding=PAD, ik_dilation=DIL)
    jax.block_until_ready((h_ref, c_ref))

    # bf16 MXU operands (f32 accumulation / f32 gate math) vs. a pure-f32
    # reference -> tolerance 2e-2.
    np.testing.assert_allclose(np.asarray(h_next), np.asarray(h_ref),
                               rtol=2e-2, atol=2e-2)
    np.testing.assert_allclose(np.asarray(c_next), np.asarray(c_ref),
                               rtol=2e-2, atol=2e-2)
    print("KERNEL_OK")
</pallas_src>

<mosaic_0001>
module attributes {stable_mosaic.version = 11 : i64} {
  func.func @convlstm_kernel(%arg0: i32, %arg1: memref<256x36xbf16, #tpu.memory_space<vmem>>, %arg2: memref<1x18x18x32xbf16, #tpu.memory_space<vmem>>, %arg3: memref<256x32xf32, #tpu.memory_space<vmem>>, %arg4: memref<36x128xbf16, #tpu.memory_space<vmem>>, %arg5: memref<9x32x128xbf16, #tpu.memory_space<vmem>>, %arg6: memref<1x128xf32, #tpu.memory_space<vmem>>, %arg7: memref<256x64xf32, #tpu.memory_space<vmem>>) attributes {dimension_semantics = [#tpu.dimension_semantics<parallel>], iteration_bounds = array<i64: 2>, scalar_prefetch = 0 : i64, scratch_operands = 0 : i64, tpu.core_type = #tpu.core_type<tc>, window_params = [{transform_indices = @transform_0, window_bounds = array<i64: 256, 36>}, {transform_indices = @transform_1, window_bounds = array<i64: 1, 18, 18, 32>}, {transform_indices = @transform_2, window_bounds = array<i64: 256, 32>}, {pipeline_mode = #tpu.pipeline_mode<synchronous>, transform_indices = @transform_3, window_bounds = array<i64: 36, 128>}, {pipeline_mode = #tpu.pipeline_mode<synchronous>, transform_indices = @transform_4, window_bounds = array<i64: 9, 32, 128>}, {pipeline_mode = #tpu.pipeline_mode<synchronous>, transform_indices = @transform_5, window_bounds = array<i64: 1, 128>}, {transform_indices = @transform_6, window_bounds = array<i64: 256, 64>}]} {
    %c0 = arith.constant 0 : index
    %c0_0 = arith.constant 0 : index
    %0 = vector.load %arg1[%c0, %c0_0] : memref<256x36xbf16, #tpu.memory_space<vmem>>, vector<256x36xbf16>
    %c0_1 = arith.constant 0 : index
    %c0_2 = arith.constant 0 : index
    %1 = vector.load %arg4[%c0_1, %c0_2] : memref<36x128xbf16, #tpu.memory_space<vmem>>, vector<36x128xbf16>
    %cst = arith.constant dense<0.000000e+00> : vector<256x128xf32>
    %2 = tpu.matmul %0, %1, %cst {dimension_numbers = #tpu.dot_dimension_numbers<[1], [0], [0], [1], [0, 0, 1, 1], [], []>} : vector<256x36xbf16>, vector<36x128xbf16>, vector<256x128xf32> -> vector<256x128xf32>
    %c0_3 = arith.constant 0 : index
    %c0_4 = arith.constant 0 : index
    %3 = vector.load %arg6[%c0_3, %c0_4] : memref<1x128xf32, #tpu.memory_space<vmem>>, vector<1x128xf32>
    %4 = vector.broadcast %3 : vector<1x128xf32> to vector<256x128xf32>
    %5 = arith.addf %2, %4 : vector<256x128xf32>
    %c0_5 = arith.constant 0 : index
    %c0_6 = arith.constant 0 : index
    %c0_7 = arith.constant 0 : index
    %c0_8 = arith.constant 0 : index
    %6 = vector.load %arg2[%c0_5, %c0_6, %c0_7, %c0_8] : memref<1x18x18x32xbf16, #tpu.memory_space<vmem>>, vector<1x16x16x32xbf16>
    %7 = vector.shape_cast %6 : vector<1x16x16x32xbf16> to vector<256x32xbf16>
    %c0_9 = arith.constant 0 : index
    %c0_10 = arith.constant 0 : index
    %c0_11 = arith.constant 0 : index
    %8 = vector.load %arg5[%c0_9, %c0_10, %c0_11] : memref<9x32x128xbf16, #tpu.memory_space<vmem>>, vector<1x32x128xbf16>
    %9 = vector.shape_cast %8 : vector<1x32x128xbf16> to vector<32x128xbf16>
    %cst_12 = arith.constant dense<0.000000e+00> : vector<256x128xf32>
    %10 = tpu.matmul %7, %9, %cst_12 {dimension_numbers = #tpu.dot_dimension_numbers<[1], [0], [0], [1], [0, 0, 1, 1], [], []>} : vector<256x32xbf16>, vector<32x128xbf16>, vector<256x128xf32> -> vector<256x128xf32>
    %11 = arith.addf %5, %10 : vector<256x128xf32>
    %c0_13 = arith.constant 0 : index
    %c0_14 = arith.constant 0 : index
    %c1 = arith.constant 1 : index
    %c0_15 = arith.constant 0 : index
    %12 = vector.load %arg2[%c0_13, %c0_14, %c1, %c0_15] : memref<1x18x18x32xbf16, #tpu.memory_space<vmem>>, vector<1x16x16x32xbf16>
    %13 = vector.shape_cast %12 : vector<1x16x16x32xbf16> to vector<256x32xbf16>
    %c1_16 = arith.constant 1 : index
    %c0_17 = arith.constant 0 : index
    %c0_18 = arith.constant 0 : index
    %14 = vector.load %arg5[%c1_16, %c0_17, %c0_18] : memref<9x32x128xbf16, #tpu.memory_space<vmem>>, vector<1x32x128xbf16>
    %15 = vector.shape_cast %14 : vector<1x32x128xbf16> to vector<32x128xbf16>
    %cst_19 = arith.constant dense<0.000000e+00> : vector<256x128xf32>
    %16 = tpu.matmul %13, %15, %cst_19 {dimension_numbers = #tpu.dot_dimension_numbers<[1], [0], [0], [1], [0, 0, 1, 1], [], []>} : vector<256x32xbf16>, vector<32x128xbf16>, vector<256x128xf32> -> vector<256x128xf32>
    %17 = arith.addf %11, %16 : vector<256x128xf32>
    %c0_20 = arith.constant 0 : index
    %c0_21 = arith.constant 0 : index
    %c2 = arith.constant 2 : index
    %c0_22 = arith.constant 0 : index
    %18 = vector.load %arg2[%c0_20, %c0_21, %c2, %c0_22] : memref<1x18x18x32xbf16, #tpu.memory_space<vmem>>, vector<1x16x16x32xbf16>
    %19 = vector.shape_cast %18 : vector<1x16x16x32xbf16> to vector<256x32xbf16>
    %c2_23 = arith.constant 2 : index
    %c0_24 = arith.constant 0 : index
    %c0_25 = arith.constant 0 : index
    %20 = vector.load %arg5[%c2_23, %c0_24, %c0_25] : memref<9x32x128xbf16, #tpu.memory_space<vmem>>, vector<1x32x128xbf16>
    %21 = vector.shape_cast %20 : vector<1x32x128xbf16> to vector<32x128xbf16>
    %cst_26 = arith.constant dense<0.000000e+00> : vector<256x128xf32>
    %22 = tpu.matmul %19, %21, %cst_26 {dimension_numbers = #tpu.dot_dimension_numbers<[1], [0], [0], [1], [0, 0, 1, 1], [], []>} : vector<256x32xbf16>, vector<32x128xbf16>, vector<256x128xf32> -> vector<256x128xf32>
    %23 = arith.addf %17, %22 : vector<256x128xf32>
    %c0_27 = arith.constant 0 : index
    %c1_28 = arith.constant 1 : index
    %c0_29 = arith.constant 0 : index
    %c0_30 = arith.constant 0 : index
    %24 = vector.load %arg2[%c0_27, %c1_28, %c0_29, %c0_30] : memref<1x18x18x32xbf16, #tpu.memory_space<vmem>>, vector<1x16x16x32xbf16>
    %25 = vector.shape_cast %24 : vector<1x16x16x32xbf16> to vector<256x32xbf16>
    %c3 = arith.constant 3 : index
    %c0_31 = arith.constant 0 : index
    %c0_32 = arith.constant 0 : index
    %26 = vector.load %arg5[%c3, %c0_31, %c0_32] : memref<9x32x128xbf16, #tpu.memory_space<vmem>>, vector<1x32x128xbf16>
    %27 = vector.shape_cast %26 : vector<1x32x128xbf16> to vector<32x128xbf16>
    %cst_33 = arith.constant dense<0.000000e+00> : vector<256x128xf32>
    %28 = tpu.matmul %25, %27, %cst_33 {dimension_numbers = #tpu.dot_dimension_numbers<[1], [0], [0], [1], [0, 0, 1, 1], [], []>} : vector<256x32xbf16>, vector<32x128xbf16>, vector<256x128xf32> -> vector<256x128xf32>
    %29 = arith.addf %23, %28 : vector<256x128xf32>
    %c0_34 = arith.constant 0 : index
    %c1_35 = arith.constant 1 : index
    %c1_36 = arith.constant 1 : index
    %c0_37 = arith.constant 0 : index
    %30 = vector.load %arg2[%c0_34, %c1_35, %c1_36, %c0_37] : memref<1x18x18x32xbf16, #tpu.memory_space<vmem>>, vector<1x16x16x32xbf16>
    %31 = vector.shape_cast %30 : vector<1x16x16x32xbf16> to vector<256x32xbf16>
    %c4 = arith.constant 4 : index
    %c0_38 = arith.constant 0 : index
    %c0_39 = arith.constant 0 : index
    %32 = vector.load %arg5[%c4, %c0_38, %c0_39] : memref<9x32x128xbf16, #tpu.memory_space<vmem>>, vector<1x32x128xbf16>
    %33 = vector.shape_cast %32 : vector<1x32x128xbf16> to vector<32x128xbf16>
    %cst_40 = arith.constant dense<0.000000e+00> : vector<256x128xf32>
    %34 = tpu.matmul %31, %33, %cst_40 {dimension_numbers = #tpu.dot_dimension_numbers<[1], [0], [0], [1], [0, 0, 1, 1], [], []>} : vector<256x32xbf16>, vector<32x128xbf16>, vector<256x128xf32> -> vector<256x128xf32>
    %35 = arith.addf %29, %34 : vector<256x128xf32>
    %c0_41 = arith.constant 0 : index
    %c1_42 = arith.constant 1 : index
    %c2_43 = arith.constant 2 : index
    %c0_44 = arith.constant 0 : index
    %36 = vector.load %arg2[%c0_41, %c1_42, %c2_43, %c0_44] : memref<1x18x18x32xbf16, #tpu.memory_space<vmem>>, vector<1x16x16x32xbf16>
    %37 = vector.shape_cast %36 : vector<1x16x16x32xbf16> to vector<256x32xbf16>
    %c5 = arith.constant 5 : index
    %c0_45 = arith.constant 0 : index
    %c0_46 = arith.constant 0 : index
    %38 = vector.load %arg5[%c5, %c0_45, %c0_46] : memref<9x32x128xbf16, #tpu.memory_space<vmem>>, vector<1x32x128xbf16>
    %39 = vector.shape_cast %38 : vector<1x32x128xbf16> to vector<32x128xbf16>
    %cst_47 = arith.constant dense<0.000000e+00> : vector<256x128xf32>
    %40 = tpu.matmul %37, %39, %cst_47 {dimension_numbers = #tpu.dot_dimension_numbers<[1], [0], [0], [1], [0, 0, 1, 1], [], []>} : vector<256x32xbf16>, vector<32x128xbf16>, vector<256x128xf32> -> vector<256x128xf32>
    %41 = arith.addf %35, %40 : vector<256x128xf32>
    %c0_48 = arith.constant 0 : index
    %c2_49 = arith.constant 2 : index
    %c0_50 = arith.constant 0 : index
    %c0_51 = arith.constant 0 : index
    %42 = vector.load %arg2[%c0_48, %c2_49, %c0_50, %c0_51] : memref<1x18x18x32xbf16, #tpu.memory_space<vmem>>, vector<1x16x16x32xbf16>
    %43 = vector.shape_cast %42 : vector<1x16x16x32xbf16> to vector<256x32xbf16>
    %c6 = arith.constant 6 : index
    %c0_52 = arith.constant 0 : index
    %c0_53 = arith.constant 0 : index
    %44 = vector.load %arg5[%c6, %c0_52, %c0_53] : memref<9x32x128xbf16, #tpu.memory_space<vmem>>, vector<1x32x128xbf16>
    %45 = vector.shape_cast %44 : vector<1x32x128xbf16> to vector<32x128xbf16>
    %cst_54 = arith.constant dense<0.000000e+00> : vector<256x128xf32>
    %46 = tpu.matmul %43, %45, %cst_54 {dimension_numbers = #tpu.dot_dimension_numbers<[1], [0], [0], [1], [0, 0, 1, 1], [], []>} : vector<256x32xbf16>, vector<32x128xbf16>, vector<256x128xf32> -> vector<256x128xf32>
    %47 = arith.addf %41, %46 : vector<256x128xf32>
    %c0_55 = arith.constant 0 : index
    %c2_56 = arith.constant 2 : index
    %c1_57 = arith.constant 1 : index
    %c0_58 = arith.constant 0 : index
    %48 = vector.load %arg2[%c0_55, %c2_56, %c1_57, %c0_58] : memref<1x18x18x32xbf16, #tpu.memory_space<vmem>>, vector<1x16x16x32xbf16>
    %49 = vector.shape_cast %48 : vector<1x16x16x32xbf16> to vector<256x32xbf16>
    %c7 = arith.constant 7 : index
    %c0_59 = arith.constant 0 : index
    %c0_60 = arith.constant 0 : index
    %50 = vector.load %arg5[%c7, %c0_59, %c0_60] : memref<9x32x128xbf16, #tpu.memory_space<vmem>>, vector<1x32x128xbf16>
    %51 = vector.shape_cast %50 : vector<1x32x128xbf16> to vector<32x128xbf16>
    %cst_61 = arith.constant dense<0.000000e+00> : vector<256x128xf32>
    %52 = tpu.matmul %49, %51, %cst_61 {dimension_numbers = #tpu.dot_dimension_numbers<[1], [0], [0], [1], [0, 0, 1, 1], [], []>} : vector<256x32xbf16>, vector<32x128xbf16>, vector<256x128xf32> -> vector<256x128xf32>
    %53 = arith.addf %47, %52 : vector<256x128xf32>
    %c0_62 = arith.constant 0 : index
    %c2_63 = arith.constant 2 : index
    %c2_64 = arith.constant 2 : index
    %c0_65 = arith.constant 0 : index
    %54 = vector.load %arg2[%c0_62, %c2_63, %c2_64, %c0_65] : memref<1x18x18x32xbf16, #tpu.memory_space<vmem>>, vector<1x16x16x32xbf16>
    %55 = vector.shape_cast %54 : vector<1x16x16x32xbf16> to vector<256x32xbf16>
    %c8 = arith.constant 8 : index
    %c0_66 = arith.constant 0 : index
    %c0_67 = arith.constant 0 : index
    %56 = vector.load %arg5[%c8, %c0_66, %c0_67] : memref<9x32x128xbf16, #tpu.memory_space<vmem>>, vector<1x32x128xbf16>
    %57 = vector.shape_cast %56 : vector<1x32x128xbf16> to vector<32x128xbf16>
    %cst_68 = arith.constant dense<0.000000e+00> : vector<256x128xf32>
    %58 = tpu.matmul %55, %57, %cst_68 {dimension_numbers = #tpu.dot_dimension_numbers<[1], [0], [0], [1], [0, 0, 1, 1], [], []>} : vector<256x32xbf16>, vector<32x128xbf16>, vector<256x128xf32> -> vector<256x128xf32>
    %59 = arith.addf %53, %58 : vector<256x128xf32>
    %60 = vector.extract_strided_slice %59 {offsets = [0, 0], sizes = [256, 96], strides = [1, 1]} : vector<256x128xf32> to vector<256x96xf32>
    %61 = arith.negf %60 : vector<256x96xf32>
    %62 = math.exp %61 : vector<256x96xf32>
    %cst_69 = arith.constant 1.000000e+00 : f32
    %63 = vector.broadcast %cst_69 : f32 to vector<256x96xf32>
    %64 = arith.addf %63, %62 : vector<256x96xf32>
    %65 = arith.divf %63, %64 : vector<256x96xf32>
    %66 = vector.extract_strided_slice %59 {offsets = [0, 96], sizes = [256, 32], strides = [1, 1]} : vector<256x128xf32> to vector<256x32xf32>
    %67 = math.tanh %66 : vector<256x32xf32>
    %68 = vector.extract_strided_slice %65 {offsets = [0, 0], sizes = [256, 32], strides = [1, 1]} : vector<256x96xf32> to vector<256x32xf32>
    %69 = vector.extract_strided_slice %65 {offsets = [0, 32], sizes = [256, 32], strides = [1, 1]} : vector<256x96xf32> to vector<256x32xf32>
    %70 = vector.extract_strided_slice %65 {offsets = [0, 64], sizes = [256, 32], strides = [1, 1]} : vector<256x96xf32> to vector<256x32xf32>
    %c0_70 = arith.constant 0 : index
    %c0_71 = arith.constant 0 : index
    %71 = vector.load %arg3[%c0_70, %c0_71] : memref<256x32xf32, #tpu.memory_space<vmem>>, vector<256x32xf32>
    %72 = arith.mulf %69, %71 : vector<256x32xf32>
    %73 = arith.mulf %68, %67 : vector<256x32xf32>
    %74 = arith.addf %72, %73 : vector<256x32xf32>
    %75 = math.tanh %74 : vector<256x32xf32>
    %76 = arith.mulf %70, %75 : vector<256x32xf32>
    %c0_72 = arith.constant 0 : index
    %c0_73 = arith.constant 0 : index
    %77 = vector.load %arg7[%c0_72, %c0_73] : memref<256x64xf32, #tpu.memory_space<vmem>>, vector<256x32xf32>
    tpu.vector_store %arg7[%c0_72, %c0_73], %76 {strides = array<i32>} : memref<256x64xf32, #tpu.memory_space<vmem>>, vector<256x32xf32>,
    %c0_74 = arith.constant 0 : index
    %c32 = arith.constant 32 : index
    %78 = vector.load %arg7[%c0_74, %c32] : memref<256x64xf32, #tpu.memory_space<vmem>>, vector<256x32xf32>
    tpu.vector_store %arg7[%c0_74, %c32], %74 {strides = array<i32>} : memref<256x64xf32, #tpu.memory_space<vmem>>, vector<256x32xf32>,
    return
  }
  func.func @transform_0(%arg0: i32) -> (i32, i32) {
    %c0_i32 = arith.constant 0 : i32
    %c0_i32_0 = arith.constant 0 : i32
    return %arg0, %c0_i32 : i32, i32
  }
  func.func @transform_1(%arg0: i32) -> (i32, i32, i32, i32) {
    %c0_i32 = arith.constant 0 : i32
    %c0_i32_0 = arith.constant 0 : i32
    %c0_i32_1 = arith.constant 0 : i32
    %c0_i32_2 = arith.constant 0 : i32
    return %arg0, %c0_i32, %c0_i32_0, %c0_i32_1 : i32, i32, i32, i32
  }
  func.func @transform_2(%arg0: i32) -> (i32, i32) {
    %c0_i32 = arith.constant 0 : i32
    %c0_i32_0 = arith.constant 0 : i32
    return %arg0, %c0_i32 : i32, i32
  }
  func.func @transform_3(%arg0: i32) -> (i32, i32) {
    %c0_i32 = arith.constant 0 : i32
    %c0_i32_0 = arith.constant 0 : i32
    %c0_i32_1 = arith.constant 0 : i32
    return %c0_i32, %c0_i32_0 : i32, i32
  }
  func.func @transform_4(%arg0: i32) -> (i32, i32, i32) {
    %c0_i32 = arith.constant 0 : i32
    %c0_i32_0 = arith.constant 0 : i32
    %c0_i32_1 = arith.constant 0 : i32
    %c0_i32_2 = arith.constant 0 : i32
    return %c0_i32, %c0_i32_0, %c0_i32_1 : i32, i32, i32
  }
  func.func @transform_5(%arg0: i32) -> (i32, i32) {
    %c0_i32 = arith.constant 0 : i32
    %c0_i32_0 = arith.constant 0 : i32
    %c0_i32_1 = arith.constant 0 : i32
    return %c0_i32, %c0_i32_0 : i32, i32
  }
  func.func @transform_6(%arg0: i32) -> (i32, i32) {
    %c0_i32 = arith.constant 0 : i32
    %c0_i32_0 = arith.constant 0 : i32
    return %arg0, %c0_i32 : i32, i32
  }
}

</mosaic_0001>

<llo_original>
// kernel: conv_lstm_cell_pallas.1
$region0: #{conv_lstm_cell_pallas.1}
  #allocation0 [shape = 'u32[]', space=smem, size = 0x4, offset = 0x4, fixed_abs, tag = 'smem constant byte address 0x4 - core index']
  #allocation1 [shape = 'u32[72,128]{1,0:T(1,128)}', space=vmem, size = 0x9000, scoped, tag = 'internal scratch']
  %s0 = inlined_call_operand.vmem [shape: bf16[512,36], index: 0, kind: input, shape index: {}]
  %s1 = inlined_call_operand.vmem [shape: bf16[2,18,18,32], index: 1, kind: input, shape index: {}]
  %s2 = inlined_call_operand.vmem [shape: f32[512,32], index: 2, kind: input, shape index: {}]
  %s3 = inlined_call_operand.vmem [shape: bf16[36,128], index: 3, kind: input, shape index: {}]
  %s4 = inlined_call_operand.vmem [shape: bf16[9,32,128], index: 4, kind: input, shape index: {}]
  %s5 = inlined_call_operand.vmem [shape: f32[1,128], index: 5, kind: input, shape index: {}]
  %s6 = inlined_call_operand.vmem [shape: f32[512,64], index: 6, kind: output, shape index: {}]
  %s7 = sld [smem:[#allocation0]]
  $region57: #{conv_lstm_cell_pallas.1} parent=0
    _
  %s9 = ssub.s32 1, %s7
  %s10 = scalar_select 0, %s9, %s7
  loop: start=0, step=1, limit=4
  $region2: #{conv_lstm_cell_pallas.1} parent=0 // loop_pre_header
    _
  $region3: #{conv_lstm_cell_pallas.1} parent=0 // loop_header
    %s12 = sphi 0, %s16
    %p13 = scmp.ge.s32.totalorder %s12, 4
    %s22 = sphi 0, %s24
    %s25 = sphi 0, %s22
    %s26 = sphi 0, %s25
    %s42 = sphi 0, %s26
    %s48 = sphi 0, %s50
    %s51 = sphi 0, %s48
    %s52 = sphi 0, %s51
    %s68 = sphi 0, %s52
    %s74 = sphi 0, %s76
    %s77 = sphi 0, %s74
    %s78 = sphi 0, %s77
    %s94 = sphi 0, %s78
    %s98 = sphi 0, %s98
    %s100 = sphi 0, %s98
    %s101 = sphi 0, %s100
    %s115 = sphi 0, %s101
    %s119 = sphi 0, %s119
    %s121 = sphi 0, %s119
    %s122 = sphi 0, %s121
    %s136 = sphi 0, %s122
    %s140 = sphi 0, %s140
    %s142 = sphi 0, %s140
    %s143 = sphi 0, %s142
    %s157 = sphi 0, %s143
    %s163 = sphi 0, %s165
    %s166 = sphi 0, %s163
    %s167 = sphi 0, %s166
    %s183 = sphi 0, %s167
  $region4: #{conv_lstm_cell_pallas.1} parent=0 // loop_header_branch
    %15 = sbr.rel (%p13) target = $region8
  $region5: #{conv_lstm_cell_pallas.1} parent=0 // loop_body
    %s17 = ssub.s32 %s12, 1
    %s18 = ssub.s32 %s12, 2
    %s19 = sadd.s32 %s12, 1
    %s20 = ssub.s32 %s12, %s19
    %p21 = scmp.eq.s32.totalorder %s20, 0
    %s23 = sadd.s32 %s22, 1
    %s24 = scalar_select %p21, %s22, %s23
    %p27 = pneg %p21
    %p28 = scmp.eq.s32.totalorder %s12, 1
    %p29 = por %p27, %p28
    %p30 = scmp.ne.s32.totalorder %s22, %s25
    %p31 = scmp.eq.s32.totalorder %s12, 0
    %p32 = por %p30, %p31
    %p33 = scmp.ne.s32.totalorder %s22, %s25
    %p34 = scmp.eq.s32.totalorder %s17, 1
    %p35 = por %p33, %p34
    %p36 = scmp.ne.s32.totalorder %s25, %s26
    %p37 = scmp.eq.s32.totalorder %s17, 0
    %p38 = por %p36, %p37
    %p39 = scmp.ne.s32.totalorder %s25, %s26
    %p40 = scmp.eq.s32.totalorder %s18, 1
    %p41 = por %p39, %p40
    %p43 = scmp.ne.s32.totalorder %s26, %s42
    %p44 = scmp.eq.s32.totalorder %s18, 0
    %p45 = por %p43, %p44
    %s46 = ssub.s32 %s12, %s19
    %p47 = scmp.eq.s32.totalorder %s46, 0
    %s49 = sadd.s32 %s48, 1
    %s50 = scalar_select %p47, %s48, %s49
    %p53 = pneg %p47
    %p54 = scmp.eq.s32.totalorder %s12, 1
    %p55 = por %p53, %p54
    %p56 = scmp.ne.s32.totalorder %s48, %s51
    %p57 = scmp.eq.s32.totalorder %s12, 0
    %p58 = por %p56, %p57
    %p59 = scmp.ne.s32.totalorder %s48, %s51
    %p60 = scmp.eq.s32.totalorder %s17, 1
    %p61 = por %p59, %p60
    %p62 = scmp.ne.s32.totalorder %s51, %s52
    %p63 = scmp.eq.s32.totalorder %s17, 0
    %p64 = por %p62, %p63
    %p65 = scmp.ne.s32.totalorder %s51, %s52
    %p66 = scmp.eq.s32.totalorder %s18, 1
    %p67 = por %p65, %p66
    %p69 = scmp.ne.s32.totalorder %s52, %s68
    %p70 = scmp.eq.s32.totalorder %s18, 0
    %p71 = por %p69, %p70
    %s72 = ssub.s32 %s12, %s19
    %p73 = scmp.eq.s32.totalorder %s72, 0
    %s75 = sadd.s32 %s74, 1
    %s76 = scalar_select %p73, %s74, %s75
    %p79 = pneg %p73
    %p80 = scmp.eq.s32.totalorder %s12, 1
    %p81 = por %p79, %p80
    %p82 = scmp.ne.s32.totalorder %s74, %s77
    %p83 = scmp.eq.s32.totalorder %s12, 0
    %p84 = por %p82, %p83
    %p85 = scmp.ne.s32.totalorder %s74, %s77
    %p86 = scmp.eq.s32.totalorder %s17, 1
    %p87 = por %p85, %p86
    %p88 = scmp.ne.s32.totalorder %s77, %s78
    %p89 = scmp.eq.s32.totalorder %s17, 0
    %p90 = por %p88, %p89
    %p91 = scmp.ne.s32.totalorder %s77, %s78
    %p92 = scmp.eq.s32.totalorder %s18, 1
    %p93 = por %p91, %p92
    %p95 = scmp.ne.s32.totalorder %s78, %s94
    %p96 = scmp.eq.s32.totalorder %s18, 0
    %p97 = por %p95, %p96
    %s99 = sadd.s32 %s98, 1
    %p102 = scmp.eq.s32.totalorder %s12, 1
    %p103 = scmp.ne.s32.totalorder %s98, %s100
    %p104 = scmp.eq.s32.totalorder %s12, 0
    %p105 = por %p103, %p104
    %p106 = scmp.ne.s32.totalorder %s98, %s100
    %p107 = scmp.eq.s32.totalorder %s17, 1
    %p108 = por %p106, %p107
    %p109 = scmp.ne.s32.totalorder %s100, %s101
    %p110 = scmp.eq.s32.totalorder %s17, 0
    %p111 = por %p109, %p110
    %p112 = scmp.ne.s32.totalorder %s100, %s101
    %p113 = scmp.eq.s32.totalorder %s18, 1
    %p114 = por %p112, %p113
    %p116 = scmp.ne.s32.totalorder %s101, %s115
    %p117 = scmp.eq.s32.totalorder %s18, 0
    %p118 = por %p116, %p117
    %s120 = sadd.s32 %s119, 1
    %p123 = scmp.eq.s32.totalorder %s12, 1
    %p124 = scmp.ne.s32.totalorder %s119, %s121
    %p125 = scmp.eq.s32.totalorder %s12, 0
    %p126 = por %p124, %p125
    %p127 = scmp.ne.s32.totalorder %s119, %s121
    %p128 = scmp.eq.s32.totalorder %s17, 1
    %p129 = por %p127, %p128
    %p130 = scmp.ne.s32.totalorder %s121, %s122
    %p131 = scmp.eq.s32.totalorder %s17, 0
    %p132 = por %p130, %p131
    %p133 = scmp.ne.s32.totalorder %s121, %s122
    %p134 = scmp.eq.s32.totalorder %s18, 1
    %p135 = por %p133, %p134
    %p137 = scmp.ne.s32.totalorder %s122, %s136
    %p138 = scmp.eq.s32.totalorder %s18, 0
    %p139 = por %p137, %p138
    %s141 = sadd.s32 %s140, 1
    %p144 = scmp.eq.s32.totalorder %s12, 1
    %p145 = scmp.ne.s32.totalorder %s140, %s142
    %p146 = scmp.eq.s32.totalorder %s12, 0
    %p147 = por %p145, %p146
    %p148 = scmp.ne.s32.totalorder %s140, %s142
    %p149 = scmp.eq.s32.totalorder %s17, 1
    %p150 = por %p148, %p149
    %p151 = scmp.ne.s32.totalorder %s142, %s143
    %p152 = scmp.eq.s32.totalorder %s17, 0
    %p153 = por %p151, %p152
    %p154 = scmp.ne.s32.totalorder %s142, %s143
    %p155 = scmp.eq.s32.totalorder %s18, 1
    %p156 = por %p154, %p155
    %p158 = scmp.ne.s32.totalorder %s143, %s157
    %p159 = scmp.eq.s32.totalorder %s18, 0
    %p160 = por %p158, %p159
    %s161 = ssub.s32 %s12, %s19
    %p162 = scmp.eq.s32.totalorder %s161, 0
    %s164 = sadd.s32 %s163, 1
    %s165 = scalar_select %p162, %s163, %s164
    %p168 = pneg %p162
    %p169 = scmp.eq.s32.totalorder %s12, 1
    %p170 = por %p168, %p169
    %p171 = scmp.ne.s32.totalorder %s163, %s166
    %p172 = scmp.eq.s32.totalorder %s12, 0
    %p173 = por %p171, %p172
    %p174 = scmp.ne.s32.totalorder %s163, %s166
    %p175 = scmp.eq.s32.totalorder %s17, 1
    %p176 = por %p174, %p175
    %p177 = scmp.ne.s32.totalorder %s166, %s167
    %p178 = scmp.eq.s32.totalorder %s17, 0
    %p179 = por %p177, %p178
    %p180 = scmp.ne.s32.totalorder %s166, %s167
    %p181 = scmp.eq.s32.totalorder %s18, 1
    %p182 = por %p180, %p181
    %p184 = scmp.ne.s32.totalorder %s167, %s183
    %p185 = scmp.eq.s32.totalorder %s18, 0
    %p186 = por %p184, %p185
    %p187 = scmp.le.s32.totalorder 1, %s12
    %p188 = scmp.lt.s32.totalorder %s12, 3
    %p189 = pnand %p187, %p188
    %p190 = pneg %p189
    // Predicated region
    $region9: #{conv_lstm_cell_pallas.1} parent=5 // pred_check
      _
    $region10: #{conv_lstm_cell_pallas.1} parent=5 // pred_check_branch
      %192 = sbr.rel (%p189) target = $region12
    $region11: #{conv_lstm_cell_pallas.1} parent=5 // pred_region
      %s193 = ssub.s32 %s12, 1
      // Predicated region
      $region13: #{conv_lstm_cell_pallas.1} parent=11 // pred_check
        %p194 = pneg %p111
      $region14: #{conv_lstm_cell_pallas.1} parent=11 // pred_check_branch
        %196 = sbr.rel (%p194) target = $region16
      $region15: #{conv_lstm_cell_pallas.1} parent=11 // pred_region
        _
      $region16: #{conv_lstm_cell_pallas.1} parent=11 // pred_fallthru
        _
      // Predicated region
      $region17: #{conv_lstm_cell_pallas.1} parent=11 // pred_check
        %p197 = pneg %p132
      $region18: #{conv_lstm_cell_pallas.1} parent=11 // pred_check_branch
        %199 = sbr.rel (%p197) target = $region20
      $region19: #{conv_lstm_cell_pallas.1} parent=11 // pred_region
        _
      $region20: #{conv_lstm_cell_pallas.1} parent=11 // pred_fallthru
        _
      // Predicated region
      $region21: #{conv_lstm_cell_pallas.1} parent=11 // pred_check
        %p200 = pneg %p153
      $region22: #{conv_lstm_cell_pallas.1} parent=11 // pred_check_branch
        %202 = sbr.rel (%p200) target = $region24
      $region23: #{conv_lstm_cell_pallas.1} parent=11 // pred_region
        _
      $region24: #{conv_lstm_cell_pallas.1} parent=11 // pred_fallthru
        _
    $region12: #{conv_lstm_cell_pallas.1} parent=5 // pred_fallthru
      _
    %p203 = scmp.lt.s32.totalorder %s12, 2
    // Predicated region
    $region25: #{conv_lstm_cell_pallas.1} parent=5 // pred_check
      %p204 = pneg %p203
    $region26: #{conv_lstm_cell_pallas.1} parent=5 // pred_check_branch
      %206 = sbr.rel (%p204) target = $region28
    $region27: #{conv_lstm_cell_pallas.1} parent=5 // pred_region
      // Predicated region
      $region29: #{conv_lstm_cell_pallas.1} parent=27 // pred_check
        %p207 = pneg %p32
      $region30: #{conv_lstm_cell_pallas.1} parent=27 // pred_check_branch
        %209 = sbr.rel (%p207) target = $region32
      $region31: #{conv_lstm_cell_pallas.1} parent=27 // pred_region
        %s210 = smul.u32 32, %s12
        %p211 = scmp.lt.s32.totalorder %s210, 63
        %s212 = scalar_select %p211, %s210, 63
        %s213 = smul.addr %s212, 4
        %s214 = scalar_lea.vmem %s0, %s213
        %s215 = smul.u32 32, %s12
      $region32: #{conv_lstm_cell_pallas.1} parent=27 // pred_fallthru
        _
      // Predicated region
      $region33: #{conv_lstm_cell_pallas.1} parent=27 // pred_check
        %p216 = pneg %p58
      $region34: #{conv_lstm_cell_pallas.1} parent=27 // pred_check_branch
        %218 = sbr.rel (%p216) target = $region36
      $region35: #{conv_lstm_cell_pallas.1} parent=27 // pred_region
        %p219 = scmp.lt.s32.totalorder %s12, 1
        %s220 = scalar_select %p219, %s12, 1
        %s221 = smul.addr %s220, 54
        %s222 = smul.addr %s221, 4
        %s223 = scalar_lea.vmem %s1, %s222
      $region36: #{conv_lstm_cell_pallas.1} parent=27 // pred_fallthru
        _
      // Predicated region
      $region37: #{conv_lstm_cell_pallas.1} parent=27 // pred_check
        %p224 = pneg %p84
      $region38: #{conv_lstm_cell_pallas.1} parent=27 // pred_check_branch
        %226 = sbr.rel (%p224) target = $region40
      $region39: #{conv_lstm_cell_pallas.1} parent=27 // pred_region
        %s227 = smul.u32 32, %s12
        %p228 = scmp.lt.s32.totalorder %s227, 63
        %s229 = scalar_select %p228, %s227, 63
        %s230 = smul.addr %s229, 8
        %s231 = scalar_lea.vmem %s2, %s230
        %s232 = smul.u32 32, %s12
      $region40: #{conv_lstm_cell_pallas.1} parent=27 // pred_fallthru
        _
    $region28: #{conv_lstm_cell_pallas.1} parent=5 // pred_fallthru
      _
    %p233 = scmp.le.s32.totalorder 1, %s12
    %p234 = scmp.lt.s32.totalorder %s12, 3
    %p235 = pnand %p233, %p234
    %p236 = pneg %p235
    // Predicated region
    $region41: #{conv_lstm_cell_pallas.1} parent=5 // pred_check
      _
    $region42: #{conv_lstm_cell_pallas.1} parent=5 // pred_check_branch
      %238 = sbr.rel (%p235) target = $region44
    $region43: #{conv_lstm_cell_pallas.1} parent=5 // pred_region
      %s239 = ssub.s32 %s12, 1
      %s240 = smul.u32 32, %s17
      %p241 = scmp.lt.s32.totalorder %s240, 63
      %s242 = scalar_select %p241, %s240, 63
      %s243 = smul.addr %s242, 4
      %s244 = scalar_lea.vmem %s0, %s243
      %p245 = pneg %p38
      %p246 = pneg %p35
      %p247 = scmp.lt.s32.totalorder %s17, 1
      %s248 = scalar_select %p247, %s17, 1
      %s249 = smul.addr %s248, 54
      %s250 = smul.addr %s249, 4
      %s251 = scalar_lea.vmem %s1, %s250
      %p252 = pneg %p64
      %p253 = pneg %p61
      %s254 = smul.u32 32, %s17
      %p255 = scmp.lt.s32.totalorder %s254, 63
      %s256 = scalar_select %p255, %s254, 63
      %s257 = smul.addr %s256, 8
      %s258 = scalar_lea.vmem %s2, %s257
      %p259 = pneg %p90
      %p260 = pneg %p87
      %p261 = pneg %p111
      %p262 = pneg %p108
      %p263 = pneg %p132
      %p264 = pneg %p129
      %p265 = pneg %p153
      %p266 = pneg %p150
      %p267 = pneg %p179
      %p268 = pneg %p176
      %s269 = smul.u32 32, %s17
      %p270 = scmp.lt.s32.totalorder %s269, 63
      %s271 = scalar_select %p270, %s269, 63
      %s272 = smul.addr %s271, 8
      %s273 = scalar_lea.vmem %s6, %s272
      %s274 = smul.u32 32, %s17
      %p275 = scmp.lt.s32.totalorder %s274, 63
      %s276 = scalar_select %p275, %s274, 63
      %s277 = smul.addr %s276, 4
      %s278 = scalar_lea.vmem %s0, %s277
      %s279 = smul.u32 32, %s17
      %p280 = scmp.lt.s32.totalorder %s17, 1
      %s281 = scalar_select %p280, %s17, 1
      %s282 = smul.addr %s281, 54
      %s283 = smul.addr %s282, 4
      %s284 = scalar_lea.vmem %s1, %s283
      %s285 = smul.u32 32, %s17
      %p286 = scmp.lt.s32.totalorder %s285, 63
      %s287 = scalar_select %p286, %s285, 63
      %s288 = smul.addr %s287, 8
      %s289 = scalar_lea.vmem %s2, %s288
      %s290 = smul.u32 32, %s17
      %s291 = smul.u32 32, %s17
      %p292 = scmp.lt.s32.totalorder %s291, 63
      %s293 = scalar_select %p292, %s291, 63
      %s294 = smul.addr %s293, 8
      %s295 = scalar_lea.vmem %s6, %s294
      %s296 = smul.u32 32, %s17
      %v298 = vld [vmem:[%s278] sm:$0xf]
      %v299 = vld [vmem:[%s278 + $0x4] sm:$0xf]
      %v300 = vld [vmem:[%s278 + $0x8] sm:$0xf]
      %v301 = vld [vmem:[%s278 + $0xc] sm:$0xf]
      %v302 = vld [vmem:[%s278 + $0x10] sm:$0xf]
      %v303 = vld [vmem:[%s278 + $0x14] sm:$0xf]
      %v304 = vld [vmem:[%s278 + $0x18] sm:$0xf]
      %v305 = vld [vmem:[%s278 + $0x1c] sm:$0xf]
      %v306 = vld [vmem:[%s278 + $0x20] sm:$0xf]
      %v307 = vld [vmem:[%s278 + $0x24] sm:$0xf]
      %v308 = vld [vmem:[%s278 + $0x28] sm:$0xf]
      %v309 = vld [vmem:[%s278 + $0x2c] sm:$0xf]
      %v310 = vld [vmem:[%s278 + $0x30] sm:$0xf]
      %v311 = vld [vmem:[%s278 + $0x34] sm:$0xf]
      %v312 = vld [vmem:[%s278 + $0x38] sm:$0xf]
      %v313 = vld [vmem:[%s278 + $0x3c] sm:$0xf]
      %v314 = vld [vmem:[%s278 + $0x40] sm:$0xf]
      %v315 = vld [vmem:[%s278 + $0x44] sm:$0xf]
      %v316 = vld [vmem:[%s278 + $0x48] sm:$0xf]
      %v317 = vld [vmem:[%s278 + $0x4c] sm:$0xf]
      %v318 = vld [vmem:[%s278 + $0x50] sm:$0xf]
      %v319 = vld [vmem:[%s278 + $0x54] sm:$0xf]
      %v320 = vld [vmem:[%s278 + $0x58] sm:$0xf]
      %v321 = vld [vmem:[%s278 + $0x5c] sm:$0xf]
      %v322 = vld [vmem:[%s278 + $0x60] sm:$0xf]
      %v323 = vld [vmem:[%s278 + $0x64] sm:$0xf]
      %v324 = vld [vmem:[%s278 + $0x68] sm:$0xf]
      %v325 = vld [vmem:[%s278 + $0x6c] sm:$0xf]
      %v326 = vld [vmem:[%s278 + $0x70] sm:$0xf]
      %v327 = vld [vmem:[%s278 + $0x74] sm:$0xf]
      %v328 = vld [vmem:[%s278 + $0x78] sm:$0xf]
      %v329 = vld [vmem:[%s278 + $0x7c] sm:$0xf]
      %v330 = vld [vmem:[%s3] sm:$0xf]
      %v331 = vld [vmem:[%s3 + $0x4] sm:$0xf]
      %v332 = vld [vmem:[%s3 + $0x8] sm:$0xf]
      %v333 = vld [vmem:[%s3 + $0xc] sm:$0xf]
      %v334 = vld [vmem:[%s3 + $0x10] sm:$0x3]
      %v335 = vld [vmem:[%s5] sm:$0x1]
      %v337 = vperm.slane %v335, 0
      %v371 = vunpack.c.l.b16 %v298
      %v372 = vunpack.c.l.b16 %v299
      %v373 = vunpack.c.l.b16 %v300
      %v374 = vunpack.c.l.b16 %v301
      %v375 = vunpack.c.l.b16 %v302
      %v376 = vunpack.c.l.b16 %v303
      %v377 = vunpack.c.l.b16 %v304
      %v378 = vunpack.c.l.b16 %v305
      %v379 = vunpack.c.l.b16 %v306
      %v380 = vunpack.c.l.b16 %v307
      %v381 = vunpack.c.l.b16 %v308
      %v382 = vunpack.c.l.b16 %v309
      %v383 = vunpack.c.l.b16 %v310
      %v384 = vunpack.c.l.b16 %v311
      %v385 = vunpack.c.l.b16 %v312
      %v386 = vunpack.c.l.b16 %v313
      %v387 = vunpack.c.l.b16 %v314
      %v388 = vunpack.c.l.b16 %v315
      %v389 = vunpack.c.l.b16 %v316
      %v390 = vunpack.c.l.b16 %v317
      %v391 = vunpack.c.l.b16 %v318
      %v392 = vunpack.c.l.b16 %v319
      %v393 = vunpack.c.l.b16 %v320
      %v394 = vunpack.c.l.b16 %v321
      %v395 = vunpack.c.l.b16 %v322
      %v396 = vunpack.c.l.b16 %v323
      %v397 = vunpack.c.l.b16 %v324
      %v398 = vunpack.c.l.b16 %v325
      %v399 = vunpack.c.l.b16 %v326
      %v400 = vunpack.c.l.b16 %v327
      %v401 = vunpack.c.l.b16 %v328
      %v402 = vunpack.c.l.b16 %v329
      %v403 = vpack.c.b16 %v372, %v371
      %v404 = vpack.c.b16 %v374, %v373
      %v405 = vpack.c.b16 %v376, %v375
      %v406 = vpack.c.b16 %v378, %v377
      %v407 = vpack.c.b16 %v380, %v379
      %v408 = vpack.c.b16 %v382, %v381
      %v409 = vpack.c.b16 %v384, %v383
      %v410 = vpack.c.b16 %v386, %v385
      %v411 = vpack.c.b16 %v388, %v387
      %v412 = vpack.c.b16 %v390, %v389
      %v413 = vpack.c.b16 %v392, %v391
      %v414 = vpack.c.b16 %v394, %v393
      %v415 = vpack.c.b16 %v396, %v395
      %v416 = vpack.c.b16 %v398, %v397
      %v417 = vpack.c.b16 %v400, %v399
      %v418 = vpack.c.b16 %v402, %v401
      %v424 = vunpack.c.l.b16 %v330
      %v425 = vunpack.c.l.b16 %v331
      %v426 = vunpack.c.l.b16 %v332
      %v427 = vunpack.c.l.b16 %v333
      %v428 = vunpack.c.l.b16 %v334
      %v429 = vpack.c.b16 %v425, %v424
      %v430 = vpack.c.b16 %v427, %v426
      %v431 = vpack.c.b16 %v428, %v428
      %vm434 = vcmask 293888
      %v436 = vsel %vm434, %v403, 0
      %v439 = vsel %vm434, %v404, 0
      %v442 = vsel %vm434, %v405, 0
      %v445 = vsel %vm434, %v406, 0
      %v448 = vsel %vm434, %v407, 0
      %v451 = vsel %vm434, %v408, 0
      %v454 = vsel %vm434, %v409, 0
      %v457 = vsel %vm434, %v410, 0
      %v460 = vsel %vm434, %v411, 0
      %v463 = vsel %vm434, %v412, 0
      %v466 = vsel %vm434, %v413, 0
      %v469 = vsel %vm434, %v414, 0
      %v472 = vsel %vm434, %v415, 0
      %v475 = vsel %vm434, %v416, 0
      %v478 = vsel %vm434, %v417, 0
      %v481 = vsel %vm434, %v418, 0
      %vm483 = vcmask 1041408
      %v485 = vsel %vm483, %v431, 0
      %487 = vmatpush.bf16.msra.mxu0 0
      %488 = vmatpush.bf16.msra.mxu0 0
      %489 = vmatpush.bf16.msra.mxu0 0
      %490 = vmatpush.bf16.msra.mxu0 0
      %491 = vmatpush.bf16.msra.mxu0 0
      %492 = vmatpush.bf16.msra.mxu0 %v485
      %493 = vmatpush.bf16.msra.mxu0 %v430
      %494 = vmatpush.bf16.msra.mxu0 %v429
      %495 = vmatmul.bf16.gmra.mxu0 %v436
      %v496 = vpop.f32.mrf.mxu0
      %v497 = vadd.f32 %v337, %v496
      %v498 = vpop.f32.mrf.mxu0
      %v499 = vadd.f32 %v337, %v498
      %500 = vmatmul.bf16.gmra.mxu0 %v439
      %v501 = vpop.f32.mrf.mxu0
      %v502 = vadd.f32 %v337, %v501
      %v503 = vpop.f32.mrf.mxu0
      %v504 = vadd.f32 %v337, %v503
      %505 = vmatmul.bf16.gmra.mxu0 %v442
      %v506 = vpop.f32.mrf.mxu0
      %v507 = vadd.f32 %v337, %v506
      %v508 = vpop.f32.mrf.mxu0
      %v509 = vadd.f32 %v337, %v508
      %510 = vmatmul.bf16.gmra.mxu0 %v445
      %v511 = vpop.f32.mrf.mxu0
      %v512 = vadd.f32 %v337, %v511
      %v513 = vpop.f32.mrf.mxu0
      %v514 = vadd.f32 %v337, %v513
      %515 = vmatmul.bf16.gmra.mxu0 %v448
      %v516 = vpop.f32.mrf.mxu0
      %v517 = vadd.f32 %v337, %v516
      %v518 = vpop.f32.mrf.mxu0
      %v519 = vadd.f32 %v337, %v518
      %520 = vmatmul.bf16.gmra.mxu0 %v451
      %v521 = vpop.f32.mrf.mxu0
      %v522 = vadd.f32 %v337, %v521
      %v523 = vpop.f32.mrf.mxu0
      %v524 = vadd.f32 %v337, %v523
      %525 = vmatmul.bf16.gmra.mxu0 %v454
      %v526 = vpop.f32.mrf.mxu0
      %v527 = vadd.f32 %v337, %v526
      %v528 = vpop.f32.mrf.mxu0
      %v529 = vadd.f32 %v337, %v528
      %530 = vmatmul.bf16.gmra.mxu0 %v457
      %v531 = vpop.f32.mrf.mxu0
      %v532 = vadd.f32 %v337, %v531
      %v533 = vpop.f32.mrf.mxu0
      %v534 = vadd.f32 %v337, %v533
      %535 = vmatmul.bf16.gmra.mxu0 %v460
      %v536 = vpop.f32.mrf.mxu0
      %v537 = vadd.f32 %v337, %v536
      %v538 = vpop.f32.mrf.mxu0
      %v539 = vadd.f32 %v337, %v538
      %540 = vmatmul.bf16.gmra.mxu0 %v463
      %v541 = vpop.f32.mrf.mxu0
      %v542 = vadd.f32 %v337, %v541
      %v543 = vpop.f32.mrf.mxu0
      %v544 = vadd.f32 %v337, %v543
      %545 = vmatmul.bf16.gmra.mxu0 %v466
      %v546 = vpop.f32.mrf.mxu0
      %v547 = vadd.f32 %v337, %v546
      %v548 = vpop.f32.mrf.mxu0
      %v549 = vadd.f32 %v337, %v548
      %550 = vmatmul.bf16.gmra.mxu0 %v469
      %v551 = vpop.f32.mrf.mxu0
      %v552 = vadd.f32 %v337, %v551
      %v553 = vpop.f32.mrf.mxu0
      %v554 = vadd.f32 %v337, %v553
      %555 = vmatmul.bf16.gmra.mxu0 %v472
      %v556 = vpop.f32.mrf.mxu0
      %v557 = vadd.f32 %v337, %v556
      %v558 = vpop.f32.mrf.mxu0
      %v559 = vadd.f32 %v337, %v558
      %560 = vmatmul.bf16.gmra.mxu0 %v475
      %v561 = vpop.f32.mrf.mxu0
      %v562 = vadd.f32 %v337, %v561
      %v563 = vpop.f32.mrf.mxu0
      %v564 = vadd.f32 %v337, %v563
      %565 = vmatmul.bf16.gmra.mxu0 %v478
      %v566 = vpop.f32.mrf.mxu0
      %v567 = vadd.f32 %v337, %v566
      %v568 = vpop.f32.mrf.mxu0
      %v569 = vadd.f32 %v337, %v568
      %570 = vmatmul.bf16.gmra.mxu0 %v481
      %v571 = vpop.f32.mrf.mxu0
      %v572 = vadd.f32 %v337, %v571
      %v573 = vpop.f32.mrf.mxu0
      %v574 = vadd.f32 %v337, %v573
      %575 = vdwg.mxu0
      %v576 = vld [vmem:[%s284] sm:$0xf]
      %v577 = vld [vmem:[%s284 + $0x4] sm:$0xf]
      %v578 = vld [vmem:[%s284 + $0xc] sm:$0xf]
      %v579 = vld [vmem:[%s284 + $0x10] sm:$0xf]
      %v580 = vld [vmem:[%s284 + $0x18] sm:$0xf]
      %v581 = vld [vmem:[%s284 + $0x1c] sm:$0xf]
      %v582 = vld [vmem:[%s284 + $0x24] sm:$0xf]
      %v583 = vld [vmem:[%s284 + $0x28] sm:$0xf]
      %v584 = vld [vmem:[%s284 + $0x30] sm:$0xf]
      %v585 = vld [vmem:[%s284 + $0x34] sm:$0xf]
      %v586 = vld [vmem:[%s284 + $0x3c] sm:$0xf]
      %v587 = vld [vmem:[%s284 + $0x40] sm:$0xf]
      %v588 = vld [vmem:[%s284 + $0x48] sm:$0xf]
      %v589 = vld [vmem:[%s284 + $0x4c] sm:$0xf]
      %v590 = vld [vmem:[%s284 + $0x54] sm:$0xf]
      %v591 = vld [vmem:[%s284 + $0x58] sm:$0xf]
      %v592 = vld [vmem:[%s284 + $0x60] sm:$0xf]
      %v593 = vld [vmem:[%s284 + $0x64] sm:$0xf]
      %v594 = vld [vmem:[%s284 + $0x6c] sm:$0xf]
      %v595 = vld [vmem:[%s284 + $0x70] sm:$0xf]
      %v596 = vld [vmem:[%s284 + $0x78] sm:$0xf]
      %v597 = vld [vmem:[%s284 + $0x7c] sm:$0xf]
      %v598 = vld [vmem:[%s284 + $0x84] sm:$0xf]
      %v599 = vld [vmem:[%s284 + $0x88] sm:$0xf]
      %v600 = vld [vmem:[%s284 + $0x90] sm:$0xf]
      %v601 = vld [vmem:[%s284 + $0x94] sm:$0xf]
      %v602 = vld [vmem:[%s284 + $0x9c] sm:$0xf]
      %v603 = vld [vmem:[%s284 + $0xa0] sm:$0xf]
      %v604 = vld [vmem:[%s284 + $0xa8] sm:$0xf]
      %v605 = vld [vmem:[%s284 + $0xac] sm:$0xf]
      %v606 = vld [vmem:[%s284 + $0xb4] sm:$0xf]
      %v607 = vld [vmem:[%s284 + $0xb8] sm:$0xf]
      %v608 = vld [vmem:[%s4] sm:$0xf]
      %v609 = vld [vmem:[%s4 + $0x4] sm:$0xf]
      %v610 = vld [vmem:[%s4 + $0x8] sm:$0xf]
      %v611 = vld [vmem:[%s4 + $0xc] sm:$0xf]
      %v644 = vunpack.c.l.b16 %v576
      %v645 = vunpack.c.l.b16 %v577
      %v646 = vunpack.c.l.b16 %v578
      %v647 = vunpack.c.l.b16 %v579
      %v648 = vunpack.c.l.b16 %v580
      %v649 = vunpack.c.l.b16 %v581
      %v650 = vunpack.c.l.b16 %v582
      %v651 = vunpack.c.l.b16 %v583
      %v652 = vunpack.c.l.b16 %v584
      %v653 = vunpack.c.l.b16 %v585
      %v654 = vunpack.c.l.b16 %v586
      %v655 = vunpack.c.l.b16 %v587
      %v656 = vunpack.c.l.b16 %v588
      %v657 = vunpack.c.l.b16 %v589
      %v658 = vunpack.c.l.b16 %v590
      %v659 = vunpack.c.l.b16 %v591
      %v660 = vunpack.c.l.b16 %v592
      %v661 = vunpack.c.l.b16 %v593
      %v662 = vunpack.c.l.b16 %v594
      %v663 = vunpack.c.l.b16 %v595
      %v664 = vunpack.c.l.b16 %v596
      %v665 = vunpack.c.l.b16 %v597
      %v666 = vunpack.c.l.b16 %v598
      %v667 = vunpack.c.l.b16 %v599
      %v668 = vunpack.c.l.b16 %v600
      %v669 = vunpack.c.l.b16 %v601
      %v670 = vunpack.c.l.b16 %v602
      %v671 = vunpack.c.l.b16 %v603
      %v672 = vunpack.c.l.b16 %v604
      %v673 = vunpack.c.l.b16 %v605
      %v674 = vunpack.c.l.b16 %v606
      %v675 = vunpack.c.l.b16 %v607
      %v676 = vpack.c.b16 %v645, %v644
      %v677 = vpack.c.b16 %v647, %v646
      %v678 = vpack.c.b16 %v649, %v648
      %v679 = vpack.c.b16 %v651, %v650
      %v680 = vpack.c.b16 %v653, %v652
      %v681 = vpack.c.b16 %v655, %v654
      %v682 = vpack.c.b16 %v657, %v656
      %v683 = vpack.c.b16 %v659, %v658
      %v684 = vpack.c.b16 %v661, %v660
      %v685 = vpack.c.b16 %v663, %v662
      %v686 = vpack.c.b16 %v665, %v664
      %v687 = vpack.c.b16 %v667, %v666
      %v688 = vpack.c.b16 %v669, %v668
      %v689 = vpack.c.b16 %v671, %v670
      %v690 = vpack.c.b16 %v673, %v672
      %v691 = vpack.c.b16 %v675, %v674
      %v696 = vunpack.c.l.b16 %v608
      %v697 = vunpack.c.l.b16 %v609
      %v698 = vunpack.c.l.b16 %v610
      %v699 = vunpack.c.l.b16 %v611
      %v700 = vpack.c.b16 %v697, %v696
      %v701 = vpack.c.b16 %v699, %v698
      %vm704 = vcmask 261120
      %v706 = vsel %vm704, %v676, 0
      %v709 = vsel %vm704, %v677, 0
      %v712 = vsel %vm704, %v678, 0
      %v715 = vsel %vm704, %v679, 0
      %v718 = vsel %vm704, %v680, 0
      %v721 = vsel %vm704, %v681, 0
      %v724 = vsel %vm704, %v682, 0
      %v727 = vsel %vm704, %v683, 0
      %v730 = vsel %vm704, %v684, 0
      %v733 = vsel %vm704, %v685, 0
      %v736 = vsel %vm704, %v686, 0
      %v739 = vsel %vm704, %v687, 0
      %v742 = vsel %vm704, %v688, 0
      %v745 = vsel %vm704, %v689, 0
      %v748 = vsel %vm704, %v690, 0
      %v751 = vsel %vm704, %v691, 0
      %753 = vmatpush.bf16.msra.mxu0 0
      %754 = vmatpush.bf16.msra.mxu0 0
      %755 = vmatpush.bf16.msra.mxu0 0
      %756 = vmatpush.bf16.msra.mxu0 0
      %757 = vmatpush.bf16.msra.mxu0 0
      %758 = vmatpush.bf16.msra.mxu0 0
      %759 = vmatpush.bf16.msra.mxu0 %v701
      %760 = vmatpush.bf16.msra.mxu0 %v700
      %761 = vmatmul.bf16.gmra.mxu0 %v706
      %v762 = vpop.f32.mrf.mxu0
      %v763 = vadd.f32 0.0, %v762
      %v764 = vpop.f32.mrf.mxu0
      %v765 = vadd.f32 0.0, %v764
      %766 = vmatmul.bf16.gmra.mxu0 %v709
      %v767 = vpop.f32.mrf.mxu0
      %v768 = vadd.f32 0.0, %v767
      %v769 = vpop.f32.mrf.mxu0
      %v770 = vadd.f32 0.0, %v769
      %771 = vmatmul.bf16.gmra.mxu0 %v712
      %v772 = vpop.f32.mrf.mxu0
      %v773 = vadd.f32 0.0, %v772
      %v774 = vpop.f32.mrf.mxu0
      %v775 = vadd.f32 0.0, %v774
      %776 = vmatmul.bf16.gmra.mxu0 %v715
      %v777 = vpop.f32.mrf.mxu0
      %v778 = vadd.f32 0.0, %v777
      %v779 = vpop.f32.mrf.mxu0
      %v780 = vadd.f32 0.0, %v779
      %781 = vmatmul.bf16.gmra.mxu0 %v718
      %v782 = vpop.f32.mrf.mxu0
      %v783 = vadd.f32 0.0, %v782
      %v784 = vpop.f32.mrf.mxu0
      %v785 = vadd.f32 0.0, %v784
      %786 = vmatmul.bf16.gmra.mxu0 %v721
      %v787 = vpop.f32.mrf.mxu0
      %v788 = vadd.f32 0.0, %v787
      %v789 = vpop.f32.mrf.mxu0
      %v790 = vadd.f32 0.0, %v789
      %791 = vmatmul.bf16.gmra.mxu0 %v724
      %v792 = vpop.f32.mrf.mxu0
      %v793 = vadd.f32 0.0, %v792
      %v794 = vpop.f32.mrf.mxu0
      %v795 = vadd.f32 0.0, %v794
      %796 = vmatmul.bf16.gmra.mxu0 %v727
      %v797 = vpop.f32.mrf.mxu0
      %v798 = vadd.f32 0.0, %v797
      %v799 = vpop.f32.mrf.mxu0
      %v800 = vadd.f32 0.0, %v799
      %801 = vmatmul.bf16.gmra.mxu0 %v730
      %v802 = vpop.f32.mrf.mxu0
      %v803 = vadd.f32 0.0, %v802
      %v804 = vpop.f32.mrf.mxu0
      %v805 = vadd.f32 0.0, %v804
      %806 = vmatmul.bf16.gmra.mxu0 %v733
      %v807 = vpop.f32.mrf.mxu0
      %v808 = vadd.f32 0.0, %v807
      %v809 = vpop.f32.mrf.mxu0
      %v810 = vadd.f32 0.0, %v809
      %811 = vmatmul.bf16.gmra.mxu0 %v736
      %v812 = vpop.f32.mrf.mxu0
      %v813 = vadd.f32 0.0, %v812
      %v814 = vpop.f32.mrf.mxu0
      %v815 = vadd.f32 0.0, %v814
      %816 = vmatmul.bf16.gmra.mxu0 %v739
      %v817 = vpop.f32.mrf.mxu0
      %v818 = vadd.f32 0.0, %v817
      %v819 = vpop.f32.mrf.mxu0
      %v820 = vadd.f32 0.0, %v819
      %821 = vmatmul.bf16.gmra.mxu0 %v742
      %v822 = vpop.f32.mrf.mxu0
      %v823 = vadd.f32 0.0, %v822
      %v824 = vpop.f32.mrf.mxu0
      %v825 = vadd.f32 0.0, %v824
      %826 = vmatmul.bf16.gmra.mxu0 %v745
      %v827 = vpop.f32.mrf.mxu0
      %v828 = vadd.f32 0.0, %v827
      %v829 = vpop.f32.mrf.mxu0
      %v830 = vadd.f32 0.0, %v829
      %831 = vmatmul.bf16.gmra.mxu0 %v748
      %v832 = vpop.f32.mrf.mxu0
      %v833 = vadd.f32 0.0, %v832
      %v834 = vpop.f32.mrf.mxu0
      %v835 = vadd.f32 0.0, %v834
      %836 = vmatmul.bf16.gmra.mxu0 %v751
      %v837 = vpop.f32.mrf.mxu0
      %v838 = vadd.f32 0.0, %v837
      %v839 = vpop.f32.mrf.mxu0
      %v840 = vadd.f32 0.0, %v839
      %841 = vdwg.mxu0
      %v842 = vadd.f32 %v497, %v763
      %v843 = vadd.f32 %v499, %v765
      %v844 = vadd.f32 %v502, %v768
      %v845 = vadd.f32 %v504, %v770
      %v846 = vadd.f32 %v507, %v773
      %v847 = vadd.f32 %v509, %v775
      %v848 = vadd.f32 %v512, %v778
      %v849 = vadd.f32 %v514, %v780
      %v850 = vadd.f32 %v517, %v783
      %v851 = vadd.f32 %v519, %v785
      %v852 = vadd.f32 %v522, %v788
      %v853 = vadd.f32 %v524, %v790
      %v854 = vadd.f32 %v527, %v793
      %v855 = vadd.f32 %v529, %v795
      %v856 = vadd.f32 %v532, %v798
      %v857 = vadd.f32 %v534, %v800
      %v858 = vadd.f32 %v537, %v803
      %v859 = vadd.f32 %v539, %v805
      %v860 = vadd.f32 %v542, %v808
      %v861 = vadd.f32 %v544, %v810
      %v862 = vadd.f32 %v547, %v813
      %v863 = vadd.f32 %v549, %v815
      %v864 = vadd.f32 %v552, %v818
      %v865 = vadd.f32 %v554, %v820
      %v866 = vadd.f32 %v557, %v823
      %v867 = vadd.f32 %v559, %v825
      %v868 = vadd.f32 %v562, %v828
      %v869 = vadd.f32 %v564, %v830
      %v870 = vadd.f32 %v567, %v833
      %v871 = vadd.f32 %v569, %v835
      %v872 = vadd.f32 %v572, %v838
      %v873 = vadd.f32 %v574, %v840
      %v874 = vld [vmem:[%s284] sm:$0xf]
      %v875 = vld [vmem:[%s284 + $0x4] sm:$0xf]
      %v876 = vld [vmem:[%s284 + $0x8] sm:$0x1]
      %v877 = vld [vmem:[%s284 + $0xc] sm:$0xf]
      %v878 = vld [vmem:[%s284 + $0x10] sm:$0xf]
      %v879 = vld [vmem:[%s284 + $0x14] sm:$0x1]
      %v880 = vld [vmem:[%s284 + $0x18] sm:$0xf]
      %v881 = vld [vmem:[%s284 + $0x1c] sm:$0xf]
      %v882 = vld [vmem:[%s284 + $0x20] sm:$0x1]
      %v883 = vld [vmem:[%s284 + $0x24] sm:$0xf]
      %v884 = vld [vmem:[%s284 + $0x28] sm:$0xf]
      %v885 = vld [vmem:[%s284 + $0x2c] sm:$0x1]
      %v886 = vld [vmem:[%s284 + $0x30] sm:$0xf]
      %v887 = vld [vmem:[%s284 + $0x34] sm:$0xf]
      %v888 = vld [vmem:[%s284 + $0x38] sm:$0x1]
      %v889 = vld [vmem:[%s284 + $0x3c] sm:$0xf]
      %v890 = vld [vmem:[%s284 + $0x40] sm:$0xf]
      %v891 = vld [vmem:[%s284 + $0x44] sm:$0x1]
      %v892 = vld [vmem:[%s284 + $0x48] sm:$0xf]
      %v893 = vld [vmem:[%s284 + $0x4c] sm:$0xf]
      %v894 = vld [vmem:[%s284 + $0x50] sm:$0x1]
      %v895 = vld [vmem:[%s284 + $0x54] sm:$0xf]
      %v896 = vld [vmem:[%s284 + $0x58] sm:$0xf]
      %v897 = vld [vmem:[%s284 + $0x5c] sm:$0x1]
      %v898 = vld [vmem:[%s284 + $0x60] sm:$0xf]
      %v899 = vld [vmem:[%s284 + $0x64] sm:$0xf]
      %v900 = vld [vmem:[%s284 + $0x68] sm:$0x1]
      %v901 = vld [vmem:[%s284 + $0x6c] sm:$0xf]
      %v902 = vld [vmem:[%s284 + $0x70] sm:$0xf]
      %v903 = vld [vmem:[%s284 + $0x74] sm:$0x1]
      %v904 = vld [vmem:[%s284 + $0x78] sm:$0xf]
      %v905 = vld [vmem:[%s284 + $0x7c] sm:$0xf]
      %v906 = vld [vmem:[%s284 + $0x80] sm:$0x1]
      %v907 = vld [vmem:[%s284 + $0x84] sm:$0xf]
      %v908 = vld [vmem:[%s284 + $0x88] sm:$0xf]
      %v909 = vld [vmem:[%s284 + $0x8c] sm:$0x1]
      %v910 = vld [vmem:[%s284 + $0x90] sm:$0xf]
      %v911 = vld [vmem:[%s284 + $0x94] sm:$0xf]
      %v912 = vld [vmem:[%s284 + $0x98] sm:$0x1]
      %v913 = vld [vmem:[%s284 + $0x9c] sm:$0xf]
      %v914 = vld [vmem:[%s284 + $0xa0] sm:$0xf]
      %v915 = vld [vmem:[%s284 + $0xa4] sm:$0x1]
      %v916 = vld [vmem:[%s284 + $0xa8] sm:$0xf]
      %v917 = vld [vmem:[%s284 + $0xac] sm:$0xf]
      %v918 = vld [vmem:[%s284 + $0xb0] sm:$0x1]
      %v919 = vld [vmem:[%s284 + $0xb4] sm:$0xf]
      %v920 = vld [vmem:[%s284 + $0xb8] sm:$0xf]
      %v921 = vld [vmem:[%s284 + $0xbc] sm:$0x1]
      %vm922 = vsmask.f32 3328
      %vm923 = vsmask.f32 7440
      %vm924 = vmor %vm922, %vm923
      %v926 = vshrl.u32 %v874, 16
      %v928 = vrot.slane %v926, 4
      %v929 = vshll.u32 %v874, 16
      %v931 = vrot.slane %v929, 5
      %v932 = vor.u32 %v928, %v931
      %v933 = vrot.slane %v932, 4
      %v935 = vshll.u32 %v875, 16
      %v937 = vrot.slane %v935, 5
      %v938 = vsel %vm924, %v933, %v937
      %v939 = vshrl.u32 %v875, 16
      %v941 = vrot.slane %v939, 4
      %v942 = vor.u32 %v941, %v937
      %v943 = vrot.slane %v942, 4
      %v945 = vshll.u32 %v876, 16
      %v947 = vrot.slane %v945, 5
      %v948 = vsel %vm924, %v943, %v947
      %v950 = vshrl.u32 %v877, 16
      %v952 = vrot.slane %v950, 4
      %v953 = vshll.u32 %v877, 16
      %v955 = vrot.slane %v953, 5
      %v956 = vor.u32 %v952, %v955
      %v957 = vrot.slane %v956, 4
      %v959 = vshll.u32 %v878, 16
      %v961 = vrot.slane %v959, 5
      %v962 = vsel %vm924, %v957, %v961
      %v963 = vshrl.u32 %v878, 16
      %v965 = vrot.slane %v963, 4
      %v966 = vor.u32 %v965, %v961
      %v967 = vrot.slane %v966, 4
      %v969 = vshll.u32 %v879, 16
      %v971 = vrot.slane %v969, 5
      %v972 = vsel %vm924, %v967, %v971
      %v974 = vshrl.u32 %v880, 16
      %v976 = vrot.slane %v974, 4
      %v977 = vshll.u32 %v880, 16
      %v979 = vrot.slane %v977, 5
      %v980 = vor.u32 %v976, %v979
      %v981 = vrot.slane %v980, 4
      %v983 = vshll.u32 %v881, 16
      %v985 = vrot.slane %v983, 5
      %v986 = vsel %vm924, %v981, %v985
      %v987 = vshrl.u32 %v881, 16
      %v989 = vrot.slane %v987, 4
      %v990 = vor.u32 %v989, %v985
      %v991 = vrot.slane %v990, 4
      %v993 = vshll.u32 %v882, 16
      %v995 = vrot.slane %v993, 5
      %v996 = vsel %vm924, %v991, %v995
      %v998 = vshrl.u32 %v883, 16
      %v1000 = vrot.slane %v998, 4
      %v1001 = vshll.u32 %v883, 16
      %v1003 = vrot.slane %v1001, 5
      %v1004 = vor.u32 %v1000, %v1003
      %v1005 = vrot.slane %v1004, 4
      %v1007 = vshll.u32 %v884, 16
      %v1009 = vrot.slane %v1007, 5
      %v1010 = vsel %vm924, %v1005, %v1009
      %v1011 = vshrl.u32 %v884, 16
      %v1013 = vrot.slane %v1011, 4
      %v1014 = vor.u32 %v1013, %v1009
      %v1015 = vrot.slane %v1014, 4
      %v1017 = vshll.u32 %v885, 16
      %v1019 = vrot.slane %v1017, 5
      %v1020 = vsel %vm924, %v1015, %v1019
      %v1022 = vshrl.u32 %v886, 16
      %v1024 = vrot.slane %v1022, 4
      %v1025 = vshll.u32 %v886, 16
      %v1027 = vrot.slane %v1025, 5
      %v1028 = vor.u32 %v1024, %v1027
      %v1029 = vrot.slane %v1028, 4
      %v1031 = vshll.u32 %v887, 16
      %v1033 = vrot.slane %v1031, 5
      %v1034 = vsel %vm924, %v1029, %v1033
      %v1035 = vshrl.u32 %v887, 16
      %v1037 = vrot.slane %v1035, 4
      %v1038 = vor.u32 %v1037, %v1033
      %v1039 = vrot.slane %v1038, 4
      %v1041 = vshll.u32 %v888, 16
      %v1043 = vrot.slane %v1041, 5
      %v1044 = vsel %vm924, %v1039, %v1043
      %v1046 = vshrl.u32 %v889, 16
      %v1048 = vrot.slane %v1046, 4
      %v1049 = vshll.u32 %v889, 16
      %v1051 = vrot.slane %v1049, 5
      %v1052 = vor.u32 %v1048, %v1051
      %v1053 = vrot.slane %v1052, 4
      %v1055 = vshll.u32 %v890, 16
      %v1057 = vrot.slane %v1055, 5
      %v1058 = vsel %vm924, %v1053, %v1057
      %v1059 = vshrl.u32 %v890, 16
      %v1061 = vrot.slane %v1059, 4
      %v1062 = vor.u32 %v1061, %v1057
      %v1063 = vrot.slane %v1062, 4
      %v1065 = vshll.u32 %v891, 16
      %v1067 = vrot.slane %v1065, 5
      %v1068 = vsel %vm924, %v1063, %v1067
      %v1070 = vshrl.u32 %v892, 16
      %v1072 = vrot.slane %v1070, 4
      %v1073 = vshll.u32 %v892, 16
      %v1075 = vrot.slane %v1073, 5
      %v1076 = vor.u32 %v1072, %v1075
      %v1077 = vrot.slane %v1076, 4
      %v1079 = vshll.u32 %v893, 16
      %v1081 = vrot.slane %v1079, 5
      %v1082 = vsel %vm924, %v1077, %v1081
      %v1083 = vshrl.u32 %v893, 16
      %v1085 = vrot.slane %v1083, 4
      %v1086 = vor.u32 %v1085, %v1081
      %v1087 = vrot.slane %v1086, 4
      %v1089 = vshll.u32 %v894, 16
      %v1091 = vrot.slane %v1089, 5
      %v1092 = vsel %vm924, %v1087, %v1091
      %v1094 = vshrl.u32 %v895, 16
      %v1096 = vrot.slane %v1094, 4
      %v1097 = vshll.u32 %v895, 16
      %v1099 = vrot.slane %v1097, 5
      %v1100 = vor.u32 %v1096, %v1099
      %v1101 = vrot.slane %v1100, 4
      %v1103 = vshll.u32 %v896, 16
      %v1105 = vrot.slane %v1103, 5
      %v1106 = vsel %vm924, %v1101, %v1105
      %v1107 = vshrl.u32 %v896, 16
      %v1109 = vrot.slane %v1107, 4
      %v1110 = vor.u32 %v1109, %v1105
      %v1111 = vrot.slane %v1110, 4
      %v1113 = vshll.u32 %v897, 16
      %v1115 = vrot.slane %v1113, 5
      %v1116 = vsel %vm924, %v1111, %v1115
      %v1118 = vshrl.u32 %v898, 16
      %v1120 = vrot.slane %v1118, 4
      %v1121 = vshll.u32 %v898, 16
      %v1123 = vrot.slane %v1121, 5
      %v1124 = vor.u32 %v1120, %v1123
      %v1125 = vrot.slane %v1124, 4
      %v1127 = vshll.u32 %v899, 16
      %v1129 = vrot.slane %v1127, 5
      %v1130 = vsel %vm924, %v1125, %v1129
      %v1131 = vshrl.u32 %v899, 16
      %v1133 = vrot.slane %v1131, 4
      %v1134 = vor.u32 %v1133, %v1129
      %v1135 = vrot.slane %v1134, 4
      %v1137 = vshll.u32 %v900, 16
      %v1139 = vrot.slane %v1137, 5
      %v1140 = vsel %vm924, %v1135, %v1139
      %v1142 = vshrl.u32 %v901, 16
      %v1144 = vrot.slane %v1142, 4
      %v1145 = vshll.u32 %v901, 16
      %v1147 = vrot.slane %v1145, 5
      %v1148 = vor.u32 %v1144, %v1147
      %v1149 = vrot.slane %v1148, 4
      %v1151 = vshll.u32 %v902, 16
      %v1153 = vrot.slane %v1151, 5
      %v1154 = vsel %vm924, %v1149, %v1153
      %v1155 = vshrl.u32 %v902, 16
      %v1157 = vrot.slane %v1155, 4
      %v1158 = vor.u32 %v1157, %v1153
      %v1159 = vrot.slane %v1158, 4
      %v1161 = vshll.u32 %v903, 16
      %v1163 = vrot.slane %v1161, 5
      %v1164 = vsel %vm924, %v1159, %v1163
      %v1166 = vshrl.u32 %v904, 16
      %v1168 = vrot.slane %v1166, 4
      %v1169 = vshll.u32 %v904, 16
      %v1171 = vrot.slane %v1169, 5
      %v1172 = vor.u32 %v1168, %v1171
      %v1173 = vrot.slane %v1172, 4
      %v1175 = vshll.u32 %v905, 16
      %v1177 = vrot.slane %v1175, 5
      %v1178 = vsel %vm924, %v1173, %v1177
      %v1179 = vshrl.u32 %v905, 16
      %v1181 = vrot.slane %v1179, 4
      %v1182 = vor.u32 %v1181, %v1177
      %v1183 = vrot.slane %v1182, 4
      %v1185 = vshll.u32 %v906, 16
      %v1187 = vrot.slane %v1185, 5
      %v1188 = vsel %vm924, %v1183, %v1187
      %v1190 = vshrl.u32 %v907, 16
      %v1192 = vrot.slane %v1190, 4
      %v1193 = vshll.u32 %v907, 16
      %v1195 = vrot.slane %v1193, 5
      %v1196 = vor.u32 %v1192, %v1195
      %v1197 = vrot.slane %v1196, 4
      %v1199 = vshll.u32 %v908, 16
      %v1201 = vrot.slane %v1199, 5
      %v1202 = vsel %vm924, %v1197, %v1201
      %v1203 = vshrl.u32 %v908, 16
      %v1205 = vrot.slane %v1203, 4
      %v1206 = vor.u32 %v1205, %v1201
      %v1207 = vrot.slane %v1206, 4
      %v1209 = vshll.u32 %v909, 16
      %v1211 = vrot.slane %v1209, 5
      %v1212 = vsel %vm924, %v1207, %v1211
      %v1214 = vshrl.u32 %v910, 16
      %v1216 = vrot.slane %v1214, 4
      %v1217 = vshll.u32 %v910, 16
      %v1219 = vrot.slane %v1217, 5
      %v1220 = vor.u32 %v1216, %v1219
      %v1221 = vrot.slane %v1220, 4
      %v1223 = vshll.u32 %v911, 16
      %v1225 = vrot.slane %v1223, 5
      %v1226 = vsel %vm924, %v1221, %v1225
      %v1227 = vshrl.u32 %v911, 16
      %v1229 = vrot.slane %v1227, 4
      %v1230 = vor.u32 %v1229, %v1225
      %v1231 = vrot.slane %v1230, 4
      %v1233 = vshll.u32 %v912, 16
      %v1235 = vrot.slane %v1233, 5
      %v1236 = vsel %vm924, %v1231, %v1235
      %v1238 = vshrl.u32 %v913, 16
      %v1240 = vrot.slane %v1238, 4
      %v1241 = vshll.u32 %v913, 16
      %v1243 = vrot.slane %v1241, 5
      %v1244 = vor.u32 %v1240, %v1243
      %v1245 = vrot.slane %v1244, 4
      %v1247 = vshll.u32 %v914, 16
      %v1249 = vrot.slane %v1247, 5
      %v1250 = vsel %vm924, %v1245, %v1249
      %v1251 = vshrl.u32 %v914, 16
      %v1253 = vrot.slane %v1251, 4
      %v1254 = vor.u32 %v1253, %v1249
      %v1255 = vrot.slane %v1254, 4
      %v1257 = vshll.u32 %v915, 16
      %v1259 = vrot.slane %v1257, 5
      %v1260 = vsel %vm924, %v1255, %v1259
      %v1262 = vshrl.u32 %v916, 16
      %v1264 = vrot.slane %v1262, 4
      %v1265 = vshll.u32 %v916, 16
      %v1267 = vrot.slane %v1265, 5
      %v1268 = vor.u32 %v1264, %v1267
      %v1269 = vrot.slane %v1268, 4
      %v1271 = vshll.u32 %v917, 16
      %v1273 = vrot.slane %v1271, 5
      %v1274 = vsel %vm924, %v1269, %v1273
      %v1275 = vshrl.u32 %v917, 16
      %v1277 = vrot.slane %v1275, 4
      %v1278 = vor.u32 %v1277, %v1273
      %v1279 = vrot.slane %v1278, 4
      %v1281 = vshll.u32 %v918, 16
      %v1283 = vrot.slane %v1281, 5
      %v1284 = vsel %vm924, %v1279, %v1283
      %v1286 = vshrl.u32 %v919, 16
      %v1288 = vrot.slane %v1286, 4
      %v1289 = vshll.u32 %v919, 16
      %v1291 = vrot.slane %v1289, 5
      %v1292 = vor.u32 %v1288, %v1291
      %v1293 = vrot.slane %v1292, 4
      %v1295 = vshll.u32 %v920, 16
      %v1297 = vrot.slane %v1295, 5
      %v1298 = vsel %vm924, %v1293, %v1297
      %v1299 = vshrl.u32 %v920, 16
      %v1301 = vrot.slane %v1299, 4
      %v1302 = vor.u32 %v1301, %v1297
      %v1303 = vrot.slane %v1302, 4
      %v1305 = vshll.u32 %v921, 16
      %v1307 = vrot.slane %v1305, 5
      %v1308 = vsel %vm924, %v1303, %v1307
      %s1309 = scalar_lea.vmem %s4, 16
      %v1310 = vld [vmem:[%s1309] sm:$0xf]
      %v1311 = vld [vmem:[%s1309 + $0x4] sm:$0xf]
      %v1312 = vld [vmem:[%s1309 + $0x8] sm:$0xf]
      %v1313 = vld [vmem:[%s1309 + $0xc] sm:$0xf]
      %v1314 = vunpack.c.l.b16 %v938
      %v1315 = vunpack.c.l.b16 %v948
      %v1316 = vunpack.c.l.b16 %v962
      %v1317 = vunpack.c.l.b16 %v972
      %v1318 = vunpack.c.l.b16 %v986
      %v1319 = vunpack.c.l.b16 %v996
      %v1320 = vunpack.c.l.b16 %v1010
      %v1321 = vunpack.c.l.b16 %v1020
      %v1322 = vunpack.c.l.b16 %v1034
      %v1323 = vunpack.c.l.b16 %v1044
      %v1324 = vunpack.c.l.b16 %v1058
      %v1325 = vunpack.c.l.b16 %v1068
      %v1326 = vunpack.c.l.b16 %v1082
      %v1327 = vunpack.c.l.b16 %v1092
      %v1328 = vunpack.c.l.b16 %v1106
      %v1329 = vunpack.c.l.b16 %v1116
      %v1330 = vunpack.c.l.b16 %v1130
      %v1331 = vunpack.c.l.b16 %v1140
      %v1332 = vunpack.c.l.b16 %v1154
      %v1333 = vunpack.c.l.b16 %v1164
      %v1334 = vunpack.c.l.b16 %v1178
      %v1335 = vunpack.c.l.b16 %v1188
      %v1336 = vunpack.c.l.b16 %v1202
      %v1337 = vunpack.c.l.b16 %v1212
      %v1338 = vunpack.c.l.b16 %v1226
      %v1339 = vunpack.c.l.b16 %v1236
      %v1340 = vunpack.c.l.b16 %v1250
      %v1341 = vunpack.c.l.b16 %v1260
      %v1342 = vunpack.c.l.b16 %v1274
      %v1343 = vunpack.c.l.b16 %v1284
      %v1344 = vunpack.c.l.b16 %v1298
      %v1345 = vunpack.c.l.b16 %v1308
      %v1346 = vpack.c.b16 %v1315, %v1314
      %v1347 = vpack.c.b16 %v1317, %v1316
      %v1348 = vpack.c.b16 %v1319, %v1318
      %v1349 = vpack.c.b16 %v1321, %v1320
      %v1350 = vpack.c.b16 %v1323, %v1322
      %v1351 = vpack.c.b16 %v1325, %v1324
      %v1352 = vpack.c.b16 %v1327, %v1326
      %v1353 = vpack.c.b16 %v1329, %v1328
      %v1354 = vpack.c.b16 %v1331, %v1330
      %v1355 = vpack.c.b16 %v1333, %v1332
      %v1356 = vpack.c.b16 %v1335, %v1334
      %v1357 = vpack.c.b16 %v1337, %v1336
      %v1358 = vpack.c.b16 %v1339, %v1338
      %v1359 = vpack.c.b16 %v1341, %v1340
      %v1360 = vpack.c.b16 %v1343, %v1342
      %v1361 = vpack.c.b16 %v1345, %v1344
      %v1366 = vunpack.c.l.b16 %v1310
      %v1367 = vunpack.c.l.b16 %v1311
      %v1368 = vunpack.c.l.b16 %v1312
      %v1369 = vunpack.c.l.b16 %v1313
      %v1370 = vpack.c.b16 %v1367, %v1366
      %v1371 = vpack.c.b16 %v1369, %v1368
      %v1375 = vsel %vm704, %v1346, 0
      %v1378 = vsel %vm704, %v1347, 0
      %v1381 = vsel %vm704, %v1348, 0
      %v1384 = vsel %vm704, %v1349, 0
      %v1387 = vsel %vm704, %v1350, 0
      %v1390 = vsel %vm704, %v1351, 0
      %v1393 = vsel %vm704, %v1352, 0
      %v1396 = vsel %vm704, %v1353, 0
      %v1399 = vsel %vm704, %v1354, 0
      %v1402 = vsel %vm704, %v1355, 0
      %v1405 = vsel %vm704, %v1356, 0
      %v1408 = vsel %vm704, %v1357, 0
      %v1411 = vsel %vm704, %v1358, 0
      %v1414 = vsel %vm704, %v1359, 0
      %v1417 = vsel %vm704, %v1360, 0
      %v1420 = vsel %vm704, %v1361, 0
      %1422 = vmatpush.bf16.msra.mxu0 0
      %1423 = vmatpush.bf16.msra.mxu0 0
      %1424 = vmatpush.bf16.msra.mxu0 0
      %1425 = vmatpush.bf16.msra.mxu0 0
      %1426 = vmatpush.bf16.msra.mxu0 0
      %1427 = vmatpush.bf16.msra.mxu0 0
      %1428 = vmatpush.bf16.msra.mxu0 %v1371
      %1429 = vmatpush.bf16.msra.mxu0 %v1370
      %1430 = vmatmul.bf16.gmra.mxu0 %v1375
      %v1431 = vpop.f32.mrf.mxu0
      %v1432 = vadd.f32 0.0, %v1431
      %v1433 = vpop.f32.mrf.mxu0
      %v1434 = vadd.f32 0.0, %v1433
      %1435 = vmatmul.bf16.gmra.mxu0 %v1378
      %v1436 = vpop.f32.mrf.mxu0
      %v1437 = vadd.f32 0.0, %v1436
      %v1438 = vpop.f32.mrf.mxu0
      %v1439 = vadd.f32 0.0, %v1438
      %1440 = vmatmul.bf16.gmra.mxu0 %v1381
      %v1441 = vpop.f32.mrf.mxu0
      %v1442 = vadd.f32 0.0, %v1441
      %v1443 = vpop.f32.mrf.mxu0
      %v1444 = vadd.f32 0.0, %v1443
      %1445 = vmatmul.bf16.gmra.mxu0 %v1384
      %v1446 = vpop.f32.mrf.mxu0
      %v1447 = vadd.f32 0.0, %v1446
      %v1448 = vpop.f32.mrf.mxu0
      %v1449 = vadd.f32 0.0, %v1448
      %1450 = vmatmul.bf16.gmra.mxu0 %v1387
      %v1451 = vpop.f32.mrf.mxu0
      %v1452 = vadd.f32 0.0, %v1451
      %v1453 = vpop.f32.mrf.mxu0
      %v1454 = vadd.f32 0.0, %v1453
      %1455 = vmatmul.bf16.gmra.mxu0 %v1390
      %v1456 = vpop.f32.mrf.mxu0
      %v1457 = vadd.f32 0.0, %v1456
      %v1458 = vpop.f32.mrf.mxu0
      %v1459 = vadd.f32 0.0, %v1458
      %1460 = vmatmul.bf16.gmra.mxu0 %v1393
      %v1461 = vpop.f32.mrf.mxu0
      %v1462 = vadd.f32 0.0, %v1461
      %v1463 = vpop.f32.mrf.mxu0
      %v1464 = vadd.f32 0.0, %v1463
      %1465 = vmatmul.bf16.gmra.mxu0 %v1396
      %v1466 = vpop.f32.mrf.mxu0
      %v1467 = vadd.f32 0.0, %v1466
      %v1468 = vpop.f32.mrf.mxu0
      %v1469 = vadd.f32 0.0, %v1468
      %1470 = vmatmul.bf16.gmra.mxu0 %v1399
      %v1471 = vpop.f32.mrf.mxu0
      %v1472 = vadd.f32 0.0, %v1471
      %v1473 = vpop.f32.mrf.mxu0
      %v1474 = vadd.f32 0.0, %v1473
      %1475 = vmatmul.bf16.gmra.mxu0 %v1402
      %v1476 = vpop.f32.mrf.mxu0
      %v1477 = vadd.f32 0.0, %v1476
      %v1478 = vpop.f32.mrf.mxu0
      %v1479 = vadd.f32 0.0, %v1478
      %1480 = vmatmul.bf16.gmra.mxu0 %v1405
      %v1481 = vpop.f32.mrf.mxu0
      %v1482 = vadd.f32 0.0, %v1481
      %v1483 = vpop.f32.mrf.mxu0
      %v1484 = vadd.f32 0.0, %v1483
      %1485 = vmatmul.bf16.gmra.mxu0 %v1408
      %v1486 = vpop.f32.mrf.mxu0
      %v1487 = vadd.f32 0.0, %v1486
      %v1488 = vpop.f32.mrf.mxu0
      %v1489 = vadd.f32 0.0, %v1488
      %1490 = vmatmul.bf16.gmra.mxu0 %v1411
      %v1491 = vpop.f32.mrf.mxu0
      %v1492 = vadd.f32 0.0, %v1491
      %v1493 = vpop.f32.mrf.mxu0
      %v1494 = vadd.f32 0.0, %v1493
      %1495 = vmatmul.bf16.gmra.mxu0 %v1414
      %v1496 = vpop.f32.mrf.mxu0
      %v1497 = vadd.f32 0.0, %v1496
      %v1498 = vpop.f32.mrf.mxu0
      %v1499 = vadd.f32 0.0, %v1498
      %1500 = vmatmul.bf16.gmra.mxu0 %v1417
      %v1501 = vpop.f32.mrf.mxu0
      %v1502 = vadd.f32 0.0, %v1501
      %v1503 = vpop.f32.mrf.mxu0
      %v1504 = vadd.f32 0.0, %v1503
      %1505 = vmatmul.bf16.gmra.mxu0 %v1420
      %v1506 = vpop.f32.mrf.mxu0
      %v1507 = vadd.f32 0.0, %v1506
      %v1508 = vpop.f32.mrf.mxu0
      %v1509 = vadd.f32 0.0, %v1508
      %1510 = vdwg.mxu0
      %v1511 = vadd.f32 %v842, %v1432
      %v1512 = vadd.f32 %v843, %v1434
      %v1513 = vadd.f32 %v844, %v1437
      %v1514 = vadd.f32 %v845, %v1439
      %v1515 = vadd.f32 %v846, %v1442
      %v1516 = vadd.f32 %v847, %v1444
      %v1517 = vadd.f32 %v848, %v1447
      %v1518 = vadd.f32 %v849, %v1449
      %v1519 = vadd.f32 %v850, %v1452
      %v1520 = vadd.f32 %v851, %v1454
      %v1521 = vadd.f32 %v852, %v1457
      %v1522 = vadd.f32 %v853, %v1459
      %v1523 = vadd.f32 %v854, %v1462
      %v1524 = vadd.f32 %v855, %v1464
      %v1525 = vadd.f32 %v856, %v1467
      %v1526 = vadd.f32 %v857, %v1469
      %v1527 = vadd.f32 %v858, %v1472
      %v1528 = vadd.f32 %v859, %v1474
      %v1529 = vadd.f32 %v860, %v1477
      %v1530 = vadd.f32 %v861, %v1479
      %v1531 = vadd.f32 %v862, %v1482
      %v1532 = vadd.f32 %v863, %v1484
      %v1533 = vadd.f32 %v864, %v1487
      %v1534 = vadd.f32 %v865, %v1489
      %v1535 = vadd.f32 %v866, %v1492
      %v1536 = vadd.f32 %v867, %v1494
      %v1537 = vadd.f32 %v868, %v1497
      %v1538 = vadd.f32 %v869, %v1499
      %v1539 = vadd.f32 %v870, %v1502
      %v1540 = vadd.f32 %v871, %v1504
      %v1541 = vadd.f32 %v872, %v1507
      %v1542 = vadd.f32 %v873, %v1509
      %v1543 = vld [vmem:[%s284] sm:$0xe]
      %v1544 = vld [vmem:[%s284 + $0xc] sm:$0xe]
      %v1545 = vld [vmem:[%s284 + $0x18] sm:$0xe]
      %v1546 = vld [vmem:[%s284 + $0x24] sm:$0xe]
      %v1547 = vld [vmem:[%s284 + $0x30] sm:$0xe]
      %v1548 = vld [vmem:[%s284 + $0x3c] sm:$0xe]
      %v1549 = vld [vmem:[%s284 + $0x48] sm:$0xe]
      %v1550 = vld [vmem:[%s284 + $0x54] sm:$0xe]
      %v1551 = vld [vmem:[%s284 + $0x60] sm:$0xe]
      %v1552 = vld [vmem:[%s284 + $0x6c] sm:$0xe]
      %v1553 = vld [vmem:[%s284 + $0x78] sm:$0xe]
      %v1554 = vld [vmem:[%s284 + $0x84] sm:$0xe]
      %v1555 = vld [vmem:[%s284 + $0x90] sm:$0xe]
      %v1556 = vld [vmem:[%s284 + $0x9c] sm:$0xe]
      %v1557 = vld [vmem:[%s284 + $0xa8] sm:$0xe]
      %v1558 = vld [vmem:[%s284 + $0xb4] sm:$0xe]
      %vm1607 = vcmask 1042432
      %vm1608 = vcmask 1046532
      %vm1609 = vmor %vm1607, %vm1608
      %v1610 = vrot.slane %v1543, 5
      %v1611 = vrot.slane %v1610, 4
      %v1612 = vrot.slane %v875, 5
      %v1613 = vsel %vm1609, %v1611, %v1612
      %v1614 = vrot.slane %v1612, 4
      %v1615 = vrot.slane %v876, 5
      %v1616 = vsel %vm1609, %v1614, %v1615
      %v1617 = vrot.slane %v1544, 5
      %v1618 = vrot.slane %v1617, 4
      %v1619 = vrot.slane %v878, 5
      %v1620 = vsel %vm1609, %v1618, %v1619
      %v1621 = vrot.slane %v1619, 4
      %v1622 = vrot.slane %v879, 5
      %v1623 = vsel %vm1609, %v1621, %v1622
      %v1624 = vrot.slane %v1545, 5
      %v1625 = vrot.slane %v1624, 4
      %v1626 = vrot.slane %v881, 5
      %v1627 = vsel %vm1609, %v1625, %v1626
      %v1628 = vrot.slane %v1626, 4
      %v1629 = vrot.slane %v882, 5
      %v1630 = vsel %vm1609, %v1628, %v1629
      %v1631 = vrot.slane %v1546, 5
      %v1632 = vrot.slane %v1631, 4
      %v1633 = vrot.slane %v884, 5
      %v1634 = vsel %vm1609, %v1632, %v1633
      %v1635 = vrot.slane %v1633, 4
      %v1636 = vrot.slane %v885, 5
      %v1637 = vsel %vm1609, %v1635, %v1636
      %v1638 = vrot.slane %v1547, 5
      %v1639 = vrot.slane %v1638, 4
      %v1640 = vrot.slane %v887, 5
      %v1641 = vsel %vm1609, %v1639, %v1640
      %v1642 = vrot.slane %v1640, 4
      %v1643 = vrot.slane %v888, 5
      %v1644 = vsel %vm1609, %v1642, %v1643
      %v1645 = vrot.slane %v1548, 5
      %v1646 = vrot.slane %v1645, 4
      %v1647 = vrot.slane %v890, 5
      %v1648 = vsel %vm1609, %v1646, %v1647
      %v1649 = vrot.slane %v1647, 4
      %v1650 = vrot.slane %v891, 5
      %v1651 = vsel %vm1609, %v1649, %v1650
      %v1652 = vrot.slane %v1549, 5
      %v1653 = vrot.slane %v1652, 4
      %v1654 = vrot.slane %v893, 5
      %v1655 = vsel %vm1609, %v1653, %v1654
      %v1656 = vrot.slane %v1654, 4
      %v1657 = vrot.slane %v894, 5
      %v1658 = vsel %vm1609, %v1656, %v1657
      %v1659 = vrot.slane %v1550, 5
      %v1660 = vrot.slane %v1659, 4
      %v1661 = vrot.slane %v896, 5
      %v1662 = vsel %vm1609, %v1660, %v1661
      %v1663 = vrot.slane %v1661, 4
      %v1664 = vrot.slane %v897, 5
      %v1665 = vsel %vm1609, %v1663, %v1664
      %v1666 = vrot.slane %v1551, 5
      %v1667 = vrot.slane %v1666, 4
      %v1668 = vrot.slane %v899, 5
      %v1669 = vsel %vm1609, %v1667, %v1668
      %v1670 = vrot.slane %v1668, 4
      %v1671 = vrot.slane %v900, 5
      %v1672 = vsel %vm1609, %v1670, %v1671
      %v1673 = vrot.slane %v1552, 5
      %v1674 = vrot.slane %v1673, 4
      %v1675 = vrot.slane %v902, 5
      %v1676 = vsel %vm1609, %v1674, %v1675
      %v1677 = vrot.slane %v1675, 4
      %v1678 = vrot.slane %v903, 5
      %v1679 = vsel %vm1609, %v1677, %v1678
      %v1680 = vrot.slane %v1553, 5
      %v1681 = vrot.slane %v1680, 4
      %v1682 = vrot.slane %v905, 5
      %v1683 = vsel %vm1609, %v1681, %v1682
      %v1684 = vrot.slane %v1682, 4
      %v1685 = vrot.slane %v906, 5
      %v1686 = vsel %vm1609, %v1684, %v1685
      %v1687 = vrot.slane %v1554, 5
      %v1688 = vrot.slane %v1687, 4
      %v1689 = vrot.slane %v908, 5
      %v1690 = vsel %vm1609, %v1688, %v1689
      %v1691 = vrot.slane %v1689, 4
      %v1692 = vrot.slane %v909, 5
      %v1693 = vsel %vm1609, %v1691, %v1692
      %v1694 = vrot.slane %v1555, 5
      %v1695 = vrot.slane %v1694, 4
      %v1696 = vrot.slane %v911, 5
      %v1697 = vsel %vm1609, %v1695, %v1696
      %v1698 = vrot.slane %v1696, 4
      %v1699 = vrot.slane %v912, 5
      %v1700 = vsel %vm1609, %v1698, %v1699
      %v1701 = vrot.slane %v1556, 5
      %v1702 = vrot.slane %v1701, 4
      %v1703 = vrot.slane %v914, 5
      %v1704 = vsel %vm1609, %v1702, %v1703
      %v1705 = vrot.slane %v1703, 4
      %v1706 = vrot.slane %v915, 5
      %v1707 = vsel %vm1609, %v1705, %v1706
      %v1708 = vrot.slane %v1557, 5
      %v1709 = vrot.slane %v1708, 4
      %v1710 = vrot.slane %v917, 5
      %v1711 = vsel %vm1609, %v1709, %v1710
      %v1712 = vrot.slane %v1710, 4
      %v1713 = vrot.slane %v918, 5
      %v1714 = vsel %vm1609, %v1712, %v1713
      %v1715 = vrot.slane %v1558, 5
      %v1716 = vrot.slane %v1715, 4
      %v1717 = vrot.slane %v920, 5
      %v1718 = vsel %vm1609, %v1716, %v1717
      %v1719 = vrot.slane %v1717, 4
      %v1720 = vrot.slane %v921, 5
      %v1721 = vsel %vm1609, %v1719, %v1720
      %s1722 = scalar_lea.vmem %s4, 32
      %v1723 = vld [vmem:[%s1722] sm:$0xf]
      %v1724 = vld [vmem:[%s1722 + $0x4] sm:$0xf]
      %v1725 = vld [vmem:[%s1722 + $0x8] sm:$0xf]
      %v1726 = vld [vmem:[%s1722 + $0xc] sm:$0xf]
      %v1727 = vunpack.c.l.b16 %v1613
      %v1728 = vunpack.c.l.b16 %v1616
      %v1729 = vunpack.c.l.b16 %v1620
      %v1730 = vunpack.c.l.b16 %v1623
      %v1731 = vunpack.c.l.b16 %v1627
      %v1732 = vunpack.c.l.b16 %v1630
      %v1733 = vunpack.c.l.b16 %v1634
      %v1734 = vunpack.c.l.b16 %v1637
      %v1735 = vunpack.c.l.b16 %v1641
      %v1736 = vunpack.c.l.b16 %v1644
      %v1737 = vunpack.c.l.b16 %v1648
      %v1738 = vunpack.c.l.b16 %v1651
      %v1739 = vunpack.c.l.b16 %v1655
      %v1740 = vunpack.c.l.b16 %v1658
      %v1741 = vunpack.c.l.b16 %v1662
      %v1742 = vunpack.c.l.b16 %v1665
      %v1743 = vunpack.c.l.b16 %v1669
      %v1744 = vunpack.c.l.b16 %v1672
      %v1745 = vunpack.c.l.b16 %v1676
      %v1746 = vunpack.c.l.b16 %v1679
      %v1747 = vunpack.c.l.b16 %v1683
      %v1748 = vunpack.c.l.b16 %v1686
      %v1749 = vunpack.c.l.b16 %v1690
      %v1750 = vunpack.c.l.b16 %v1693
      %v1751 = vunpack.c.l.b16 %v1697
      %v1752 = vunpack.c.l.b16 %v1700
      %v1753 = vunpack.c.l.b16 %v1704
      %v1754 = vunpack.c.l.b16 %v1707
      %v1755 = vunpack.c.l.b16 %v1711
      %v1756 = vunpack.c.l.b16 %v1714
      %v1757 = vunpack.c.l.b16 %v1718
      %v1758 = vunpack.c.l.b16 %v1721
      %v1759 = vpack.c.b16 %v1728, %v1727
      %v1760 = vpack.c.b16 %v1730, %v1729
      %v1761 = vpack.c.b16 %v1732, %v1731
      %v1762 = vpack.c.b16 %v1734, %v1733
      %v1763 = vpack.c.b16 %v1736, %v1735
      %v1764 = vpack.c.b16 %v1738, %v1737
      %v1765 = vpack.c.b16 %v1740, %v1739
      %v1766 = vpack.c.b16 %v1742, %v1741
      %v1767 = vpack.c.b16 %v1744, %v1743
      %v1768 = vpack.c.b16 %v1746, %v1745
      %v1769 = vpack.c.b16 %v1748, %v1747
      %v1770 = vpack.c.b16 %v1750, %v1749
      %v1771 = vpack.c.b16 %v1752, %v1751
      %v1772 = vpack.c.b16 %v1754, %v1753
      %v1773 = vpack.c.b16 %v1756, %v1755
      %v1774 = vpack.c.b16 %v1758, %v1757
      %v1779 = vunpack.c.l.b16 %v1723
      %v1780 = vunpack.c.l.b16 %v1724
      %v1781 = vunpack.c.l.b16 %v1725
      %v1782 = vunpack.c.l.b16 %v1726
      %v1783 = vpack.c.b16 %v1780, %v1779
      %v1784 = vpack.c.b16 %v1782, %v1781
      %v1788 = vsel %vm704, %v1759, 0
      %v1791 = vsel %vm704, %v1760, 0
      %v1794 = vsel %vm704, %v1761, 0
      %v1797 = vsel %vm704, %v1762, 0
      %v1800 = vsel %vm704, %v1763, 0
      %v1803 = vsel %vm704, %v1764, 0
      %v1806 = vsel %vm704, %v1765, 0
      %v1809 = vsel %vm704, %v1766, 0
      %v1812 = vsel %vm704, %v1767, 0
      %v1815 = vsel %vm704, %v1768, 0
      %v1818 = vsel %vm704, %v1769, 0
      %v1821 = vsel %vm704, %v1770, 0
      %v1824 = vsel %vm704, %v1771, 0
      %v1827 = vsel %vm704, %v1772, 0
      %v1830 = vsel %vm704, %v1773, 0
      %v1833 = vsel %vm704, %v1774, 0
      %1835 = vmatpush.bf16.msra.mxu0 0
      %1836 = vmatpush.bf16.msra.mxu0 0
      %1837 = vmatpush.bf16.msra.mxu0 0
      %1838 = vmatpush.bf16.msra.mxu0 0
      %1839 = vmatpush.bf16.msra.mxu0 0
      %1840 = vmatpush.bf16.msra.mxu0 0
      %1841 = vmatpush.bf16.msra.mxu0 %v1784
      %1842 = vmatpush.bf16.msra.mxu0 %v1783
      %1843 = vmatmul.bf16.gmra.mxu0 %v1788
      %v1844 = vpop.f32.mrf.mxu0
      %v1845 = vadd.f32 0.0, %v1844
      %v1846 = vpop.f32.mrf.mxu0
      %v1847 = vadd.f32 0.0, %v1846
      %1848 = vmatmul.bf16.gmra.mxu0 %v1791
      %v1849 = vpop.f32.mrf.mxu0
      %v1850 = vadd.f32 0.0, %v1849
      %v1851 = vpop.f32.mrf.mxu0
      %v1852 = vadd.f32 0.0, %v1851
      %1853 = vmatmul.bf16.gmra.mxu0 %v1794
      %v1854 = vpop.f32.mrf.mxu0
      %v1855 = vadd.f32 0.0, %v1854
      %v1856 = vpop.f32.mrf.mxu0
      %v1857 = vadd.f32 0.0, %v1856
      %1858 = vmatmul.bf16.gmra.mxu0 %v1797
      %v1859 = vpop.f32.mrf.mxu0
      %v1860 = vadd.f32 0.0, %v1859
      %v1861 = vpop.f32.mrf.mxu0
      %v1862 = vadd.f32 0.0, %v1861
      %1863 = vmatmul.bf16.gmra.mxu0 %v1800
      %v1864 = vpop.f32.mrf.mxu0
      %v1865 = vadd.f32 0.0, %v1864
      %v1866 = vpop.f32.mrf.mxu0
      %v1867 = vadd.f32 0.0, %v1866
      %1868 = vmatmul.bf16.gmra.mxu0 %v1803
      %v1869 = vpop.f32.mrf.mxu0
      %v1870 = vadd.f32 0.0, %v1869
      %v1871 = vpop.f32.mrf.mxu0
      %v1872 = vadd.f32 0.0, %v1871
      %1873 = vmatmul.bf16.gmra.mxu0 %v1806
      %v1874 = vpop.f32.mrf.mxu0
      %v1875 = vadd.f32 0.0, %v1874
      %v1876 = vpop.f32.mrf.mxu0
      %v1877 = vadd.f32 0.0, %v1876
      %1878 = vmatmul.bf16.gmra.mxu0 %v1809
      %v1879 = vpop.f32.mrf.mxu0
      %v1880 = vadd.f32 0.0, %v1879
      %v1881 = vpop.f32.mrf.mxu0
      %v1882 = vadd.f32 0.0, %v1881
      %1883 = vmatmul.bf16.gmra.mxu0 %v1812
      %v1884 = vpop.f32.mrf.mxu0
      %v1885 = vadd.f32 0.0, %v1884
      %v1886 = vpop.f32.mrf.mxu0
      %v1887 = vadd.f32 0.0, %v1886
      %1888 = vmatmul.bf16.gmra.mxu0 %v1815
      %v1889 = vpop.f32.mrf.mxu0
      %v1890 = vadd.f32 0.0, %v1889
      %v1891 = vpop.f32.mrf.mxu0
      %v1892 = vadd.f32 0.0, %v1891
      %1893 = vmatmul.bf16.gmra.mxu0 %v1818
      %v1894 = vpop.f32.mrf.mxu0
      %v1895 = vadd.f32 0.0, %v1894
      %v1896 = vpop.f32.mrf.mxu0
      %v1897 = vadd.f32 0.0, %v1896
      %1898 = vmatmul.bf16.gmra.mxu0 %v1821
      %v1899 = vpop.f32.mrf.mxu0
      %v1900 = vadd.f32 0.0, %v1899
      %v1901 = vpop.f32.mrf.mxu0
      %v1902 = vadd.f32 0.0, %v1901
      %1903 = vmatmul.bf16.gmra.mxu0 %v1824
      %v1904 = vpop.f32.mrf.mxu0
      %v1905 = vadd.f32 0.0, %v1904
      %v1906 = vpop.f32.mrf.mxu0
      %v1907 = vadd.f32 0.0, %v1906
      %1908 = vmatmul.bf16.gmra.mxu0 %v1827
      %v1909 = vpop.f32.mrf.mxu0
      %v1910 = vadd.f32 0.0, %v1909
      %v1911 = vpop.f32.mrf.mxu0
      %v1912 = vadd.f32 0.0, %v1911
      %1913 = vmatmul.bf16.gmra.mxu0 %v1830
      %v1914 = vpop.f32.mrf.mxu0
      %v1915 = vadd.f32 0.0, %v1914
      %v1916 = vpop.f32.mrf.mxu0
      %v1917 = vadd.f32 0.0, %v1916
      %1918 = vmatmul.bf16.gmra.mxu0 %v1833
      %v1919 = vpop.f32.mrf.mxu0
      %v1920 = vadd.f32 0.0, %v1919
      %v1921 = vpop.f32.mrf.mxu0
      %v1922 = vadd.f32 0.0, %v1921
      %1923 = vdwg.mxu0
      %v1924 = vadd.f32 %v1511, %v1845
      %v1925 = vadd.f32 %v1512, %v1847
      %v1926 = vadd.f32 %v1513, %v1850
      %v1927 = vadd.f32 %v1514, %v1852
      %v1928 = vadd.f32 %v1515, %v1855
      %v1929 = vadd.f32 %v1516, %v1857
      %v1930 = vadd.f32 %v1517, %v1860
      %v1931 = vadd.f32 %v1518, %v1862
      %v1932 = vadd.f32 %v1519, %v1865
      %v1933 = vadd.f32 %v1520, %v1867
      %v1934 = vadd.f32 %v1521, %v1870
      %v1935 = vadd.f32 %v1522, %v1872
      %v1936 = vadd.f32 %v1523, %v1875
      %v1937 = vadd.f32 %v1524, %v1877
      %v1938 = vadd.f32 %v1525, %v1880
      %v1939 = vadd.f32 %v1526, %v1882
      %v1940 = vadd.f32 %v1527, %v1885
      %v1941 = vadd.f32 %v1528, %v1887
      %v1942 = vadd.f32 %v1529, %v1890
      %v1943 = vadd.f32 %v1530, %v1892
      %v1944 = vadd.f32 %v1531, %v1895
      %v1945 = vadd.f32 %v1532, %v1897
      %v1946 = vadd.f32 %v1533, %v1900
      %v1947 = vadd.f32 %v1534, %v1902
      %v1948 = vadd.f32 %v1535, %v1905
      %v1949 = vadd.f32 %v1536, %v1907
      %v1950 = vadd.f32 %v1537, %v1910
      %v1951 = vadd.f32 %v1538, %v1912
      %v1952 = vadd.f32 %v1539, %v1915
      %v1953 = vadd.f32 %v1540, %v1917
      %v1954 = vadd.f32 %v1541, %v1920
      %v1955 = vadd.f32 %v1542, %v1922
      %s1956 = scalar_lea.vmem %s284, 12
      %v1957 = vld [vmem:[%s1956] sm:$0xf]
      %v1958 = vld [vmem:[%s1956 + $0x4] sm:$0xf]
      %v1959 = vld [vmem:[%s1956 + $0xc] sm:$0xf]
      %v1960 = vld [vmem:[%s1956 + $0x10] sm:$0xf]
      %v1961 = vld [vmem:[%s1956 + $0x18] sm:$0xf]
      %v1962 = vld [vmem:[%s1956 + $0x1c] sm:$0xf]
      %v1963 = vld [vmem:[%s1956 + $0x24] sm:$0xf]
      %v1964 = vld [vmem:[%s1956 + $0x28] sm:$0xf]
      %v1965 = vld [vmem:[%s1956 + $0x30] sm:$0xf]
      %v1966 = vld [vmem:[%s1956 + $0x34] sm:$0xf]
      %v1967 = vld [vmem:[%s1956 + $0x3c] sm:$0xf]
      %v1968 = vld [vmem:[%s1956 + $0x40] sm:$0xf]
      %v1969 = vld [vmem:[%s1956 + $0x48] sm:$0xf]
      %v1970 = vld [vmem:[%s1956 + $0x4c] sm:$0xf]
      %v1971 = vld [vmem:[%s1956 + $0x54] sm:$0xf]
      %v1972 = vld [vmem:[%s1956 + $0x58] sm:$0xf]
      %v1973 = vld [vmem:[%s1956 + $0x60] sm:$0xf]
      %v1974 = vld [vmem:[%s1956 + $0x64] sm:$0xf]
      %v1975 = vld [vmem:[%s1956 + $0x6c] sm:$0xf]
      %v1976 = vld [vmem:[%s1956 + $0x70] sm:$0xf]
      %v1977 = vld [vmem:[%s1956 + $0x78] sm:$0xf]
      %v1978 = vld [vmem:[%s1956 + $0x7c] sm:$0xf]
      %v1979 = vld [vmem:[%s1956 + $0x84] sm:$0xf]
      %v1980 = vld [vmem:[%s1956 + $0x88] sm:$0xf]
      %v1981 = vld [vmem:[%s1956 + $0x90] sm:$0xf]
      %v1982 = vld [vmem:[%s1956 + $0x94] sm:$0xf]
      %v1983 = vld [vmem:[%s1956 + $0x9c] sm:$0xf]
      %v1984 = vld [vmem:[%s1956 + $0xa0] sm:$0xf]
      %v1985 = vld [vmem:[%s1956 + $0xa8] sm:$0xf]
      %v1986 = vld [vmem:[%s1956 + $0xac] sm:$0xf]
      %v1987 = vld [vmem:[%s1956 + $0xb4] sm:$0xf]
      %v1988 = vld [vmem:[%s1956 + $0xb8] sm:$0xf]
      %s1989 = scalar_lea.vmem %s4, 48
      %v1990 = vld [vmem:[%s1989] sm:$0xf]
      %v1991 = vld [vmem:[%s1989 + $0x4] sm:$0xf]
      %v1992 = vld [vmem:[%s1989 + $0x8] sm:$0xf]
      %v1993 = vld [vmem:[%s1989 + $0xc] sm:$0xf]
      %v2026 = vunpack.c.l.b16 %v1957
      %v2027 = vunpack.c.l.b16 %v1958
      %v2028 = vunpack.c.l.b16 %v1959
      %v2029 = vunpack.c.l.b16 %v1960
      %v2030 = vunpack.c.l.b16 %v1961
      %v2031 = vunpack.c.l.b16 %v1962
      %v2032 = vunpack.c.l.b16 %v1963
      %v2033 = vunpack.c.l.b16 %v1964
      %v2034 = vunpack.c.l.b16 %v1965
      %v2035 = vunpack.c.l.b16 %v1966
      %v2036 = vunpack.c.l.b16 %v1967
      %v2037 = vunpack.c.l.b16 %v1968
      %v2038 = vunpack.c.l.b16 %v1969
      %v2039 = vunpack.c.l.b16 %v1970
      %v2040 = vunpack.c.l.b16 %v1971
      %v2041 = vunpack.c.l.b16 %v1972
      %v2042 = vunpack.c.l.b16 %v1973
      %v2043 = vunpack.c.l.b16 %v1974
      %v2044 = vunpack.c.l.b16 %v1975
      %v2045 = vunpack.c.l.b16 %v1976
      %v2046 = vunpack.c.l.b16 %v1977
      %v2047 = vunpack.c.l.b16 %v1978
      %v2048 = vunpack.c.l.b16 %v1979
      %v2049 = vunpack.c.l.b16 %v1980
      %v2050 = vunpack.c.l.b16 %v1981
      %v2051 = vunpack.c.l.b16 %v1982
      %v2052 = vunpack.c.l.b16 %v1983
      %v2053 = vunpack.c.l.b16 %v1984
      %v2054 = vunpack.c.l.b16 %v1985
      %v2055 = vunpack.c.l.b16 %v1986
      %v2056 = vunpack.c.l.b16 %v1987
      %v2057 = vunpack.c.l.b16 %v1988
      %v2058 = vpack.c.b16 %v2027, %v2026
      %v2059 = vpack.c.b16 %v2029, %v2028
      %v2060 = vpack.c.b16 %v2031, %v2030
      %v2061 = vpack.c.b16 %v2033, %v2032
      %v2062 = vpack.c.b16 %v2035, %v2034
      %v2063 = vpack.c.b16 %v2037, %v2036
      %v2064 = vpack.c.b16 %v2039, %v2038
      %v2065 = vpack.c.b16 %v2041, %v2040
      %v2066 = vpack.c.b16 %v2043, %v2042
      %v2067 = vpack.c.b16 %v2045, %v2044
      %v2068 = vpack.c.b16 %v2047, %v2046
      %v2069 = vpack.c.b16 %v2049, %v2048
      %v2070 = vpack.c.b16 %v2051, %v2050
      %v2071 = vpack.c.b16 %v2053, %v2052
      %v2072 = vpack.c.b16 %v2055, %v2054
      %v2073 = vpack.c.b16 %v2057, %v2056
      %v2078 = vunpack.c.l.b16 %v1990
      %v2079 = vunpack.c.l.b16 %v1991
      %v2080 = vunpack.c.l.b16 %v1992
      %v2081 = vunpack.c.l.b16 %v1993
      %v2082 = vpack.c.b16 %v2079, %v2078
      %v2083 = vpack.c.b16 %v2081, %v2080
      %v2087 = vsel %vm704, %v2058, 0
      %v2090 = vsel %vm704, %v2059, 0
      %v2093 = vsel %vm704, %v2060, 0
      %v2096 = vsel %vm704, %v2061, 0
      %v2099 = vsel %vm704, %v2062, 0
      %v2102 = vsel %vm704, %v2063, 0
      %v2105 = vsel %vm704, %v2064, 0
      %v2108 = vsel %vm704, %v2065, 0
      %v2111 = vsel %vm704, %v2066, 0
      %v2114 = vsel %vm704, %v2067, 0
      %v2117 = vsel %vm704, %v2068, 0
      %v2120 = vsel %vm704, %v2069, 0
      %v2123 = vsel %vm704, %v2070, 0
      %v2126 = vsel %vm704, %v2071, 0
      %v2129 = vsel %vm704, %v2072, 0
      %v2132 = vsel %vm704, %v2073, 0
      %2134 = vmatpush.bf16.msra.mxu0 0
      %2135 = vmatpush.bf16.msra.mxu0 0
      %2136 = vmatpush.bf16.msra.mxu0 0
      %2137 = vmatpush.bf16.msra.mxu0 0
      %2138 = vmatpush.bf16.msra.mxu0 0
      %2139 = vmatpush.bf16.msra.mxu0 0
      %2140 = vmatpush.bf16.msra.mxu0 %v2083
      %2141 = vmatpush.bf16.msra.mxu0 %v2082
      %2142 = vmatmul.bf16.gmra.mxu0 %v2087
      %v2143 = vpop.f32.mrf.mxu0
      %v2144 = vadd.f32 0.0, %v2143
      %v2145 = vpop.f32.mrf.mxu0
      %v2146 = vadd.f32 0.0, %v2145
      %2147 = vmatmul.bf16.gmra.mxu0 %v2090
      %v2148 = vpop.f32.mrf.mxu0
      %v2149 = vadd.f32 0.0, %v2148
      %v2150 = vpop.f32.mrf.mxu0
      %v2151 = vadd.f32 0.0, %v2150
      %2152 = vmatmul.bf16.gmra.mxu0 %v2093
      %v2153 = vpop.f32.mrf.mxu0
      %v2154 = vadd.f32 0.0, %v2153
      %v2155 = vpop.f32.mrf.mxu0
      %v2156 = vadd.f32 0.0, %v2155
      %2157 = vmatmul.bf16.gmra.mxu0 %v2096
      %v2158 = vpop.f32.mrf.mxu0
      %v2159 = vadd.f32 0.0, %v2158
      %v2160 = vpop.f32.mrf.mxu0
      %v2161 = vadd.f32 0.0, %v2160
      %2162 = vmatmul.bf16.gmra.mxu0 %v2099
      %v2163 = vpop.f32.mrf.mxu0
      %v2164 = vadd.f32 0.0, %v2163
      %v2165 = vpop.f32.mrf.mxu0
      %v2166 = vadd.f32 0.0, %v2165
      %2167 = vmatmul.bf16.gmra.mxu0 %v2102
      %v2168 = vpop.f32.mrf.mxu0
      %v2169 = vadd.f32 0.0, %v2168
      %v2170 = vpop.f32.mrf.mxu0
      %v2171 = vadd.f32 0.0, %v2170
      %2172 = vmatmul.bf16.gmra.mxu0 %v2105
      %v2173 = vpop.f32.mrf.mxu0
      %v2174 = vadd.f32 0.0, %v2173
      %v2175 = vpop.f32.mrf.mxu0
      %v2176 = vadd.f32 0.0, %v2175
      %2177 = vmatmul.bf16.gmra.mxu0 %v2108
      %v2178 = vpop.f32.mrf.mxu0
      %v2179 = vadd.f32 0.0, %v2178
      %v2180 = vpop.f32.mrf.mxu0
      %v2181 = vadd.f32 0.0, %v2180
      %2182 = vmatmul.bf16.gmra.mxu0 %v2111
      %v2183 = vpop.f32.mrf.mxu0
      %v2184 = vadd.f32 0.0, %v2183
      %v2185 = vpop.f32.mrf.mxu0
      %v2186 = vadd.f32 0.0, %v2185
      %2187 = vmatmul.bf16.gmra.mxu0 %v2114
      %v2188 = vpop.f32.mrf.mxu0
      %v2189 = vadd.f32 0.0, %v2188
      %v2190 = vpop.f32.mrf.mxu0
      %v2191 = vadd.f32 0.0, %v2190
      %2192 = vmatmul.bf16.gmra.mxu0 %v2117
      %v2193 = vpop.f32.mrf.mxu0
      %v2194 = vadd.f32 0.0, %v2193
      %v2195 = vpop.f32.mrf.mxu0
      %v2196 = vadd.f32 0.0, %v2195
      %2197 = vmatmul.bf16.gmra.mxu0 %v2120
      %v2198 = vpop.f32.mrf.mxu0
      %v2199 = vadd.f32 0.0, %v2198
      %v2200 = vpop.f32.mrf.mxu0
      %v2201 = vadd.f32 0.0, %v2200
      %2202 = vmatmul.bf16.gmra.mxu0 %v2123
      %v2203 = vpop.f32.mrf.mxu0
      %v2204 = vadd.f32 0.0, %v2203
      %v2205 = vpop.f32.mrf.mxu0
      %v2206 = vadd.f32 0.0, %v2205
      %2207 = vmatmul.bf16.gmra.mxu0 %v2126
      %v2208 = vpop.f32.mrf.mxu0
      %v2209 = vadd.f32 0.0, %v2208
      %v2210 = vpop.f32.mrf.mxu0
      %v2211 = vadd.f32 0.0, %v2210
      %2212 = vmatmul.bf16.gmra.mxu0 %v2129
      %v2213 = vpop.f32.mrf.mxu0
      %v2214 = vadd.f32 0.0, %v2213
      %v2215 = vpop.f32.mrf.mxu0
      %v2216 = vadd.f32 0.0, %v2215
      %2217 = vmatmul.bf16.gmra.mxu0 %v2132
      %v2218 = vpop.f32.mrf.mxu0
      %v2219 = vadd.f32 0.0, %v2218
      %v2220 = vpop.f32.mrf.mxu0
      %v2221 = vadd.f32 0.0, %v2220
      %2222 = vdwg.mxu0
      %v2223 = vadd.f32 %v1924, %v2144
      %v2224 = vadd.f32 %v1925, %v2146
      %v2225 = vadd.f32 %v1926, %v2149
      %v2226 = vadd.f32 %v1927, %v2151
      %v2227 = vadd.f32 %v1928, %v2154
      %v2228 = vadd.f32 %v1929, %v2156
      %v2229 = vadd.f32 %v1930, %v2159
      %v2230 = vadd.f32 %v1931, %v2161
      %v2231 = vadd.f32 %v1932, %v2164
      %v2232 = vadd.f32 %v1933, %v2166
      %v2233 = vadd.f32 %v1934, %v2169
      %v2234 = vadd.f32 %v1935, %v2171
      %v2235 = vadd.f32 %v1936, %v2174
      %v2236 = vadd.f32 %v1937, %v2176
      %v2237 = vadd.f32 %v1938, %v2179
      %v2238 = vadd.f32 %v1939, %v2181
      %v2239 = vadd.f32 %v1940, %v2184
      %v2240 = vadd.f32 %v1941, %v2186
      %v2241 = vadd.f32 %v1942, %v2189
      %v2242 = vadd.f32 %v1943, %v2191
      %v2243 = vadd.f32 %v1944, %v2194
      %v2244 = vadd.f32 %v1945, %v2196
      %v2245 = vadd.f32 %v1946, %v2199
      %v2246 = vadd.f32 %v1947, %v2201
      %v2247 = vadd.f32 %v1948, %v2204
      %v2248 = vadd.f32 %v1949, %v2206
      %v2249 = vadd.f32 %v1950, %v2209
      %v2250 = vadd.f32 %v1951, %v2211
      %v2251 = vadd.f32 %v1952, %v2214
      %v2252 = vadd.f32 %v1953, %v2216
      %v2253 = vadd.f32 %v1954, %v2219
      %v2254 = vadd.f32 %v1955, %v2221
      %v2255 = vld [vmem:[%s1956] sm:$0xf]
      %v2256 = vld [vmem:[%s1956 + $0x4] sm:$0xf]
      %v2257 = vld [vmem:[%s1956 + $0x8] sm:$0x1]
      %v2258 = vld [vmem:[%s1956 + $0xc] sm:$0xf]
      %v2259 = vld [vmem:[%s1956 + $0x10] sm:$0xf]
      %v2260 = vld [vmem:[%s1956 + $0x14] sm:$0x1]
      %v2261 = vld [vmem:[%s1956 + $0x18] sm:$0xf]
      %v2262 = vld [vmem:[%s1956 + $0x1c] sm:$0xf]
      %v2263 = vld [vmem:[%s1956 + $0x20] sm:$0x1]
      %v2264 = vld [vmem:[%s1956 + $0x24] sm:$0xf]
      %v2265 = vld [vmem:[%s1956 + $0x28] sm:$0xf]
      %v2266 = vld [vmem:[%s1956 + $0x2c] sm:$0x1]
      %v2267 = vld [vmem:[%s1956 + $0x30] sm:$0xf]
      %v2268 = vld [vmem:[%s1956 + $0x34] sm:$0xf]
      %v2269 = vld [vmem:[%s1956 + $0x38] sm:$0x1]
      %v2270 = vld [vmem:[%s1956 + $0x3c] sm:$0xf]
      %v2271 = vld [vmem:[%s1956 + $0x40] sm:$0xf]
      %v2272 = vld [vmem:[%s1956 + $0x44] sm:$0x1]
      %v2273 = vld [vmem:[%s1956 + $0x48] sm:$0xf]
      %v2274 = vld [vmem:[%s1956 + $0x4c] sm:$0xf]
      %v2275 = vld [vmem:[%s1956 + $0x50] sm:$0x1]
      %v2276 = vld [vmem:[%s1956 + $0x54] sm:$0xf]
      %v2277 = vld [vmem:[%s1956 + $0x58] sm:$0xf]
      %v2278 = vld [vmem:[%s1956 + $0x5c] sm:$0x1]
      %v2279 = vld [vmem:[%s1956 + $0x60] sm:$0xf]
      %v2280 = vld [vmem:[%s1956 + $0x64] sm:$0xf]
      %v2281 = vld [vmem:[%s1956 + $0x68] sm:$0x1]
      %v2282 = vld [vmem:[%s1956 + $0x6c] sm:$0xf]
      %v2283 = vld [vmem:[%s1956 + $0x70] sm:$0xf]
      %v2284 = vld [vmem:[%s1956 + $0x74] sm:$0x1]
      %v2285 = vld [vmem:[%s1956 + $0x78] sm:$0xf]
      %v2286 = vld [vmem:[%s1956 + $0x7c] sm:$0xf]
      %v2287 = vld [vmem:[%s1956 + $0x80] sm:$0x1]
      %v2288 = vld [vmem:[%s1956 + $0x84] sm:$0xf]
      %v2289 = vld [vmem:[%s1956 + $0x88] sm:$0xf]
      %v2290 = vld [vmem:[%s1956 + $0x8c] sm:$0x1]
      %v2291 = vld [vmem:[%s1956 + $0x90] sm:$0xf]
      %v2292 = vld [vmem:[%s1956 + $0x94] sm:$0xf]
      %v2293 = vld [vmem:[%s1956 + $0x98] sm:$0x1]
      %v2294 = vld [vmem:[%s1956 + $0x9c] sm:$0xf]
      %v2295 = vld [vmem:[%s1956 + $0xa0] sm:$0xf]
      %v2296 = vld [vmem:[%s1956 + $0xa4] sm:$0x1]
      %v2297 = vld [vmem:[%s1956 + $0xa8] sm:$0xf]
      %v2298 = vld [vmem:[%s1956 + $0xac] sm:$0xf]
      %v2299 = vld [vmem:[%s1956 + $0xb0] sm:$0x1]
      %v2300 = vld [vmem:[%s1956 + $0xb4] sm:$0xf]
      %v2301 = vld [vmem:[%s1956 + $0xb8] sm:$0xf]
      %v2302 = vld [vmem:[%s1956 + $0xbc] sm:$0x1]
      %v2304 = vshrl.u32 %v2255, 16
      %v2306 = vrot.slane %v2304, 4
      %v2307 = vshll.u32 %v2255, 16
      %v2309 = vrot.slane %v2307, 5
      %v2310 = vor.u32 %v2306, %v2309
      %v2311 = vrot.slane %v2310, 4
      %v2313 = vshll.u32 %v2256, 16
      %v2315 = vrot.slane %v2313, 5
      %v2316 = vsel %vm924, %v2311, %v2315
      %v2317 = vshrl.u32 %v2256, 16
      %v2319 = vrot.slane %v2317, 4
      %v2320 = vor.u32 %v2319, %v2315
      %v2321 = vrot.slane %v2320, 4
      %v2323 = vshll.u32 %v2257, 16
      %v2325 = vrot.slane %v2323, 5
      %v2326 = vsel %vm924, %v2321, %v2325
      %v2328 = vshrl.u32 %v2258, 16
      %v2330 = vrot.slane %v2328, 4
      %v2331 = vshll.u32 %v2258, 16
      %v2333 = vrot.slane %v2331, 5
      %v2334 = vor.u32 %v2330, %v2333
      %v2335 = vrot.slane %v2334, 4
      %v2337 = vshll.u32 %v2259, 16
      %v2339 = vrot.slane %v2337, 5
      %v2340 = vsel %vm924, %v2335, %v2339
      %v2341 = vshrl.u32 %v2259, 16
      %v2343 = vrot.slane %v2341, 4
      %v2344 = vor.u32 %v2343, %v2339
      %v2345 = vrot.slane %v2344, 4
      %v2347 = vshll.u32 %v2260, 16
      %v2349 = vrot.slane %v2347, 5
      %v2350 = vsel %vm924, %v2345, %v2349
      %v2352 = vshrl.u32 %v2261, 16
      %v2354 = vrot.slane %v2352, 4
      %v2355 = vshll.u32 %v2261, 16
      %v2357 = vrot.slane %v2355, 5
      %v2358 = vor.u32 %v2354, %v2357
      %v2359 = vrot.slane %v2358, 4
      %v2361 = vshll.u32 %v2262, 16
      %v2363 = vrot.slane %v2361, 5
      %v2364 = vsel %vm924, %v2359, %v2363
      %v2365 = vshrl.u32 %v2262, 16
      %v2367 = vrot.slane %v2365, 4
      %v2368 = vor.u32 %v2367, %v2363
      %v2369 = vrot.slane %v2368, 4
      %v2371 = vshll.u32 %v2263, 16
      %v2373 = vrot.slane %v2371, 5
      %v2374 = vsel %vm924, %v2369, %v2373
      %v2376 = vshrl.u32 %v2264, 16
      %v2378 = vrot.slane %v2376, 4
      %v2379 = vshll.u32 %v2264, 16
      %v2381 = vrot.slane %v2379, 5
      %v2382 = vor.u32 %v2378, %v2381
      %v2383 = vrot.slane %v2382, 4
      %v2385 = vshll.u32 %v2265, 16
      %v2387 = vrot.slane %v2385, 5
      %v2388 = vsel %vm924, %v2383, %v2387
      %v2389 = vshrl.u32 %v2265, 16
      %v2391 = vrot.slane %v2389, 4
      %v2392 = vor.u32 %v2391, %v2387
      %v2393 = vrot.slane %v2392, 4
      %v2395 = vshll.u32 %v2266, 16
      %v2397 = vrot.slane %v2395, 5
      %v2398 = vsel %vm924, %v2393, %v2397
      %v2400 = vshrl.u32 %v2267, 16
      %v2402 = vrot.slane %v2400, 4
      %v2403 = vshll.u32 %v2267, 16
      %v2405 = vrot.slane %v2403, 5
      %v2406 = vor.u32 %v2402, %v2405
      %v2407 = vrot.slane %v2406, 4
      %v2409 = vshll.u32 %v2268, 16
      %v2411 = vrot.slane %v2409, 5
      %v2412 = vsel %vm924, %v2407, %v2411
      %v2413 = vshrl.u32 %v2268, 16
      %v2415 = vrot.slane %v2413, 4
      %v2416 = vor.u32 %v2415, %v2411
      %v2417 = vrot.slane %v2416, 4
      %v2419 = vshll.u32 %v2269, 16
      %v2421 = vrot.slane %v2419, 5
      %v2422 = vsel %vm924, %v2417, %v2421
      %v2424 = vshrl.u32 %v2270, 16
      %v2426 = vrot.slane %v2424, 4
      %v2427 = vshll.u32 %v2270, 16
      %v2429 = vrot.slane %v2427, 5
      %v2430 = vor.u32 %v2426, %v2429
      %v2431 = vrot.slane %v2430, 4
      %v2433 = vshll.u32 %v2271, 16
      %v2435 = vrot.slane %v2433, 5
      %v2436 = vsel %vm924, %v2431, %v2435
      %v2437 = vshrl.u32 %v2271, 16
      %v2439 = vrot.slane %v2437, 4
      %v2440 = vor.u32 %v2439, %v2435
      %v2441 = vrot.slane %v2440, 4
      %v2443 = vshll.u32 %v2272, 16
      %v2445 = vrot.slane %v2443, 5
      %v2446 = vsel %vm924, %v2441, %v2445
      %v2448 = vshrl.u32 %v2273, 16
      %v2450 = vrot.slane %v2448, 4
      %v2451 = vshll.u32 %v2273, 16
      %v2453 = vrot.slane %v2451, 5
      %v2454 = vor.u32 %v2450, %v2453
      %v2455 = vrot.slane %v2454, 4
      %v2457 = vshll.u32 %v2274, 16
      %v2459 = vrot.slane %v2457, 5
      %v2460 = vsel %vm924, %v2455, %v2459
      %v2461 = vshrl.u32 %v2274, 16
      %v2463 = vrot.slane %v2461, 4
      %v2464 = vor.u32 %v2463, %v2459
      %v2465 = vrot.slane %v2464, 4
      %v2467 = vshll.u32 %v2275, 16
      %v2469 = vrot.slane %v2467, 5
      %v2470 = vsel %vm924, %v2465, %v2469
      %v2472 = vshrl.u32 %v2276, 16
      %v2474 = vrot.slane %v2472, 4
      %v2475 = vshll.u32 %v2276, 16
      %v2477 = vrot.slane %v2475, 5
      %v2478 = vor.u32 %v2474, %v2477
      %v2479 = vrot.slane %v2478, 4
      %v2481 = vshll.u32 %v2277, 16
      %v2483 = vrot.slane %v2481, 5
      %v2484 = vsel %vm924, %v2479, %v2483
      %v2485 = vshrl.u32 %v2277, 16
      %v2487 = vrot.slane %v2485, 4
      %v2488 = vor.u32 %v2487, %v2483
      %v2489 = vrot.slane %v2488, 4
      %v2491 = vshll.u32 %v2278, 16
      %v2493 = vrot.slane %v2491, 5
      %v2494 = vsel %vm924, %v2489, %v2493
      %v2496 = vshrl.u32 %v2279, 16
      %v2498 = vrot.slane %v2496, 4
      %v2499 = vshll.u32 %v2279, 16
      %v2501 = vrot.slane %v2499, 5
      %v2502 = vor.u32 %v2498, %v2501
      %v2503 = vrot.slane %v2502, 4
      %v2505 = vshll.u32 %v2280, 16
      %v2507 = vrot.slane %v2505, 5
      %v2508 = vsel %vm924, %v2503, %v2507
      %v2509 = vshrl.u32 %v2280, 16
      %v2511 = vrot.slane %v2509, 4
      %v2512 = vor.u32 %v2511, %v2507
      %v2513 = vrot.slane %v2512, 4
      %v2515 = vshll.u32 %v2281, 16
      %v2517 = vrot.slane %v2515, 5
      %v2518 = vsel %vm924, %v2513, %v2517
      %v2520 = vshrl.u32 %v2282, 16
      %v2522 = vrot.slane %v2520, 4
      %v2523 = vshll.u32 %v2282, 16
      %v2525 = vrot.slane %v2523, 5
      %v2526 = vor.u32 %v2522, %v2525
      %v2527 = vrot.slane %v2526, 4
      %v2529 = vshll.u32 %v2283, 16
      %v2531 = vrot.slane %v2529, 5
      %v2532 = vsel %vm924, %v2527, %v2531
      %v2533 = vshrl.u32 %v2283, 16
      %v2535 = vrot.slane %v2533, 4
      %v2536 = vor.u32 %v2535, %v2531
      %v2537 = vrot.slane %v2536, 4
      %v2539 = vshll.u32 %v2284, 16
      %v2541 = vrot.slane %v2539, 5
      %v2542 = vsel %vm924, %v2537, %v2541
      %v2544 = vshrl.u32 %v2285, 16
      %v2546 = vrot.slane %v2544, 4
      %v2547 = vshll.u32 %v2285, 16
      %v2549 = vrot.slane %v2547, 5
      %v2550 = vor.u32 %v2546, %v2549
      %v2551 = vrot.slane %v2550, 4
      %v2553 = vshll.u32 %v2286, 16
      %v2555 = vrot.slane %v2553, 5
      %v2556 = vsel %vm924, %v2551, %v2555
      %v2557 = vshrl.u32 %v2286, 16
      %v2559 = vrot.slane %v2557, 4
      %v2560 = vor.u32 %v2559, %v2555
      %v2561 = vrot.slane %v2560, 4
      %v2563 = vshll.u32 %v2287, 16
      %v2565 = vrot.slane %v2563, 5
      %v2566 = vsel %vm924, %v2561, %v2565
      %v2568 = vshrl.u32 %v2288, 16
      %v2570 = vrot.slane %v2568, 4
      %v2571 = vshll.u32 %v2288, 16
      %v2573 = vrot.slane %v2571, 5
      %v2574 = vor.u32 %v2570, %v2573
      %v2575 = vrot.slane %v2574, 4
      %v2577 = vshll.u32 %v2289, 16
      %v2579 = vrot.slane %v2577, 5
      %v2580 = vsel %vm924, %v2575, %v2579
      %v2581 = vshrl.u32 %v2289, 16
      %v2583 = vrot.slane %v2581, 4
      %v2584 = vor.u32 %v2583, %v2579
      %v2585 = vrot.slane %v2584, 4
      %v2587 = vshll.u32 %v2290, 16
      %v2589 = vrot.slane %v2587, 5
      %v2590 = vsel %vm924, %v2585, %v2589
      %v2592 = vshrl.u32 %v2291, 16
      %v2594 = vrot.slane %v2592, 4
      %v2595 = vshll.u32 %v2291, 16
      %v2597 = vrot.slane %v2595, 5
      %v2598 = vor.u32 %v2594, %v2597
      %v2599 = vrot.slane %v2598, 4
      %v2601 = vshll.u32 %v2292, 16
      %v2603 = vrot.slane %v2601, 5
      %v2604 = vsel %vm924, %v2599, %v2603
      %v2605 = vshrl.u32 %v2292, 16
      %v2607 = vrot.slane %v2605, 4
      %v2608 = vor.u32 %v2607, %v2603
      %v2609 = vrot.slane %v2608, 4
      %v2611 = vshll.u32 %v2293, 16
      %v2613 = vrot.slane %v2611, 5
      %v2614 = vsel %vm924, %v2609, %v2613
      %v2616 = vshrl.u32 %v2294, 16
      %v2618 = vrot.slane %v2616, 4
      %v2619 = vshll.u32 %v2294, 16
      %v2621 = vrot.slane %v2619, 5
      %v2622 = vor.u32 %v2618, %v2621
      %v2623 = vrot.slane %v2622, 4
      %v2625 = vshll.u32 %v2295, 16
      %v2627 = vrot.slane %v2625, 5
      %v2628 = vsel %vm924, %v2623, %v2627
      %v2629 = vshrl.u32 %v2295, 16
      %v2631 = vrot.slane %v2629, 4
      %v2632 = vor.u32 %v2631, %v2627
      %v2633 = vrot.slane %v2632, 4
      %v2635 = vshll.u32 %v2296, 16
      %v2637 = vrot.slane %v2635, 5
      %v2638 = vsel %vm924, %v2633, %v2637
      %v2640 = vshrl.u32 %v2297, 16
      %v2642 = vrot.slane %v2640, 4
      %v2643 = vshll.u32 %v2297, 16
      %v2645 = vrot.slane %v2643, 5
      %v2646 = vor.u32 %v2642, %v2645
      %v2647 = vrot.slane %v2646, 4
      %v2649 = vshll.u32 %v2298, 16
      %v2651 = vrot.slane %v2649, 5
      %v2652 = vsel %vm924, %v2647, %v2651
      %v2653 = vshrl.u32 %v2298, 16
      %v2655 = vrot.slane %v2653, 4
      %v2656 = vor.u32 %v2655, %v2651
      %v2657 = vrot.slane %v2656, 4
      %v2659 = vshll.u32 %v2299, 16
      %v2661 = vrot.slane %v2659, 5
      %v2662 = vsel %vm924, %v2657, %v2661
      %v2664 = vshrl.u32 %v2300, 16
      %v2666 = vrot.slane %v2664, 4
      %v2667 = vshll.u32 %v2300, 16
      %v2669 = vrot.slane %v2667, 5
      %v2670 = vor.u32 %v2666, %v2669
      %v2671 = vrot.slane %v2670, 4
      %v2673 = vshll.u32 %v2301, 16
      %v2675 = vrot.slane %v2673, 5
      %v2676 = vsel %vm924, %v2671, %v2675
      %v2677 = vshrl.u32 %v2301, 16
      %v2679 = vrot.slane %v2677, 4
      %v2680 = vor.u32 %v2679, %v2675
      %v2681 = vrot.slane %v2680, 4
      %v2683 = vshll.u32 %v2302, 16
      %v2685 = vrot.slane %v2683, 5
      %v2686 = vsel %vm924, %v2681, %v2685
      %s2687 = scalar_lea.vmem %s4, 64
      %v2688 = vld [vmem:[%s2687] sm:$0xf]
      %v2689 = vld [vmem:[%s2687 + $0x4] sm:$0xf]
      %v2690 = vld [vmem:[%s2687 + $0x8] sm:$0xf]
      %v2691 = vld [vmem:[%s2687 + $0xc] sm:$0xf]
      %v2692 = vunpack.c.l.b16 %v2316
      %v2693 = vunpack.c.l.b16 %v2326
      %v2694 = vunpack.c.l.b16 %v2340
      %v2695 = vunpack.c.l.b16 %v2350
      %v2696 = vunpack.c.l.b16 %v2364
      %v2697 = vunpack.c.l.b16 %v2374
      %v2698 = vunpack.c.l.b16 %v2388
      %v2699 = vunpack.c.l.b16 %v2398
      %v2700 = vunpack.c.l.b16 %v2412
      %v2701 = vunpack.c.l.b16 %v2422
      %v2702 = vunpack.c.l.b16 %v2436
      %v2703 = vunpack.c.l.b16 %v2446
      %v2704 = vunpack.c.l.b16 %v2460
      %v2705 = vunpack.c.l.b16 %v2470
      %v2706 = vunpack.c.l.b16 %v2484
      %v2707 = vunpack.c.l.b16 %v2494
      %v2708 = vunpack.c.l.b16 %v2508
      %v2709 = vunpack.c.l.b16 %v2518
      %v2710 = vunpack.c.l.b16 %v2532
      %v2711 = vunpack.c.l.b16 %v2542
      %v2712 = vunpack.c.l.b16 %v2556
      %v2713 = vunpack.c.l.b16 %v2566
      %v2714 = vunpack.c.l.b16 %v2580
      %v2715 = vunpack.c.l.b16 %v2590
      %v2716 = vunpack.c.l.b16 %v2604
      %v2717 = vunpack.c.l.b16 %v2614
      %v2718 = vunpack.c.l.b16 %v2628
      %v2719 = vunpack.c.l.b16 %v2638
      %v2720 = vunpack.c.l.b16 %v2652
      %v2721 = vunpack.c.l.b16 %v2662
      %v2722 = vunpack.c.l.b16 %v2676
      %v2723 = vunpack.c.l.b16 %v2686
      %v2724 = vpack.c.b16 %v2693, %v2692
      %v2725 = vpack.c.b16 %v2695, %v2694
      %v2726 = vpack.c.b16 %v2697, %v2696
      %v2727 = vpack.c.b16 %v2699, %v2698
      %v2728 = vpack.c.b16 %v2701, %v2700
      %v2729 = vpack.c.b16 %v2703, %v2702
      %v2730 = vpack.c.b16 %v2705, %v2704
      %v2731 = vpack.c.b16 %v2707, %v2706
      %v2732 = vpack.c.b16 %v2709, %v2708
      %v2733 = vpack.c.b16 %v2711, %v2710
      %v2734 = vpack.c.b16 %v2713, %v2712
      %v2735 = vpack.c.b16 %v2715, %v2714
      %v2736 = vpack.c.b16 %v2717, %v2716
      %v2737 = vpack.c.b16 %v2719, %v2718
      %v2738 = vpack.c.b16 %v2721, %v2720
      %v2739 = vpack.c.b16 %v2723, %v2722
      %v2744 = vunpack.c.l.b16 %v2688
      %v2745 = vunpack.c.l.b16 %v2689
      %v2746 = vunpack.c.l.b16 %v2690
      %v2747 = vunpack.c.l.b16 %v2691
      %v2748 = vpack.c.b16 %v2745, %v2744
      %v2749 = vpack.c.b16 %v2747, %v2746
      %v2753 = vsel %vm704, %v2724, 0
      %v2756 = vsel %vm704, %v2725, 0
      %v2759 = vsel %vm704, %v2726, 0
      %v2762 = vsel %vm704, %v2727, 0
      %v2765 = vsel %vm704, %v2728, 0
      %v2768 = vsel %vm704, %v2729, 0
      %v2771 = vsel %vm704, %v2730, 0
      %v2774 = vsel %vm704, %v2731, 0
      %v2777 = vsel %vm704, %v2732, 0
      %v2780 = vsel %vm704, %v2733, 0
      %v2783 = vsel %vm704, %v2734, 0
      %v2786 = vsel %vm704, %v2735, 0
      %v2789 = vsel %vm704, %v2736, 0
      %v2792 = vsel %vm704, %v2737, 0
      %v2795 = vsel %vm704, %v2738, 0
      %v2798 = vsel %vm704, %v2739, 0
      %2800 = vmatpush.bf16.msra.mxu0 0
      %2801 = vmatpush.bf16.msra.mxu0 0
      %2802 = vmatpush.bf16.msra.mxu0 0
      %2803 = vmatpush.bf16.msra.mxu0 0
      %2804 = vmatpush.bf16.msra.mxu0 0
      %2805 = vmatpush.bf16.msra.mxu0 0
      %2806 = vmatpush.bf16.msra.mxu0 %v2749
      %2807 = vmatpush.bf16.msra.mxu0 %v2748
      %2808 = vmatmul.bf16.gmra.mxu0 %v2753
      %v2809 = vpop.f32.mrf.mxu0
      %v2810 = vadd.f32 0.0, %v2809
      %v2811 = vpop.f32.mrf.mxu0
      %v2812 = vadd.f32 0.0, %v2811
      %2813 = vmatmul.bf16.gmra.mxu0 %v2756
      %v2814 = vpop.f32.mrf.mxu0
      %v2815 = vadd.f32 0.0, %v2814
      %v2816 = vpop.f32.mrf.mxu0
      %v2817 = vadd.f32 0.0, %v2816
      %2818 = vmatmul.bf16.gmra.mxu0 %v2759
      %v2819 = vpop.f32.mrf.mxu0
      %v2820 = vadd.f32 0.0, %v2819
      %v2821 = vpop.f32.mrf.mxu0
      %v2822 = vadd.f32 0.0, %v2821
      %2823 = vmatmul.bf16.gmra.mxu0 %v2762
      %v2824 = vpop.f32.mrf.mxu0
      %v2825 = vadd.f32 0.0, %v2824
      %v2826 = vpop.f32.mrf.mxu0
      %v2827 = vadd.f32 0.0, %v2826
      %2828 = vmatmul.bf16.gmra.mxu0 %v2765
      %v2829 = vpop.f32.mrf.mxu0
      %v2830 = vadd.f32 0.0, %v2829
      %v2831 = vpop.f32.mrf.mxu0
      %v2832 = vadd.f32 0.0, %v2831
      %2833 = vmatmul.bf16.gmra.mxu0 %v2768
      %v2834 = vpop.f32.mrf.mxu0
      %v2835 = vadd.f32 0.0, %v2834
      %v2836 = vpop.f32.mrf.mxu0
      %v2837 = vadd.f32 0.0, %v2836
      %2838 = vmatmul.bf16.gmra.mxu0 %v2771
      %v2839 = vpop.f32.mrf.mxu0
      %v2840 = vadd.f32 0.0, %v2839
      %v2841 = vpop.f32.mrf.mxu0
      %v2842 = vadd.f32 0.0, %v2841
      %2843 = vmatmul.bf16.gmra.mxu0 %v2774
      %v2844 = vpop.f32.mrf.mxu0
      %v2845 = vadd.f32 0.0, %v2844
      %v2846 = vpop.f32.mrf.mxu0
      %v2847 = vadd.f32 0.0, %v2846
      %2848 = vmatmul.bf16.gmra.mxu0 %v2777
      %v2849 = vpop.f32.mrf.mxu0
      %v2850 = vadd.f32 0.0, %v2849
      %v2851 = vpop.f32.mrf.mxu0
      %v2852 = vadd.f32 0.0, %v2851
      %2853 = vmatmul.bf16.gmra.mxu0 %v2780
      %v2854 = vpop.f32.mrf.mxu0
      %v2855 = vadd.f32 0.0, %v2854
      %v2856 = vpop.f32.mrf.mxu0
      %v2857 = vadd.f32 0.0, %v2856
      %2858 = vmatmul.bf16.gmra.mxu0 %v2783
      %v2859 = vpop.f32.mrf.mxu0
      %v2860 = vadd.f32 0.0, %v2859
      %v2861 = vpop.f32.mrf.mxu0
      %v2862 = vadd.f32 0.0, %v2861
      %2863 = vmatmul.bf16.gmra.mxu0 %v2786
      %v2864 = vpop.f32.mrf.mxu0
      %v2865 = vadd.f32 0.0, %v2864
      %v2866 = vpop.f32.mrf.mxu0
      %v2867 = vadd.f32 0.0, %v2866
      %2868 = vmatmul.bf16.gmra.mxu0 %v2789
      %v2869 = vpop.f32.mrf.mxu0
      %v2870 = vadd.f32 0.0, %v2869
      %v2871 = vpop.f32.mrf.mxu0
      %v2872 = vadd.f32 0.0, %v2871
      %2873 = vmatmul.bf16.gmra.mxu0 %v2792
      %v2874 = vpop.f32.mrf.mxu0
      %v2875 = vadd.f32 0.0, %v2874
      %v2876 = vpop.f32.mrf.mxu0
      %v2877 = vadd.f32 0.0, %v2876
      %2878 = vmatmul.bf16.gmra.mxu0 %v2795
      %v2879 = vpop.f32.mrf.mxu0
      %v2880 = vadd.f32 0.0, %v2879
      %v2881 = vpop.f32.mrf.mxu0
      %v2882 = vadd.f32 0.0, %v2881
      %2883 = vmatmul.bf16.gmra.mxu0 %v2798
      %v2884 = vpop.f32.mrf.mxu0
      %v2885 = vadd.f32 0.0, %v2884
      %v2886 = vpop.f32.mrf.mxu0
      %v2887 = vadd.f32 0.0, %v2886
      %2888 = vdwg.mxu0
      %v2889 = vadd.f32 %v2223, %v2810
      %v2890 = vadd.f32 %v2224, %v2812
      %v2891 = vadd.f32 %v2225, %v2815
      %v2892 = vadd.f32 %v2226, %v2817
      %v2893 = vadd.f32 %v2227, %v2820
      %v2894 = vadd.f32 %v2228, %v2822
      %v2895 = vadd.f32 %v2229, %v2825
      %v2896 = vadd.f32 %v2230, %v2827
      %v2897 = vadd.f32 %v2231, %v2830
      %v2898 = vadd.f32 %v2232, %v2832
      %v2899 = vadd.f32 %v2233, %v2835
      %v2900 = vadd.f32 %v2234, %v2837
      %v2901 = vadd.f32 %v2235, %v2840
      %v2902 = vadd.f32 %v2236, %v2842
      %v2903 = vadd.f32 %v2237, %v2845
      %v2904 = vadd.f32 %v2238, %v2847
      %v2905 = vadd.f32 %v2239, %v2850
      %v2906 = vadd.f32 %v2240, %v2852
      %v2907 = vadd.f32 %v2241, %v2855
      %v2908 = vadd.f32 %v2242, %v2857
      %v2909 = vadd.f32 %v2243, %v2860
      %v2910 = vadd.f32 %v2244, %v2862
      %v2911 = vadd.f32 %v2245, %v2865
      %v2912 = vadd.f32 %v2246, %v2867
      %v2913 = vadd.f32 %v2247, %v2870
      %v2914 = vadd.f32 %v2248, %v2872
      %v2915 = vadd.f32 %v2249, %v2875
      %v2916 = vadd.f32 %v2250, %v2877
      %v2917 = vadd.f32 %v2251, %v2880
      %v2918 = vadd.f32 %v2252, %v2882
      %v2919 = vadd.f32 %v2253, %v2885
      %v2920 = vadd.f32 %v2254, %v2887
      %v2921 = vld [vmem:[%s1956] sm:$0xe]
      %v2922 = vld [vmem:[%s1956 + $0xc] sm:$0xe]
      %v2923 = vld [vmem:[%s1956 + $0x18] sm:$0xe]
      %v2924 = vld [vmem:[%s1956 + $0x24] sm:$0xe]
      %v2925 = vld [vmem:[%s1956 + $0x30] sm:$0xe]
      %v2926 = vld [vmem:[%s1956 + $0x3c] sm:$0xe]
      %v2927 = vld [vmem:[%s1956 + $0x48] sm:$0xe]
      %v2928 = vld [vmem:[%s1956 + $0x54] sm:$0xe]
      %v2929 = vld [vmem:[%s1956 + $0x60] sm:$0xe]
      %v2930 = vld [vmem:[%s1956 + $0x6c] sm:$0xe]
      %v2931 = vld [vmem:[%s1956 + $0x78] sm:$0xe]
      %v2932 = vld [vmem:[%s1956 + $0x84] sm:$0xe]
      %v2933 = vld [vmem:[%s1956 + $0x90] sm:$0xe]
      %v2934 = vld [vmem:[%s1956 + $0x9c] sm:$0xe]
      %v2935 = vld [vmem:[%s1956 + $0xa8] sm:$0xe]
      %v2936 = vld [vmem:[%s1956 + $0xb4] sm:$0xe]
      %v2985 = vrot.slane %v2921, 5
      %v2986 = vrot.slane %v2985, 4
      %v2987 = vrot.slane %v2256, 5
      %v2988 = vsel %vm1609, %v2986, %v2987
      %v2989 = vrot.slane %v2987, 4
      %v2990 = vrot.slane %v2257, 5
      %v2991 = vsel %vm1609, %v2989, %v2990
      %v2992 = vrot.slane %v2922, 5
      %v2993 = vrot.slane %v2992, 4
      %v2994 = vrot.slane %v2259, 5
      %v2995 = vsel %vm1609, %v2993, %v2994
      %v2996 = vrot.slane %v2994, 4
      %v2997 = vrot.slane %v2260, 5
      %v2998 = vsel %vm1609, %v2996, %v2997
      %v2999 = vrot.slane %v2923, 5
      %v3000 = vrot.slane %v2999, 4
      %v3001 = vrot.slane %v2262, 5
      %v3002 = vsel %vm1609, %v3000, %v3001
      %v3003 = vrot.slane %v3001, 4
      %v3004 = vrot.slane %v2263, 5
      %v3005 = vsel %vm1609, %v3003, %v3004
      %v3006 = vrot.slane %v2924, 5
      %v3007 = vrot.slane %v3006, 4
      %v3008 = vrot.slane %v2265, 5
      %v3009 = vsel %vm1609, %v3007, %v3008
      %v3010 = vrot.slane %v3008, 4
      %v3011 = vrot.slane %v2266, 5
      %v3012 = vsel %vm1609, %v3010, %v3011
      %v3013 = vrot.slane %v2925, 5
      %v3014 = vrot.slane %v3013, 4
      %v3015 = vrot.slane %v2268, 5
      %v3016 = vsel %vm1609, %v3014, %v3015
      %v3017 = vrot.slane %v3015, 4
      %v3018 = vrot.slane %v2269, 5
      %v3019 = vsel %vm1609, %v3017, %v3018
      %v3020 = vrot.slane %v2926, 5
      %v3021 = vrot.slane %v3020, 4
      %v3022 = vrot.slane %v2271, 5
      %v3023 = vsel %vm1609, %v3021, %v3022
      %v3024 = vrot.slane %v3022, 4
      %v3025 = vrot.slane %v2272, 5
      %v3026 = vsel %vm1609, %v3024, %v3025
      %v3027 = vrot.slane %v2927, 5
      %v3028 = vrot.slane %v3027, 4
      %v3029 = vrot.slane %v2274, 5
      %v3030 = vsel %vm1609, %v3028, %v3029
      %v3031 = vrot.slane %v3029, 4
      %v3032 = vrot.slane %v2275, 5
      %v3033 = vsel %vm1609, %v3031, %v3032
      %v3034 = vrot.slane %v2928, 5
      %v3035 = vrot.slane %v3034, 4
      %v3036 = vrot.slane %v2277, 5
      %v3037 = vsel %vm1609, %v3035, %v3036
      %v3038 = vrot.slane %v3036, 4
      %v3039 = vrot.slane %v2278, 5
      %v3040 = vsel %vm1609, %v3038, %v3039
      %v3041 = vrot.slane %v2929, 5
      %v3042 = vrot.slane %v3041, 4
      %v3043 = vrot.slane %v2280, 5
      %v3044 = vsel %vm1609, %v3042, %v3043
      %v3045 = vrot.slane %v3043, 4
      %v3046 = vrot.slane %v2281, 5
      %v3047 = vsel %vm1609, %v3045, %v3046
      %v3048 = vrot.slane %v2930, 5
      %v3049 = vrot.slane %v3048, 4
      %v3050 = vrot.slane %v2283, 5
      %v3051 = vsel %vm1609, %v3049, %v3050
      %v3052 = vrot.slane %v3050, 4
      %v3053 = vrot.slane %v2284, 5
      %v3054 = vsel %vm1609, %v3052, %v3053
      %v3055 = vrot.slane %v2931, 5
      %v3056 = vrot.slane %v3055, 4
      %v3057 = vrot.slane %v2286, 5
      %v3058 = vsel %vm1609, %v3056, %v3057
      %v3059 = vrot.slane %v3057, 4
      %v3060 = vrot.slane %v2287, 5
      %v3061 = vsel %vm1609, %v3059, %v3060
      %v3062 = vrot.slane %v2932, 5
      %v3063 = vrot.slane %v3062, 4
      %v3064 = vrot.slane %v2289, 5
      %v3065 = vsel %vm1609, %v3063, %v3064
      %v3066 = vrot.slane %v3064, 4
      %v3067 = vrot.slane %v2290, 5
      %v3068 = vsel %vm1609, %v3066, %v3067
      %v3069 = vrot.slane %v2933, 5
      %v3070 = vrot.slane %v3069, 4
      %v3071 = vrot.slane %v2292, 5
      %v3072 = vsel %vm1609, %v3070, %v3071
      %v3073 = vrot.slane %v3071, 4
      %v3074 = vrot.slane %v2293, 5
      %v3075 = vsel %vm1609, %v3073, %v3074
      %v3076 = vrot.slane %v2934, 5
      %v3077 = vrot.slane %v3076, 4
      %v3078 = vrot.slane %v2295, 5
      %v3079 = vsel %vm1609, %v3077, %v3078
      %v3080 = vrot.slane %v3078, 4
      %v3081 = vrot.slane %v2296, 5
      %v3082 = vsel %vm1609, %v3080, %v3081
      %v3083 = vrot.slane %v2935, 5
      %v3084 = vrot.slane %v3083, 4
      %v3085 = vrot.slane %v2298, 5
      %v3086 = vsel %vm1609, %v3084, %v3085
      %v3087 = vrot.slane %v3085, 4
      %v3088 = vrot.slane %v2299, 5
      %v3089 = vsel %vm1609, %v3087, %v3088
      %v3090 = vrot.slane %v2936, 5
      %v3091 = vrot.slane %v3090, 4
      %v3092 = vrot.slane %v2301, 5
      %v3093 = vsel %vm1609, %v3091, %v3092
      %v3094 = vrot.slane %v3092, 4
      %v3095 = vrot.slane %v2302, 5
      %v3096 = vsel %vm1609, %v3094, %v3095
      %s3097 = scalar_lea.vmem %s4, 80
      %v3098 = vld [vmem:[%s3097] sm:$0xf]
      %v3099 = vld [vmem:[%s3097 + $0x4] sm:$0xf]
      %v3100 = vld [vmem:[%s3097 + $0x8] sm:$0xf]
      %v3101 = vld [vmem:[%s3097 + $0xc] sm:$0xf]
      %v3102 = vunpack.c.l.b16 %v2988
      %v3103 = vunpack.c.l.b16 %v2991
      %v3104 = vunpack.c.l.b16 %v2995
      %v3105 = vunpack.c.l.b16 %v2998
      %v3106 = vunpack.c.l.b16 %v3002
      %v3107 = vunpack.c.l.b16 %v3005
      %v3108 = vunpack.c.l.b16 %v3009
      %v3109 = vunpack.c.l.b16 %v3012
      %v3110 = vunpack.c.l.b16 %v3016
      %v3111 = vunpack.c.l.b16 %v3019
      %v3112 = vunpack.c.l.b16 %v3023
      %v3113 = vunpack.c.l.b16 %v3026
      %v3114 = vunpack.c.l.b16 %v3030
      %v3115 = vunpack.c.l.b16 %v3033
      %v3116 = vunpack.c.l.b16 %v3037
      %v3117 = vunpack.c.l.b16 %v3040
      %v3118 = vunpack.c.l.b16 %v3044
      %v3119 = vunpack.c.l.b16 %v3047
      %v3120 = vunpack.c.l.b16 %v3051
      %v3121 = vunpack.c.l.b16 %v3054
      %v3122 = vunpack.c.l.b16 %v3058
      %v3123 = vunpack.c.l.b16 %v3061
      %v3124 = vunpack.c.l.b16 %v3065
      %v3125 = vunpack.c.l.b16 %v3068
      %v3126 = vunpack.c.l.b16 %v3072
      %v3127 = vunpack.c.l.b16 %v3075
      %v3128 = vunpack.c.l.b16 %v3079
      %v3129 = vunpack.c.l.b16 %v3082
      %v3130 = vunpack.c.l.b16 %v3086
      %v3131 = vunpack.c.l.b16 %v3089
      %v3132 = vunpack.c.l.b16 %v3093
      %v3133 = vunpack.c.l.b16 %v3096
      %v3134 = vpack.c.b16 %v3103, %v3102
      %v3135 = vpack.c.b16 %v3105, %v3104
      %v3136 = vpack.c.b16 %v3107, %v3106
      %v3137 = vpack.c.b16 %v3109, %v3108
      %v3138 = vpack.c.b16 %v3111, %v3110
      %v3139 = vpack.c.b16 %v3113, %v3112
      %v3140 = vpack.c.b16 %v3115, %v3114
      %v3141 = vpack.c.b16 %v3117, %v3116
      %v3142 = vpack.c.b16 %v3119, %v3118
      %v3143 = vpack.c.b16 %v3121, %v3120
      %v3144 = vpack.c.b16 %v3123, %v3122
      %v3145 = vpack.c.b16 %v3125, %v3124
      %v3146 = vpack.c.b16 %v3127, %v3126
      %v3147 = vpack.c.b16 %v3129, %v3128
      %v3148 = vpack.c.b16 %v3131, %v3130
      %v3149 = vpack.c.b16 %v3133, %v3132
      %v3154 = vunpack.c.l.b16 %v3098
      %v3155 = vunpack.c.l.b16 %v3099
      %v3156 = vunpack.c.l.b16 %v3100
      %v3157 = vunpack.c.l.b16 %v3101
      %v3158 = vpack.c.b16 %v3155, %v3154
      %v3159 = vpack.c.b16 %v3157, %v3156
      %v3163 = vsel %vm704, %v3134, 0
      %v3166 = vsel %vm704, %v3135, 0
      %v3169 = vsel %vm704, %v3136, 0
      %v3172 = vsel %vm704, %v3137, 0
      %v3175 = vsel %vm704, %v3138, 0
      %v3178 = vsel %vm704, %v3139, 0
      %v3181 = vsel %vm704, %v3140, 0
      %v3184 = vsel %vm704, %v3141, 0
      %v3187 = vsel %vm704, %v3142, 0
      %v3190 = vsel %vm704, %v3143, 0
      %v3193 = vsel %vm704, %v3144, 0
      %v3196 = vsel %vm704, %v3145, 0
      %v3199 = vsel %vm704, %v3146, 0
      %v3202 = vsel %vm704, %v3147, 0
      %v3205 = vsel %vm704, %v3148, 0
      %v3208 = vsel %vm704, %v3149, 0
      %3210 = vmatpush.bf16.msra.mxu0 0
      %3211 = vmatpush.bf16.msra.mxu0 0
      %3212 = vmatpush.bf16.msra.mxu0 0
      %3213 = vmatpush.bf16.msra.mxu0 0
      %3214 = vmatpush.bf16.msra.mxu0 0
      %3215 = vmatpush.bf16.msra.mxu0 0
      %3216 = vmatpush.bf16.msra.mxu0 %v3159
      %3217 = vmatpush.bf16.msra.mxu0 %v3158
      %3218 = vmatmul.bf16.gmra.mxu0 %v3163
      %v3219 = vpop.f32.mrf.mxu0
      %v3220 = vadd.f32 0.0, %v3219
      %v3221 = vpop.f32.mrf.mxu0
      %v3222 = vadd.f32 0.0, %v3221
      %3223 = vmatmul.bf16.gmra.mxu0 %v3166
      %v3224 = vpop.f32.mrf.mxu0
      %v3225 = vadd.f32 0.0, %v3224
      %v3226 = vpop.f32.mrf.mxu0
      %v3227 = vadd.f32 0.0, %v3226
      %3228 = vmatmul.bf16.gmra.mxu0 %v3169
      %v3229 = vpop.f32.mrf.mxu0
      %v3230 = vadd.f32 0.0, %v3229
      %v3231 = vpop.f32.mrf.mxu0
      %v3232 = vadd.f32 0.0, %v3231
      %3233 = vmatmul.bf16.gmra.mxu0 %v3172
      %v3234 = vpop.f32.mrf.mxu0
      %v3235 = vadd.f32 0.0, %v3234
      %v3236 = vpop.f32.mrf.mxu0
      %v3237 = vadd.f32 0.0, %v3236
      %3238 = vmatmul.bf16.gmra.mxu0 %v3175
      %v3239 = vpop.f32.mrf.mxu0
      %v3240 = vadd.f32 0.0, %v3239
      %v3241 = vpop.f32.mrf.mxu0
      %v3242 = vadd.f32 0.0, %v3241
      %3243 = vmatmul.bf16.gmra.mxu0 %v3178
      %v3244 = vpop.f32.mrf.mxu0
      %v3245 = vadd.f32 0.0, %v3244
      %v3246 = vpop.f32.mrf.mxu0
      %v3247 = vadd.f32 0.0, %v3246
      %3248 = vmatmul.bf16.gmra.mxu0 %v3181
      %v3249 = vpop.f32.mrf.mxu0
      %v3250 = vadd.f32 0.0, %v3249
      %v3251 = vpop.f32.mrf.mxu0
      %v3252 = vadd.f32 0.0, %v3251
      %3253 = vmatmul.bf16.gmra.mxu0 %v3184
      %v3254 = vpop.f32.mrf.mxu0
      %v3255 = vadd.f32 0.0, %v3254
      %v3256 = vpop.f32.mrf.mxu0
      %v3257 = vadd.f32 0.0, %v3256
      %3258 = vmatmul.bf16.gmra.mxu0 %v3187
      %v3259 = vpop.f32.mrf.mxu0
      %v3260 = vadd.f32 0.0, %v3259
      %v3261 = vpop.f32.mrf.mxu0
      %v3262 = vadd.f32 0.0, %v3261
      %3263 = vmatmul.bf16.gmra.mxu0 %v3190
      %v3264 = vpop.f32.mrf.mxu0
      %v3265 = vadd.f32 0.0, %v3264
      %v3266 = vpop.f32.mrf.mxu0
      %v3267 = vadd.f32 0.0, %v3266
      %3268 = vmatmul.bf16.gmra.mxu0 %v3193
      %v3269 = vpop.f32.mrf.mxu0
      %v3270 = vadd.f32 0.0, %v3269
      %v3271 = vpop.f32.mrf.mxu0
      %v3272 = vadd.f32 0.0, %v3271
      %3273 = vmatmul.bf16.gmra.mxu0 %v3196
      %v3274 = vpop.f32.mrf.mxu0
      %v3275 = vadd.f32 0.0, %v3274
      %v3276 = vpop.f32.mrf.mxu0
      %v3277 = vadd.f32 0.0, %v3276
      %3278 = vmatmul.bf16.gmra.mxu0 %v3199
      %v3279 = vpop.f32.mrf.mxu0
      %v3280 = vadd.f32 0.0, %v3279
      %v3281 = vpop.f32.mrf.mxu0
      %v3282 = vadd.f32 0.0, %v3281
      %3283 = vmatmul.bf16.gmra.mxu0 %v3202
      %v3284 = vpop.f32.mrf.mxu0
      %v3285 = vadd.f32 0.0, %v3284
      %v3286 = vpop.f32.mrf.mxu0
      %v3287 = vadd.f32 0.0, %v3286
      %3288 = vmatmul.bf16.gmra.mxu0 %v3205
      %v3289 = vpop.f32.mrf.mxu0
      %v3290 = vadd.f32 0.0, %v3289
      %v3291 = vpop.f32.mrf.mxu0
      %v3292 = vadd.f32 0.0, %v3291
      %3293 = vmatmul.bf16.gmra.mxu0 %v3208
      %v3294 = vpop.f32.mrf.mxu0
      %v3295 = vadd.f32 0.0, %v3294
      %v3296 = vpop.f32.mrf.mxu0
      %v3297 = vadd.f32 0.0, %v3296
      %3298 = vdwg.mxu0
      %v3299 = vadd.f32 %v2889, %v3220
      %v3300 = vadd.f32 %v2890, %v3222
      %v3301 = vadd.f32 %v2891, %v3225
      %v3302 = vadd.f32 %v2892, %v3227
      %v3303 = vadd.f32 %v2893, %v3230
      %v3304 = vadd.f32 %v2894, %v3232
      %v3305 = vadd.f32 %v2895, %v3235
      %v3306 = vadd.f32 %v2896, %v3237
      %v3307 = vadd.f32 %v2897, %v3240
      %v3308 = vadd.f32 %v2898, %v3242
      %v3309 = vadd.f32 %v2899, %v3245
      %v3310 = vadd.f32 %v2900, %v3247
      %v3311 = vadd.f32 %v2901, %v3250
      %v3312 = vadd.f32 %v2902, %v3252
      %v3313 = vadd.f32 %v2903, %v3255
      %v3314 = vadd.f32 %v2904, %v3257
      %v3315 = vadd.f32 %v2905, %v3260
      %v3316 = vadd.f32 %v2906, %v3262
      %v3317 = vadd.f32 %v2907, %v3265
      %v3318 = vadd.f32 %v2908, %v3267
      %v3319 = vadd.f32 %v2909, %v3270
      %v3320 = vadd.f32 %v2910, %v3272
      %v3321 = vadd.f32 %v2911, %v3275
      %v3322 = vadd.f32 %v2912, %v3277
      %v3323 = vadd.f32 %v2913, %v3280
      %v3324 = vadd.f32 %v2914, %v3282
      %v3325 = vadd.f32 %v2915, %v3285
      %v3326 = vadd.f32 %v2916, %v3287
      %v3327 = vadd.f32 %v2917, %v3290
      %v3328 = vadd.f32 %v2918, %v3292
      %v3329 = vadd.f32 %v2919, %v3295
      %v3330 = vadd.f32 %v2920, %v3297
      %s3331 = scalar_lea.vmem %s284, 24
      %v3332 = vld [vmem:[%s3331] sm:$0xf]
      %v3333 = vld [vmem:[%s3331 + $0x4] sm:$0xf]
      %v3334 = vld [vmem:[%s3331 + $0xc] sm:$0xf]
      %v3335 = vld [vmem:[%s3331 + $0x10] sm:$0xf]
      %v3336 = vld [vmem:[%s3331 + $0x18] sm:$0xf]
      %v3337 = vld [vmem:[%s3331 + $0x1c] sm:$0xf]
      %v3338 = vld [vmem:[%s3331 + $0x24] sm:$0xf]
      %v3339 = vld [vmem:[%s3331 + $0x28] sm:$0xf]
      %v3340 = vld [vmem:[%s3331 + $0x30] sm:$0xf]
      %v3341 = vld [vmem:[%s3331 + $0x34] sm:$0xf]
      %v3342 = vld [vmem:[%s3331 + $0x3c] sm:$0xf]
      %v3343 = vld [vmem:[%s3331 + $0x40] sm:$0xf]
      %v3344 = vld [vmem:[%s3331 + $0x48] sm:$0xf]
      %v3345 = vld [vmem:[%s3331 + $0x4c] sm:$0xf]
      %v3346 = vld [vmem:[%s3331 + $0x54] sm:$0xf]
      %v3347 = vld [vmem:[%s3331 + $0x58] sm:$0xf]
      %v3348 = vld [vmem:[%s3331 + $0x60] sm:$0xf]
      %v3349 = vld [vmem:[%s3331 + $0x64] sm:$0xf]
      %v3350 = vld [vmem:[%s3331 + $0x6c] sm:$0xf]
      %v3351 = vld [vmem:[%s3331 + $0x70] sm:$0xf]
      %v3352 = vld [vmem:[%s3331 + $0x78] sm:$0xf]
      %v3353 = vld [vmem:[%s3331 + $0x7c] sm:$0xf]
      %v3354 = vld [vmem:[%s3331 + $0x84] sm:$0xf]
      %v3355 = vld [vmem:[%s3331 + $0x88] sm:$0xf]
      %v3356 = vld [vmem:[%s3331 + $0x90] sm:$0xf]
      %v3357 = vld [vmem:[%s3331 + $0x94] sm:$0xf]
      %v3358 = vld [vmem:[%s3331 + $0x9c] sm:$0xf]
      %v3359 = vld [vmem:[%s3331 + $0xa0] sm:$0xf]
      %v3360 = vld [vmem:[%s3331 + $0xa8] sm:$0xf]
      %v3361 = vld [vmem:[%s3331 + $0xac] sm:$0xf]
      %v3362 = vld [vmem:[%s3331 + $0xb4] sm:$0xf]
      %v3363 = vld [vmem:[%s3331 + $0xb8] sm:$0xf]
      %s3364 = scalar_lea.vmem %s4, 96
      %v3365 = vld [vmem:[%s3364] sm:$0xf]
      %v3366 = vld [vmem:[%s3364 + $0x4] sm:$0xf]
      %v3367 = vld [vmem:[%s3364 + $0x8] sm:$0xf]
      %v3368 = vld [vmem:[%s3364 + $0xc] sm:$0xf]
      %v3401 = vunpack.c.l.b16 %v3332
      %v3402 = vunpack.c.l.b16 %v3333
      %v3403 = vunpack.c.l.b16 %v3334
      %v3404 = vunpack.c.l.b16 %v3335
      %v3405 = vunpack.c.l.b16 %v3336
      %v3406 = vunpack.c.l.b16 %v3337
      %v3407 = vunpack.c.l.b16 %v3338
      %v3408 = vunpack.c.l.b16 %v3339
      %v3409 = vunpack.c.l.b16 %v3340
      %v3410 = vunpack.c.l.b16 %v3341
      %v3411 = vunpack.c.l.b16 %v3342
      %v3412 = vunpack.c.l.b16 %v3343
      %v3413 = vunpack.c.l.b16 %v3344
      %v3414 = vunpack.c.l.b16 %v3345
      %v3415 = vunpack.c.l.b16 %v3346
      %v3416 = vunpack.c.l.b16 %v3347
      %v3417 = vunpack.c.l.b16 %v3348
      %v3418 = vunpack.c.l.b16 %v3349
      %v3419 = vunpack.c.l.b16 %v3350
      %v3420 = vunpack.c.l.b16 %v3351
      %v3421 = vunpack.c.l.b16 %v3352
      %v3422 = vunpack.c.l.b16 %v3353
      %v3423 = vunpack.c.l.b16 %v3354
      %v3424 = vunpack.c.l.b16 %v3355
      %v3425 = vunpack.c.l.b16 %v3356
      %v3426 = vunpack.c.l.b16 %v3357
      %v3427 = vunpack.c.l.b16 %v3358
      %v3428 = vunpack.c.l.b16 %v3359
      %v3429 = vunpack.c.l.b16 %v3360
      %v3430 = vunpack.c.l.b16 %v3361
      %v3431 = vunpack.c.l.b16 %v3362
      %v3432 = vunpack.c.l.b16 %v3363
      %v3433 = vpack.c.b16 %v3402, %v3401
      %v3434 = vpack.c.b16 %v3404, %v3403
      %v3435 = vpack.c.b16 %v3406, %v3405
      %v3436 = vpack.c.b16 %v3408, %v3407
      %v3437 = vpack.c.b16 %v3410, %v3409
      %v3438 = vpack.c.b16 %v3412, %v3411
      %v3439 = vpack.c.b16 %v3414, %v3413
      %v3440 = vpack.c.b16 %v3416, %v3415
      %v3441 = vpack.c.b16 %v3418, %v3417
      %v3442 = vpack.c.b16 %v3420, %v3419
      %v3443 = vpack.c.b16 %v3422, %v3421
      %v3444 = vpack.c.b16 %v3424, %v3423
      %v3445 = vpack.c.b16 %v3426, %v3425
      %v3446 = vpack.c.b16 %v3428, %v3427
      %v3447 = vpack.c.b16 %v3430, %v3429
      %v3448 = vpack.c.b16 %v3432, %v3431
      %v3453 = vunpack.c.l.b16 %v3365
      %v3454 = vunpack.c.l.b16 %v3366
      %v3455 = vunpack.c.l.b16 %v3367
      %v3456 = vunpack.c.l.b16 %v3368
      %v3457 = vpack.c.b16 %v3454, %v3453
      %v3458 = vpack.c.b16 %v3456, %v3455
      %v3462 = vsel %vm704, %v3433, 0
      %v3465 = vsel %vm704, %v3434, 0
      %v3468 = vsel %vm704, %v3435, 0
      %v3471 = vsel %vm704, %v3436, 0
      %v3474 = vsel %vm704, %v3437, 0
      %v3477 = vsel %vm704, %v3438, 0
      %v3480 = vsel %vm704, %v3439, 0
      %v3483 = vsel %vm704, %v3440, 0
      %v3486 = vsel %vm704, %v3441, 0
      %v3489 = vsel %vm704, %v3442, 0
      %v3492 = vsel %vm704, %v3443, 0
      %v3495 = vsel %vm704, %v3444, 0
      %v3498 = vsel %vm704, %v3445, 0
      %v3501 = vsel %vm704, %v3446, 0
      %v3504 = vsel %vm704, %v3447, 0
      %v3507 = vsel %vm704, %v3448, 0
      %3509 = vmatpush.bf16.msra.mxu0 0
      %3510 = vmatpush.bf16.msra.mxu0 0
      %3511 = vmatpush.bf16.msra.mxu0 0
      %3512 = vmatpush.bf16.msra.mxu0 0
      %3513 = vmatpush.bf16.msra.mxu0 0
      %3514 = vmatpush.bf16.msra.mxu0 0
      %3515 = vmatpush.bf16.msra.mxu0 %v3458
      %3516 = vmatpush.bf16.msra.mxu0 %v3457
      %3517 = vmatmul.bf16.gmra.mxu0 %v3462
      %v3518 = vpop.f32.mrf.mxu0
      %v3519 = vadd.f32 0.0, %v3518
      %v3520 = vpop.f32.mrf.mxu0
      %v3521 = vadd.f32 0.0, %v3520
      %3522 = vmatmul.bf16.gmra.mxu0 %v3465
      %v3523 = vpop.f32.mrf.mxu0
      %v3524 = vadd.f32 0.0, %v3523
      %v3525 = vpop.f32.mrf.mxu0
      %v3526 = vadd.f32 0.0, %v3525
      %3527 = vmatmul.bf16.gmra.mxu0 %v3468
      %v3528 = vpop.f32.mrf.mxu0
      %v3529 = vadd.f32 0.0, %v3528
      %v3530 = vpop.f32.mrf.mxu0
      %v3531 = vadd.f32 0.0, %v3530
      %3532 = vmatmul.bf16.gmra.mxu0 %v3471
      %v3533 = vpop.f32.mrf.mxu0
      %v3534 = vadd.f32 0.0, %v3533
      %v3535 = vpop.f32.mrf.mxu0
      %v3536 = vadd.f32 0.0, %v3535
      %3537 = vmatmul.bf16.gmra.mxu0 %v3474
      %v3538 = vpop.f32.mrf.mxu0
      %v3539 = vadd.f32 0.0, %v3538
      %v3540 = vpop.f32.mrf.mxu0
      %v3541 = vadd.f32 0.0, %v3540
      %3542 = vmatmul.bf16.gmra.mxu0 %v3477
      %v3543 = vpop.f32.mrf.mxu0
      %v3544 = vadd.f32 0.0, %v3543
      %v3545 = vpop.f32.mrf.mxu0
      %v3546 = vadd.f32 0.0, %v3545
      %3547 = vmatmul.bf16.gmra.mxu0 %v3480
      %v3548 = vpop.f32.mrf.mxu0
      %v3549 = vadd.f32 0.0, %v3548
      %v3550 = vpop.f32.mrf.mxu0
      %v3551 = vadd.f32 0.0, %v3550
      %3552 = vmatmul.bf16.gmra.mxu0 %v3483
      %v3553 = vpop.f32.mrf.mxu0
      %v3554 = vadd.f32 0.0, %v3553
      %v3555 = vpop.f32.mrf.mxu0
      %v3556 = vadd.f32 0.0, %v3555
      %3557 = vmatmul.bf16.gmra.mxu0 %v3486
      %v3558 = vpop.f32.mrf.mxu0
      %v3559 = vadd.f32 0.0, %v3558
      %v3560 = vpop.f32.mrf.mxu0
      %v3561 = vadd.f32 0.0, %v3560
      %3562 = vmatmul.bf16.gmra.mxu0 %v3489
      %v3563 = vpop.f32.mrf.mxu0
      %v3564 = vadd.f32 0.0, %v3563
      %v3565 = vpop.f32.mrf.mxu0
      %v3566 = vadd.f32 0.0, %v3565
      %3567 = vmatmul.bf16.gmra.mxu0 %v3492
      %v3568 = vpop.f32.mrf.mxu0
      %v3569 = vadd.f32 0.0, %v3568
      %v3570 = vpop.f32.mrf.mxu0
      %v3571 = vadd.f32 0.0, %v3570
      %3572 = vmatmul.bf16.gmra.mxu0 %v3495
      %v3573 = vpop.f32.mrf.mxu0
      %v3574 = vadd.f32 0.0, %v3573
      %v3575 = vpop.f32.mrf.mxu0
      %v3576 = vadd.f32 0.0, %v3575
      %3577 = vmatmul.bf16.gmra.mxu0 %v3498
      %v3578 = vpop.f32.mrf.mxu0
      %v3579 = vadd.f32 0.0, %v3578
      %v3580 = vpop.f32.mrf.mxu0
      %v3581 = vadd.f32 0.0, %v3580
      %3582 = vmatmul.bf16.gmra.mxu0 %v3501
      %v3583 = vpop.f32.mrf.mxu0
      %v3584 = vadd.f32 0.0, %v3583
      %v3585 = vpop.f32.mrf.mxu0
      %v3586 = vadd.f32 0.0, %v3585
      %3587 = vmatmul.bf16.gmra.mxu0 %v3504
      %v3588 = vpop.f32.mrf.mxu0
      %v3589 = vadd.f32 0.0, %v3588
      %v3590 = vpop.f32.mrf.mxu0
      %v3591 = vadd.f32 0.0, %v3590
      %3592 = vmatmul.bf16.gmra.mxu0 %v3507
      %v3593 = vpop.f32.mrf.mxu0
      %v3594 = vadd.f32 0.0, %v3593
      %v3595 = vpop.f32.mrf.mxu0
      %v3596 = vadd.f32 0.0, %v3595
      %3597 = vdwg.mxu0
      %v3598 = vadd.f32 %v3299, %v3519
      %v3599 = vadd.f32 %v3300, %v3521
      %v3600 = vadd.f32 %v3301, %v3524
      %v3601 = vadd.f32 %v3302, %v3526
      %v3602 = vadd.f32 %v3303, %v3529
      %v3603 = vadd.f32 %v3304, %v3531
      %v3604 = vadd.f32 %v3305, %v3534
      %v3605 = vadd.f32 %v3306, %v3536
      %v3606 = vadd.f32 %v3307, %v3539
      %v3607 = vadd.f32 %v3308, %v3541
      %v3608 = vadd.f32 %v3309, %v3544
      %v3609 = vadd.f32 %v3310, %v3546
      %v3610 = vadd.f32 %v3311, %v3549
      %v3611 = vadd.f32 %v3312, %v3551
      %v3612 = vadd.f32 %v3313, %v3554
      %v3613 = vadd.f32 %v3314, %v3556
      %v3614 = vadd.f32 %v3315, %v3559
      %v3615 = vadd.f32 %v3316, %v3561
      %v3616 = vadd.f32 %v3317, %v3564
      %v3617 = vadd.f32 %v3318, %v3566
      %v3618 = vadd.f32 %v3319, %v3569
      %v3619 = vadd.f32 %v3320, %v3571
      %v3620 = vadd.f32 %v3321, %v3574
      %v3621 = vadd.f32 %v3322, %v3576
      %v3622 = vadd.f32 %v3323, %v3579
      %v3623 = vadd.f32 %v3324, %v3581
      %v3624 = vadd.f32 %v3325, %v3584
      %v3625 = vadd.f32 %v3326, %v3586
      %v3626 = vadd.f32 %v3327, %v3589
      %v3627 = vadd.f32 %v3328, %v3591
      %v3628 = vadd.f32 %v3329, %v3594
      %v3629 = vadd.f32 %v3330, %v3596
      %v3630 = vld [vmem:[%s3331] sm:$0xf]
      %v3631 = vld [vmem:[%s3331 + $0x4] sm:$0xf]
      %v3632 = vld [vmem:[%s3331 + $0x8] sm:$0x1]
      %v3633 = vld [vmem:[%s3331 + $0xc] sm:$0xf]
      %v3634 = vld [vmem:[%s3331 + $0x10] sm:$0xf]
      %v3635 = vld [vmem:[%s3331 + $0x14] sm:$0x1]
      %v3636 = vld [vmem:[%s3331 + $0x18] sm:$0xf]
      %v3637 = vld [vmem:[%s3331 + $0x1c] sm:$0xf]
      %v3638 = vld [vmem:[%s3331 + $0x20] sm:$0x1]
      %v3639 = vld [vmem:[%s3331 + $0x24] sm:$0xf]
      %v3640 = vld [vmem:[%s3331 + $0x28] sm:$0xf]
      %v3641 = vld [vmem:[%s3331 + $0x2c] sm:$0x1]
      %v3642 = vld [vmem:[%s3331 + $0x30] sm:$0xf]
      %v3643 = vld [vmem:[%s3331 + $0x34] sm:$0xf]
      %v3644 = vld [vmem:[%s3331 + $0x38] sm:$0x1]
      %v3645 = vld [vmem:[%s3331 + $0x3c] sm:$0xf]
      %v3646 = vld [vmem:[%s3331 + $0x40] sm:$0xf]
      %v3647 = vld [vmem:[%s3331 + $0x44] sm:$0x1]
      %v3648 = vld [vmem:[%s3331 + $0x48] sm:$0xf]
      %v3649 = vld [vmem:[%s3331 + $0x4c] sm:$0xf]
      %v3650 = vld [vmem:[%s3331 + $0x50] sm:$0x1]
      %v3651 = vld [vmem:[%s3331 + $0x54] sm:$0xf]
      %v3652 = vld [vmem:[%s3331 + $0x58] sm:$0xf]
      %v3653 = vld [vmem:[%s3331 + $0x5c] sm:$0x1]
      %v3654 = vld [vmem:[%s3331 + $0x60] sm:$0xf]
      %v3655 = vld [vmem:[%s3331 + $0x64] sm:$0xf]
      %v3656 = vld [vmem:[%s3331 + $0x68] sm:$0x1]
      %v3657 = vld [vmem:[%s3331 + $0x6c] sm:$0xf]
      %v3658 = vld [vmem:[%s3331 + $0x70] sm:$0xf]
      %v3659 = vld [vmem:[%s3331 + $0x74] sm:$0x1]
      %v3660 = vld [vmem:[%s3331 + $0x78] sm:$0xf]
      %v3661 = vld [vmem:[%s3331 + $0x7c] sm:$0xf]
      %v3662 = vld [vmem:[%s3331 + $0x80] sm:$0x1]
      %v3663 = vld [vmem:[%s3331 + $0x84] sm:$0xf]
      %v3664 = vld [vmem:[%s3331 + $0x88] sm:$0xf]
      %v3665 = vld [vmem:[%s3331 + $0x8c] sm:$0x1]
      %v3666 = vld [vmem:[%s3331 + $0x90] sm:$0xf]
      %v3667 = vld [vmem:[%s3331 + $0x94] sm:$0xf]
      %v3668 = vld [vmem:[%s3331 + $0x98] sm:$0x1]
      %v3669 = vld [vmem:[%s3331 + $0x9c] sm:$0xf]
      %v3670 = vld [vmem:[%s3331 + $0xa0] sm:$0xf]
      %v3671 = vld [vmem:[%s3331 + $0xa4] sm:$0x1]
      %v3672 = vld [vmem:[%s3331 + $0xa8] sm:$0xf]
      %v3673 = vld [vmem:[%s3331 + $0xac] sm:$0xf]
      %v3674 = vld [vmem:[%s3331 + $0xb0] sm:$0x1]
      %v3675 = vld [vmem:[%s3331 + $0xb4] sm:$0xf]
      %v3676 = vld [vmem:[%s3331 + $0xb8] sm:$0xf]
      %v3677 = vld [vmem:[%s3331 + $0xbc] sm:$0x1]
      %v3679 = vshrl.u32 %v3630, 16
      %v3681 = vrot.slane %v3679, 4
      %v3682 = vshll.u32 %v3630, 16
      %v3684 = vrot.slane %v3682, 5
      %v3685 = vor.u32 %v3681, %v3684
      %v3686 = vrot.slane %v3685, 4
      %v3688 = vshll.u32 %v3631, 16
      %v3690 = vrot.slane %v3688, 5
      %v3691 = vsel %vm924, %v3686, %v3690
      %v3692 = vshrl.u32 %v3631, 16
      %v3694 = vrot.slane %v3692, 4
      %v3695 = vor.u32 %v3694, %v3690
      %v3696 = vrot.slane %v3695, 4
      %v3698 = vshll.u32 %v3632, 16
      %v3700 = vrot.slane %v3698, 5
      %v3701 = vsel %vm924, %v3696, %v3700
      %v3703 = vshrl.u32 %v3633, 16
      %v3705 = vrot.slane %v3703, 4
      %v3706 = vshll.u32 %v3633, 16
      %v3708 = vrot.slane %v3706, 5
      %v3709 = vor.u32 %v3705, %v3708
      %v3710 = vrot.slane %v3709, 4
      %v3712 = vshll.u32 %v3634, 16
      %v3714 = vrot.slane %v3712, 5
      %v3715 = vsel %vm924, %v3710, %v3714
      %v3716 = vshrl.u32 %v3634, 16
      %v3718 = vrot.slane %v3716, 4
      %v3719 = vor.u32 %v3718, %v3714
      %v3720 = vrot.slane %v3719, 4
      %v3722 = vshll.u32 %v3635, 16
      %v3724 = vrot.slane %v3722, 5
      %v3725 = vsel %vm924, %v3720, %v3724
      %v3727 = vshrl.u32 %v3636, 16
      %v3729 = vrot.slane %v3727, 4
      %v3730 = vshll.u32 %v3636, 16
      %v3732 = vrot.slane %v3730, 5
      %v3733 = vor.u32 %v3729, %v3732
      %v3734 = vrot.slane %v3733, 4
      %v3736 = vshll.u32 %v3637, 16
      %v3738 = vrot.slane %v3736, 5
      %v3739 = vsel %vm924, %v3734, %v3738
      %v3740 = vshrl.u32 %v3637, 16
      %v3742 = vrot.slane %v3740, 4
      %v3743 = vor.u32 %v3742, %v3738
      %v3744 = vrot.slane %v3743, 4
      %v3746 = vshll.u32 %v3638, 16
      %v3748 = vrot.slane %v3746, 5
      %v3749 = vsel %vm924, %v3744, %v3748
      %v3751 = vshrl.u32 %v3639, 16
      %v3753 = vrot.slane %v3751, 4
      %v3754 = vshll.u32 %v3639, 16
      %v3756 = vrot.slane %v3754, 5
      %v3757 = vor.u32 %v3753, %v3756
      %v3758 = vrot.slane %v3757, 4
      %v3760 = vshll.u32 %v3640, 16
      %v3762 = vrot.slane %v3760, 5
      %v3763 = vsel %vm924, %v3758, %v3762
      %v3764 = vshrl.u32 %v3640, 16
      %v3766 = vrot.slane %v3764, 4
      %v3767 = vor.u32 %v3766, %v3762
      %v3768 = vrot.slane %v3767, 4
      %v3770 = vshll.u32 %v3641, 16
      %v3772 = vrot.slane %v3770, 5
      %v3773 = vsel %vm924, %v3768, %v3772
      %v3775 = vshrl.u32 %v3642, 16
      %v3777 = vrot.slane %v3775, 4
      %v3778 = vshll.u32 %v3642, 16
      %v3780 = vrot.slane %v3778, 5
      %v3781 = vor.u32 %v3777, %v3780
      %v3782 = vrot.slane %v3781, 4
      %v3784 = vshll.u32 %v3643, 16
      %v3786 = vrot.slane %v3784, 5
      %v3787 = vsel %vm924, %v3782, %v3786
      %v3788 = vshrl.u32 %v3643, 16
      %v3790 = vrot.slane %v3788, 4
      %v3791 = vor.u32 %v3790, %v3786
      %v3792 = vrot.slane %v3791, 4
      %v3794 = vshll.u32 %v3644, 16
      %v3796 = vrot.slane %v3794, 5
      %v3797 = vsel %vm924, %v3792, %v3796
      %v3799 = vshrl.u32 %v3645, 16
      %v3801 = vrot.slane %v3799, 4
      %v3802 = vshll.u32 %v3645, 16
      %v3804 = vrot.slane %v3802, 5
      %v3805 = vor.u32 %v3801, %v3804
      %v3806 = vrot.slane %v3805, 4
      %v3808 = vshll.u32 %v3646, 16
      %v3810 = vrot.slane %v3808, 5
      %v3811 = vsel %vm924, %v3806, %v3810
      %v3812 = vshrl.u32 %v3646, 16
      %v3814 = vrot.slane %v3812, 4
      %v3815 = vor.u32 %v3814, %v3810
      %v3816 = vrot.slane %v3815, 4
      %v3818 = vshll.u32 %v3647, 16
      %v3820 = vrot.slane %v3818, 5
      %v3821 = vsel %vm924, %v3816, %v3820
      %v3823 = vshrl.u32 %v3648, 16
      %v3825 = vrot.slane %v3823, 4
      %v3826 = vshll.u32 %v3648, 16
      %v3828 = vrot.slane %v3826, 5
      %v3829 = vor.u32 %v3825, %v3828
      %v3830 = vrot.slane %v3829, 4
      %v3832 = vshll.u32 %v3649, 16
      %v3834 = vrot.slane %v3832, 5
      %v3835 = vsel %vm924, %v3830, %v3834
      %v3836 = vshrl.u32 %v3649, 16
      %v3838 = vrot.slane %v3836, 4
      %v3839 = vor.u32 %v3838, %v3834
      %v3840 = vrot.slane %v3839, 4
      %v3842 = vshll.u32 %v3650, 16
      %v3844 = vrot.slane %v3842, 5
      %v3845 = vsel %vm924, %v3840, %v3844
      %v3847 = vshrl.u32 %v3651, 16
      %v3849 = vrot.slane %v3847, 4
      %v3850 = vshll.u32 %v3651, 16
      %v3852 = vrot.slane %v3850, 5
      %v3853 = vor.u32 %v3849, %v3852
      %v3854 = vrot.slane %v3853, 4
      %v3856 = vshll.u32 %v3652, 16
      %v3858 = vrot.slane %v3856, 5
      %v3859 = vsel %vm924, %v3854, %v3858
      %v3860 = vshrl.u32 %v3652, 16
      %v3862 = vrot.slane %v3860, 4
      %v3863 = vor.u32 %v3862, %v3858
      %v3864 = vrot.slane %v3863, 4
      %v3866 = vshll.u32 %v3653, 16
      %v3868 = vrot.slane %v3866, 5
      %v3869 = vsel %vm924, %v3864, %v3868
      %v3871 = vshrl.u32 %v3654, 16
      %v3873 = vrot.slane %v3871, 4
      %v3874 = vshll.u32 %v3654, 16
      %v3876 = vrot.slane %v3874, 5
      %v3877 = vor.u32 %v3873, %v3876
      %v3878 = vrot.slane %v3877, 4
      %v3880 = vshll.u32 %v3655, 16
      %v3882 = vrot.slane %v3880, 5
      %v3883 = vsel %vm924, %v3878, %v3882
      %v3884 = vshrl.u32 %v3655, 16
      %v3886 = vrot.slane %v3884, 4
      %v3887 = vor.u32 %v3886, %v3882
      %v3888 = vrot.slane %v3887, 4
      %v3890 = vshll.u32 %v3656, 16
      %v3892 = vrot.slane %v3890, 5
      %v3893 = vsel %vm924, %v3888, %v3892
      %v3895 = vshrl.u32 %v3657, 16
      %v3897 = vrot.slane %v3895, 4
      %v3898 = vshll.u32 %v3657, 16
      %v3900 = vrot.slane %v3898, 5
      %v3901 = vor.u32 %v3897, %v3900
      %v3902 = vrot.slane %v3901, 4
      %v3904 = vshll.u32 %v3658, 16
      %v3906 = vrot.slane %v3904, 5
      %v3907 = vsel %vm924, %v3902, %v3906
      %v3908 = vshrl.u32 %v3658, 16
      %v3910 = vrot.slane %v3908, 4
      %v3911 = vor.u32 %v3910, %v3906
      %v3912 = vrot.slane %v3911, 4
      %v3914 = vshll.u32 %v3659, 16
      %v3916 = vrot.slane %v3914, 5
      %v3917 = vsel %vm924, %v3912, %v3916
      %v3919 = vshrl.u32 %v3660, 16
      %v3921 = vrot.slane %v3919, 4
      %v3922 = vshll.u32 %v3660, 16
      %v3924 = vrot.slane %v3922, 5
      %v3925 = vor.u32 %v3921, %v3924
      %v3926 = vrot.slane %v3925, 4
      %v3928 = vshll.u32 %v3661, 16
      %v3930 = vrot.slane %v3928, 5
      %v3931 = vsel %vm924, %v3926, %v3930
      %v3932 = vshrl.u32 %v3661, 16
      %v3934 = vrot.slane %v3932, 4
      %v3935 = vor.u32 %v3934, %v3930
      %v3936 = vrot.slane %v3935, 4
      %v3938 = vshll.u32 %v3662, 16
      %v3940 = vrot.slane %v3938, 5
      %v3941 = vsel %vm924, %v3936, %v3940
      %v3943 = vshrl.u32 %v3663, 16
      %v3945 = vrot.slane %v3943, 4
      %v3946 = vshll.u32 %v3663, 16
      %v3948 = vrot.slane %v3946, 5
      %v3949 = vor.u32 %v3945, %v3948
      %v3950 = vrot.slane %v3949, 4
      %v3952 = vshll.u32 %v3664, 16
      %v3954 = vrot.slane %v3952, 5
      %v3955 = vsel %vm924, %v3950, %v3954
      %v3956 = vshrl.u32 %v3664, 16
      %v3958 = vrot.slane %v3956, 4
      %v3959 = vor.u32 %v3958, %v3954
      %v3960 = vrot.slane %v3959, 4
      %v3962 = vshll.u32 %v3665, 16
      %v3964 = vrot.slane %v3962, 5
      %v3965 = vsel %vm924, %v3960, %v3964
      %v3967 = vshrl.u32 %v3666, 16
      %v3969 = vrot.slane %v3967, 4
      %v3970 = vshll.u32 %v3666, 16
      %v3972 = vrot.slane %v3970, 5
      %v3973 = vor.u32 %v3969, %v3972
      %v3974 = vrot.slane %v3973, 4
      %v3976 = vshll.u32 %v3667, 16
      %v3978 = vrot.slane %v3976, 5
      %v3979 = vsel %vm924, %v3974, %v3978
      %v3980 = vshrl.u32 %v3667, 16
      %v3982 = vrot.slane %v3980, 4
      %v3983 = vor.u32 %v3982, %v3978
      %v3984 = vrot.slane %v3983, 4
      %v3986 = vshll.u32 %v3668, 16
      %v3988 = vrot.slane %v3986, 5
      %v3989 = vsel %vm924, %v3984, %v3988
      %v3991 = vshrl.u32 %v3669, 16
      %v3993 = vrot.slane %v3991, 4
      %v3994 = vshll.u32 %v3669, 16
      %v3996 = vrot.slane %v3994, 5
      %v3997 = vor.u32 %v3993, %v3996
      %v3998 = vrot.slane %v3997, 4
      %v4000 = vshll.u32 %v3670, 16
      %v4002 = vrot.slane %v4000, 5
      %v4003 = vsel %vm924, %v3998, %v4002
      %v4004 = vshrl.u32 %v3670, 16
      %v4006 = vrot.slane %v4004, 4
      %v4007 = vor.u32 %v4006, %v4002
      %v4008 = vrot.slane %v4007, 4
      %v4010 = vshll.u32 %v3671, 16
      %v4012 = vrot.slane %v4010, 5
      %v4013 = vsel %vm924, %v4008, %v4012
      %v4015 = vshrl.u32 %v3672, 16
      %v4017 = vrot.slane %v4015, 4
      %v4018 = vshll.u32 %v3672, 16
      %v4020 = vrot.slane %v4018, 5
      %v4021 = vor.u32 %v4017, %v4020
      %v4022 = vrot.slane %v4021, 4
      %v4024 = vshll.u32 %v3673, 16
      %v4026 = vrot.slane %v4024, 5
      %v4027 = vsel %vm924, %v4022, %v4026
      %v4028 = vshrl.u32 %v3673, 16
      %v4030 = vrot.slane %v4028, 4
      %v4031 = vor.u32 %v4030, %v4026
      %v4032 = vrot.slane %v4031, 4
      %v4034 = vshll.u32 %v3674, 16
      %v4036 = vrot.slane %v4034, 5
      %v4037 = vsel %vm924, %v4032, %v4036
      %v4039 = vshrl.u32 %v3675, 16
      %v4041 = vrot.slane %v4039, 4
      %v4042 = vshll.u32 %v3675, 16
      %v4044 = vrot.slane %v4042, 5
      %v4045 = vor.u32 %v4041, %v4044
      %v4046 = vrot.slane %v4045, 4
      %v4048 = vshll.u32 %v3676, 16
      %v4050 = vrot.slane %v4048, 5
      %v4051 = vsel %vm924, %v4046, %v4050
      %v4052 = vshrl.u32 %v3676, 16
      %v4054 = vrot.slane %v4052, 4
      %v4055 = vor.u32 %v4054, %v4050
      %v4056 = vrot.slane %v4055, 4
      %v4058 = vshll.u32 %v3677, 16
      %v4060 = vrot.slane %v4058, 5
      %v4061 = vsel %vm924, %v4056, %v4060
      %s4062 = scalar_lea.vmem %s4, 112
      %v4063 = vld [vmem:[%s4062] sm:$0xf]
      %v4064 = vld [vmem:[%s4062 + $0x4] sm:$0xf]
      %v4065 = vld [vmem:[%s4062 + $0x8] sm:$0xf]
      %v4066 = vld [vmem:[%s4062 + $0xc] sm:$0xf]
      %v4067 = vunpack.c.l.b16 %v3691
      %v4068 = vunpack.c.l.b16 %v3701
      %v4069 = vunpack.c.l.b16 %v3715
      %v4070 = vunpack.c.l.b16 %v3725
      %v4071 = vunpack.c.l.b16 %v3739
      %v4072 = vunpack.c.l.b16 %v3749
      %v4073 = vunpack.c.l.b16 %v3763
      %v4074 = vunpack.c.l.b16 %v3773
      %v4075 = vunpack.c.l.b16 %v3787
      %v4076 = vunpack.c.l.b16 %v3797
      %v4077 = vunpack.c.l.b16 %v3811
      %v4078 = vunpack.c.l.b16 %v3821
      %v4079 = vunpack.c.l.b16 %v3835
      %v4080 = vunpack.c.l.b16 %v3845
      %v4081 = vunpack.c.l.b16 %v3859
      %v4082 = vunpack.c.l.b16 %v3869
      %v4083 = vunpack.c.l.b16 %v3883
      %v4084 = vunpack.c.l.b16 %v3893
      %v4085 = vunpack.c.l.b16 %v3907
      %v4086 = vunpack.c.l.b16 %v3917
      %v4087 = vunpack.c.l.b16 %v3931
      %v4088 = vunpack.c.l.b16 %v3941
      %v4089 = vunpack.c.l.b16 %v3955
      %v4090 = vunpack.c.l.b16 %v3965
      %v4091 = vunpack.c.l.b16 %v3979
      %v4092 = vunpack.c.l.b16 %v3989
      %v4093 = vunpack.c.l.b16 %v4003
      %v4094 = vunpack.c.l.b16 %v4013
      %v4095 = vunpack.c.l.b16 %v4027
      %v4096 = vunpack.c.l.b16 %v4037
      %v4097 = vunpack.c.l.b16 %v4051
      %v4098 = vunpack.c.l.b16 %v4061
      %v4099 = vpack.c.b16 %v4068, %v4067
      %v4100 = vpack.c.b16 %v4070, %v4069
      %v4101 = vpack.c.b16 %v4072, %v4071
      %v4102 = vpack.c.b16 %v4074, %v4073
      %v4103 = vpack.c.b16 %v4076, %v4075
      %v4104 = vpack.c.b16 %v4078, %v4077
      %v4105 = vpack.c.b16 %v4080, %v4079
      %v4106 = vpack.c.b16 %v4082, %v4081
      %v4107 = vpack.c.b16 %v4084, %v4083
      %v4108 = vpack.c.b16 %v4086, %v4085
      %v4109 = vpack.c.b16 %v4088, %v4087
      %v4110 = vpack.c.b16 %v4090, %v4089
      %v4111 = vpack.c.b16 %v4092, %v4091
      %v4112 = vpack.c.b16 %v4094, %v4093
      %v4113 = vpack.c.b16 %v4096, %v4095
      %v4114 = vpack.c.b16 %v4098, %v4097
      %v4119 = vunpack.c.l.b16 %v4063
      %v4120 = vunpack.c.l.b16 %v4064
      %v4121 = vunpack.c.l.b16 %v4065
      %v4122 = vunpack.c.l.b16 %v4066
      %v4123 = vpack.c.b16 %v4120, %v4119
      %v4124 = vpack.c.b16 %v4122, %v4121
      %v4128 = vsel %vm704, %v4099, 0
      %v4131 = vsel %vm704, %v4100, 0
      %v4134 = vsel %vm704, %v4101, 0
      %v4137 = vsel %vm704, %v4102, 0
      %v4140 = vsel %vm704, %v4103, 0
      %v4143 = vsel %vm704, %v4104, 0
      %v4146 = vsel %vm704, %v4105, 0
      %v4149 = vsel %vm704, %v4106, 0
      %v4152 = vsel %vm704, %v4107, 0
      %v4155 = vsel %vm704, %v4108, 0
      %v4158 = vsel %vm704, %v4109, 0
      %v4161 = vsel %vm704, %v4110, 0
      %v4164 = vsel %vm704, %v4111, 0
      %v4167 = vsel %vm704, %v4112, 0
      %v4170 = vsel %vm704, %v4113, 0
      %v4173 = vsel %vm704, %v4114, 0
      %4175 = vmatpush.bf16.msra.mxu0 0
      %4176 = vmatpush.bf16.msra.mxu0 0
      %4177 = vmatpush.bf16.msra.mxu0 0
      %4178 = vmatpush.bf16.msra.mxu0 0
      %4179 = vmatpush.bf16.msra.mxu0 0
      %4180 = vmatpush.bf16.msra.mxu0 0
      %4181 = vmatpush.bf16.msra.mxu0 %v4124
      %4182 = vmatpush.bf16.msra.mxu0 %v4123
      %4183 = vmatmul.bf16.gmra.mxu0 %v4128
      %v4184 = vpop.f32.mrf.mxu0
      %v4185 = vadd.f32 0.0, %v4184
      %v4186 = vpop.f32.mrf.mxu0
      %v4187 = vadd.f32 0.0, %v4186
      %4188 = vmatmul.bf16.gmra.mxu0 %v4131
      %v4189 = vpop.f32.mrf.mxu0
      %v4190 = vadd.f32 0.0, %v4189
      %v4191 = vpop.f32.mrf.mxu0
      %v4192 = vadd.f32 0.0, %v4191
      %4193 = vmatmul.bf16.gmra.mxu0 %v4134
      %v4194 = vpop.f32.mrf.mxu0
      %v4195 = vadd.f32 0.0, %v4194
      %v4196 = vpop.f32.mrf.mxu0
      %v4197 = vadd.f32 0.0, %v4196
      %4198 = vmatmul.bf16.gmra.mxu0 %v4137
      %v4199 = vpop.f32.mrf.mxu0
      %v4200 = vadd.f32 0.0, %v4199
      %v4201 = vpop.f32.mrf.mxu0
      %v4202 = vadd.f32 0.0, %v4201
      %4203 = vmatmul.bf16.gmra.mxu0 %v4140
      %v4204 = vpop.f32.mrf.mxu0
      %v4205 = vadd.f32 0.0, %v4204
      %v4206 = vpop.f32.mrf.mxu0
      %v4207 = vadd.f32 0.0, %v4206
      %4208 = vmatmul.bf16.gmra.mxu0 %v4143
      %v4209 = vpop.f32.mrf.mxu0
      %v4210 = vadd.f32 0.0, %v4209
      %v4211 = vpop.f32.mrf.mxu0
      %v4212 = vadd.f32 0.0, %v4211
      %4213 = vmatmul.bf16.gmra.mxu0 %v4146
      %v4214 = vpop.f32.mrf.mxu0
      %v4215 = vadd.f32 0.0, %v4214
      %v4216 = vpop.f32.mrf.mxu0
      %v4217 = vadd.f32 0.0, %v4216
      %4218 = vmatmul.bf16.gmra.mxu0 %v4149
      %v4219 = vpop.f32.mrf.mxu0
      %v4220 = vadd.f32 0.0, %v4219
      %v4221 = vpop.f32.mrf.mxu0
      %v4222 = vadd.f32 0.0, %v4221
      %4223 = vmatmul.bf16.gmra.mxu0 %v4152
      %v4224 = vpop.f32.mrf.mxu0
      %v4225 = vadd.f32 0.0, %v4224
      %v4226 = vpop.f32.mrf.mxu0
      %v4227 = vadd.f32 0.0, %v4226
      %4228 = vmatmul.bf16.gmra.mxu0 %v4155
      %v4229 = vpop.f32.mrf.mxu0
      %v4230 = vadd.f32 0.0, %v4229
      %v4231 = vpop.f32.mrf.mxu0
      %v4232 = vadd.f32 0.0, %v4231
      %4233 = vmatmul.bf16.gmra.mxu0 %v4158
      %v4234 = vpop.f32.mrf.mxu0
      %v4235 = vadd.f32 0.0, %v4234
      %v4236 = vpop.f32.mrf.mxu0
      %v4237 = vadd.f32 0.0, %v4236
      %4238 = vmatmul.bf16.gmra.mxu0 %v4161
      %v4239 = vpop.f32.mrf.mxu0
      %v4240 = vadd.f32 0.0, %v4239
      %v4241 = vpop.f32.mrf.mxu0
      %v4242 = vadd.f32 0.0, %v4241
      %4243 = vmatmul.bf16.gmra.mxu0 %v4164
      %v4244 = vpop.f32.mrf.mxu0
      %v4245 = vadd.f32 0.0, %v4244
      %v4246 = vpop.f32.mrf.mxu0
      %v4247 = vadd.f32 0.0, %v4246
      %4248 = vmatmul.bf16.gmra.mxu0 %v4167
      %v4249 = vpop.f32.mrf.mxu0
      %v4250 = vadd.f32 0.0, %v4249
      %v4251 = vpop.f32.mrf.mxu0
      %v4252 = vadd.f32 0.0, %v4251
      %4253 = vmatmul.bf16.gmra.mxu0 %v4170
      %v4254 = vpop.f32.mrf.mxu0
      %v4255 = vadd.f32 0.0, %v4254
      %v4256 = vpop.f32.mrf.mxu0
      %v4257 = vadd.f32 0.0, %v4256
      %4258 = vmatmul.bf16.gmra.mxu0 %v4173
      %v4259 = vpop.f32.mrf.mxu0
      %v4260 = vadd.f32 0.0, %v4259
      %v4261 = vpop.f32.mrf.mxu0
      %v4262 = vadd.f32 0.0, %v4261
      %4263 = vdwg.mxu0
      %v4264 = vadd.f32 %v3598, %v4185
      %v4265 = vadd.f32 %v3599, %v4187
      %v4266 = vadd.f32 %v3600, %v4190
      %v4267 = vadd.f32 %v3601, %v4192
      %v4268 = vadd.f32 %v3602, %v4195
      %v4269 = vadd.f32 %v3603, %v4197
      %v4270 = vadd.f32 %v3604, %v4200
      %v4271 = vadd.f32 %v3605, %v4202
      %v4272 = vadd.f32 %v3606, %v4205
      %v4273 = vadd.f32 %v3607, %v4207
      %v4274 = vadd.f32 %v3608, %v4210
      %v4275 = vadd.f32 %v3609, %v4212
      %v4276 = vadd.f32 %v3610, %v4215
      %v4277 = vadd.f32 %v3611, %v4217
      %v4278 = vadd.f32 %v3612, %v4220
      %v4279 = vadd.f32 %v3613, %v4222
      %v4280 = vadd.f32 %v3614, %v4225
      %v4281 = vadd.f32 %v3615, %v4227
      %v4282 = vadd.f32 %v3616, %v4230
      %v4283 = vadd.f32 %v3617, %v4232
      %v4284 = vadd.f32 %v3618, %v4235
      %v4285 = vadd.f32 %v3619, %v4237
      %v4286 = vadd.f32 %v3620, %v4240
      %v4287 = vadd.f32 %v3621, %v4242
      %v4288 = vadd.f32 %v3622, %v4245
      %v4289 = vadd.f32 %v3623, %v4247
      %v4290 = vadd.f32 %v3624, %v4250
      %v4291 = vadd.f32 %v3625, %v4252
      %v4292 = vadd.f32 %v3626, %v4255
      %v4293 = vadd.f32 %v3627, %v4257
      %v4294 = vadd.f32 %v3628, %v4260
      %v4295 = vadd.f32 %v3629, %v4262
      %v4296 = vld [vmem:[%s3331] sm:$0xe]
      %v4297 = vld [vmem:[%s3331 + $0xc] sm:$0xe]
      %v4298 = vld [vmem:[%s3331 + $0x18] sm:$0xe]
      %v4299 = vld [vmem:[%s3331 + $0x24] sm:$0xe]
      %v4300 = vld [vmem:[%s3331 + $0x30] sm:$0xe]
      %v4301 = vld [vmem:[%s3331 + $0x3c] sm:$0xe]
      %v4302 = vld [vmem:[%s3331 + $0x48] sm:$0xe]
      %v4303 = vld [vmem:[%s3331 + $0x54] sm:$0xe]
      %v4304 = vld [vmem:[%s3331 + $0x60] sm:$0xe]
      %v4305 = vld [vmem:[%s3331 + $0x6c] sm:$0xe]
      %v4306 = vld [vmem:[%s3331 + $0x78] sm:$0xe]
      %v4307 = vld [vmem:[%s3331 + $0x84] sm:$0xe]
      %v4308 = vld [vmem:[%s3331 + $0x90] sm:$0xe]
      %v4309 = vld [vmem:[%s3331 + $0x9c] sm:$0xe]
      %v4310 = vld [vmem:[%s3331 + $0xa8] sm:$0xe]
      %v4311 = vld [vmem:[%s3331 + $0xb4] sm:$0xe]
      %v4360 = vrot.slane %v4296, 5
      %v4361 = vrot.slane %v4360, 4
      %v4362 = vrot.slane %v3631, 5
      %v4363 = vsel %vm1609, %v4361, %v4362
      %v4364 = vrot.slane %v4362, 4
      %v4365 = vrot.slane %v3632, 5
      %v4366 = vsel %vm1609, %v4364, %v4365
      %v4367 = vrot.slane %v4297, 5
      %v4368 = vrot.slane %v4367, 4
      %v4369 = vrot.slane %v3634, 5
      %v4370 = vsel %vm1609, %v4368, %v4369
      %v4371 = vrot.slane %v4369, 4
      %v4372 = vrot.slane %v3635, 5
      %v4373 = vsel %vm1609, %v4371, %v4372
      %v4374 = vrot.slane %v4298, 5
      %v4375 = vrot.slane %v4374, 4
      %v4376 = vrot.slane %v3637, 5
      %v4377 = vsel %vm1609, %v4375, %v4376
      %v4378 = vrot.slane %v4376, 4
      %v4379 = vrot.slane %v3638, 5
      %v4380 = vsel %vm1609, %v4378, %v4379
      %v4381 = vrot.slane %v4299, 5
      %v4382 = vrot.slane %v4381, 4
      %v4383 = vrot.slane %v3640, 5
      %v4384 = vsel %vm1609, %v4382, %v4383
      %v4385 = vrot.slane %v4383, 4
      %v4386 = vrot.slane %v3641, 5
      %v4387 = vsel %vm1609, %v4385, %v4386
      %v4388 = vrot.slane %v4300, 5
      %v4389 = vrot.slane %v4388, 4
      %v4390 = vrot.slane %v3643, 5
      %v4391 = vsel %vm1609, %v4389, %v4390
      %v4392 = vrot.slane %v4390, 4
      %v4393 = vrot.slane %v3644, 5
      %v4394 = vsel %vm1609, %v4392, %v4393
      %v4395 = vrot.slane %v4301, 5
      %v4396 = vrot.slane %v4395, 4
      %v4397 = vrot.slane %v3646, 5
      %v4398 = vsel %vm1609, %v4396, %v4397
      %v4399 = vrot.slane %v4397, 4
      %v4400 = vrot.slane %v3647, 5
      %v4401 = vsel %vm1609, %v4399, %v4400
      %v4402 = vrot.slane %v4302, 5
      %v4403 = vrot.slane %v4402, 4
      %v4404 = vrot.slane %v3649, 5
      %v4405 = vsel %vm1609, %v4403, %v4404
      %v4406 = vrot.slane %v4404, 4
      %v4407 = vrot.slane %v3650, 5
      %v4408 = vsel %vm1609, %v4406, %v4407
      %v4409 = vrot.slane %v4303, 5
      %v4410 = vrot.slane %v4409, 4
      %v4411 = vrot.slane %v3652, 5
      %v4412 = vsel %vm1609, %v4410, %v4411
      %v4413 = vrot.slane %v4411, 4
      %v4414 = vrot.slane %v3653, 5
      %v4415 = vsel %vm1609, %v4413, %v4414
      %v4416 = vrot.slane %v4304, 5
      %v4417 = vrot.slane %v4416, 4
      %v4418 = vrot.slane %v3655, 5
      %v4419 = vsel %vm1609, %v4417, %v4418
      %v4420 = vrot.slane %v4418, 4
      %v4421 = vrot.slane %v3656, 5
      %v4422 = vsel %vm1609, %v4420, %v4421
      %v4423 = vrot.slane %v4305, 5
      %v4424 = vrot.slane %v4423, 4
      %v4425 = vrot.slane %v3658, 5
      %v4426 = vsel %vm1609, %v4424, %v4425
      %v4427 = vrot.slane %v4425, 4
      %v4428 = vrot.slane %v3659, 5
      %v4429 = vsel %vm1609, %v4427, %v4428
      %v4430 = vrot.slane %v4306, 5
      %v4431 = vrot.slane %v4430, 4
      %v4432 = vrot.slane %v3661, 5
      %v4433 = vsel %vm1609, %v4431, %v4432
      %v4434 = vrot.slane %v4432, 4
      %v4435 = vrot.slane %v3662, 5
      %v4436 = vsel %vm1609, %v4434, %v4435
      %v4437 = vrot.slane %v4307, 5
      %v4438 = vrot.slane %v4437, 4
      %v4439 = vrot.slane %v3664, 5
      %v4440 = vsel %vm1609, %v4438, %v4439
      %v4441 = vrot.slane %v4439, 4
      %v4442 = vrot.slane %v3665, 5
      %v4443 = vsel %vm1609, %v4441, %v4442
      %v4444 = vrot.slane %v4308, 5
      %v4445 = vrot.slane %v4444, 4
      %v4446 = vrot.slane %v3667, 5
      %v4447 = vsel %vm1609, %v4445, %v4446
      %v4448 = vrot.slane %v4446, 4
      %v4449 = vrot.slane %v3668, 5
      %v4450 = vsel %vm1609, %v4448, %v4449
      %v4451 = vrot.slane %v4309, 5
      %v4452 = vrot.slane %v4451, 4
      %v4453 = vrot.slane %v3670, 5
      %v4454 = vsel %vm1609, %v4452, %v4453
      %v4455 = vrot.slane %v4453, 4
      %v4456 = vrot.slane %v3671, 5
      %v4457 = vsel %vm1609, %v4455, %v4456
      %v4458 = vrot.slane %v4310, 5
      %v4459 = vrot.slane %v4458, 4
      %v4460 = vrot.slane %v3673, 5
      %v4461 = vsel %vm1609, %v4459, %v4460
      %v4462 = vrot.slane %v4460, 4
      %v4463 = vrot.slane %v3674, 5
      %v4464 = vsel %vm1609, %v4462, %v4463
      %v4465 = vrot.slane %v4311, 5
      %v4466 = vrot.slane %v4465, 4
      %v4467 = vrot.slane %v3676, 5
      %v4468 = vsel %vm1609, %v4466, %v4467
      %v4469 = vrot.slane %v4467, 4
      %v4470 = vrot.slane %v3677, 5
      %v4471 = vsel %vm1609, %v4469, %v4470
      %s4472 = scalar_lea.vmem %s4, 128
      %v4473 = vld [vmem:[%s4472] sm:$0xf]
      %v4474 = vld [vmem:[%s4472 + $0x4] sm:$0xf]
      %v4475 = vld [vmem:[%s4472 + $0x8] sm:$0xf]
      %v4476 = vld [vmem:[%s4472 + $0xc] sm:$0xf]
      %v4477 = vunpack.c.l.b16 %v4363
      %v4478 = vunpack.c.l.b16 %v4366
      %v4479 = vunpack.c.l.b16 %v4370
      %v4480 = vunpack.c.l.b16 %v4373
      %v4481 = vunpack.c.l.b16 %v4377
      %v4482 = vunpack.c.l.b16 %v4380
      %v4483 = vunpack.c.l.b16 %v4384
      %v4484 = vunpack.c.l.b16 %v4387
      %v4485 = vunpack.c.l.b16 %v4391
      %v4486 = vunpack.c.l.b16 %v4394
      %v4487 = vunpack.c.l.b16 %v4398
      %v4488 = vunpack.c.l.b16 %v4401
      %v4489 = vunpack.c.l.b16 %v4405
      %v4490 = vunpack.c.l.b16 %v4408
      %v4491 = vunpack.c.l.b16 %v4412
      %v4492 = vunpack.c.l.b16 %v4415
      %v4493 = vunpack.c.l.b16 %v4419
      %v4494 = vunpack.c.l.b16 %v4422
      %v4495 = vunpack.c.l.b16 %v4426
      %v4496 = vunpack.c.l.b16 %v4429
      %v4497 = vunpack.c.l.b16 %v4433
      %v4498 = vunpack.c.l.b16 %v4436
      %v4499 = vunpack.c.l.b16 %v4440
      %v4500 = vunpack.c.l.b16 %v4443
      %v4501 = vunpack.c.l.b16 %v4447
      %v4502 = vunpack.c.l.b16 %v4450
      %v4503 = vunpack.c.l.b16 %v4454
      %v4504 = vunpack.c.l.b16 %v4457
      %v4505 = vunpack.c.l.b16 %v4461
      %v4506 = vunpack.c.l.b16 %v4464
      %v4507 = vunpack.c.l.b16 %v4468
      %v4508 = vunpack.c.l.b16 %v4471
      %v4509 = vpack.c.b16 %v4478, %v4477
      %v4510 = vpack.c.b16 %v4480, %v4479
      %v4511 = vpack.c.b16 %v4482, %v4481
      %v4512 = vpack.c.b16 %v4484, %v4483
      %v4513 = vpack.c.b16 %v4486, %v4485
      %v4514 = vpack.c.b16 %v4488, %v4487
      %v4515 = vpack.c.b16 %v4490, %v4489
      %v4516 = vpack.c.b16 %v4492, %v4491
      %v4517 = vpack.c.b16 %v4494, %v4493
      %v4518 = vpack.c.b16 %v4496, %v4495
      %v4519 = vpack.c.b16 %v4498, %v4497
      %v4520 = vpack.c.b16 %v4500, %v4499
      %v4521 = vpack.c.b16 %v4502, %v4501
      %v4522 = vpack.c.b16 %v4504, %v4503
      %v4523 = vpack.c.b16 %v4506, %v4505
      %v4524 = vpack.c.b16 %v4508, %v4507
      %v4529 = vunpack.c.l.b16 %v4473
      %v4530 = vunpack.c.l.b16 %v4474
      %v4531 = vunpack.c.l.b16 %v4475
      %v4532 = vunpack.c.l.b16 %v4476
      %v4533 = vpack.c.b16 %v4530, %v4529
      %v4534 = vpack.c.b16 %v4532, %v4531
      %v4538 = vsel %vm704, %v4509, 0
      %v4541 = vsel %vm704, %v4510, 0
      %v4544 = vsel %vm704, %v4511, 0
      %v4547 = vsel %vm704, %v4512, 0
      %v4550 = vsel %vm704, %v4513, 0
      %v4553 = vsel %vm704, %v4514, 0
      %v4556 = vsel %vm704, %v4515, 0
      %v4559 = vsel %vm704, %v4516, 0
      %v4562 = vsel %vm704, %v4517, 0
      %v4565 = vsel %vm704, %v4518, 0
      %v4568 = vsel %vm704, %v4519, 0
      %v4571 = vsel %vm704, %v4520, 0
      %v4574 = vsel %vm704, %v4521, 0
      %v4577 = vsel %vm704, %v4522, 0
      %v4580 = vsel %vm704, %v4523, 0
      %v4583 = vsel %vm704, %v4524, 0
      %4585 = vmatpush.bf16.msra.mxu0 0
      %4586 = vmatpush.bf16.msra.mxu0 0
      %4587 = vmatpush.bf16.msra.mxu0 0
      %4588 = vmatpush.bf16.msra.mxu0 0
      %4589 = vmatpush.bf16.msra.mxu0 0
      %4590 = vmatpush.bf16.msra.mxu0 0
      %4591 = vmatpush.bf16.msra.mxu0 %v4534
      %4592 = vmatpush.bf16.msra.mxu0 %v4533
      %4593 = vmatmul.bf16.gmra.mxu0 %v4538
      %v4594 = vpop.f32.mrf.mxu0
      %v4595 = vadd.f32 0.0, %v4594
      %v4596 = vpop.f32.mrf.mxu0
      %v4597 = vadd.f32 0.0, %v4596
      %4598 = vmatmul.bf16.gmra.mxu0 %v4541
      %v4599 = vpop.f32.mrf.mxu0
      %v4600 = vadd.f32 0.0, %v4599
      %v4601 = vpop.f32.mrf.mxu0
      %v4602 = vadd.f32 0.0, %v4601
      %4603 = vmatmul.bf16.gmra.mxu0 %v4544
      %v4604 = vpop.f32.mrf.mxu0
      %v4605 = vadd.f32 0.0, %v4604
      %v4606 = vpop.f32.mrf.mxu0
      %v4607 = vadd.f32 0.0, %v4606
      %4608 = vmatmul.bf16.gmra.mxu0 %v4547
      %v4609 = vpop.f32.mrf.mxu0
      %v4610 = vadd.f32 0.0, %v4609
      %v4611 = vpop.f32.mrf.mxu0
      %v4612 = vadd.f32 0.0, %v4611
      %4613 = vmatmul.bf16.gmra.mxu0 %v4550
      %v4614 = vpop.f32.mrf.mxu0
      %v4615 = vadd.f32 0.0, %v4614
      %v4616 = vpop.f32.mrf.mxu0
      %v4617 = vadd.f32 0.0, %v4616
      %4618 = vmatmul.bf16.gmra.mxu0 %v4553
      %v4619 = vpop.f32.mrf.mxu0
      %v4620 = vadd.f32 0.0, %v4619
      %v4621 = vpop.f32.mrf.mxu0
      %v4622 = vadd.f32 0.0, %v4621
      %4623 = vmatmul.bf16.gmra.mxu0 %v4556
      %v4624 = vpop.f32.mrf.mxu0
      %v4625 = vadd.f32 0.0, %v4624
      %v4626 = vpop.f32.mrf.mxu0
      %v4627 = vadd.f32 0.0, %v4626
      %4628 = vmatmul.bf16.gmra.mxu0 %v4559
      %v4629 = vpop.f32.mrf.mxu0
      %v4630 = vadd.f32 0.0, %v4629
      %v4631 = vpop.f32.mrf.mxu0
      %v4632 = vadd.f32 0.0, %v4631
      %4633 = vmatmul.bf16.gmra.mxu0 %v4562
      %v4634 = vpop.f32.mrf.mxu0
      %v4635 = vadd.f32 0.0, %v4634
      %v4636 = vpop.f32.mrf.mxu0
      %v4637 = vadd.f32 0.0, %v4636
      %4638 = vmatmul.bf16.gmra.mxu0 %v4565
      %v4639 = vpop.f32.mrf.mxu0
      %v4640 = vadd.f32 0.0, %v4639
      %v4641 = vpop.f32.mrf.mxu0
      %v4642 = vadd.f32 0.0, %v4641
      %4643 = vmatmul.bf16.gmra.mxu0 %v4568
      %v4644 = vpop.f32.mrf.mxu0
      %v4645 = vadd.f32 0.0, %v4644
      %v4646 = vpop.f32.mrf.mxu0
      %v4647 = vadd.f32 0.0, %v4646
      %4648 = vmatmul.bf16.gmra.mxu0 %v4571
      %v4649 = vpop.f32.mrf.mxu0
      %v4650 = vadd.f32 0.0, %v4649
      %v4651 = vpop.f32.mrf.mxu0
      %v4652 = vadd.f32 0.0, %v4651
      %4653 = vmatmul.bf16.gmra.mxu0 %v4574
      %v4654 = vpop.f32.mrf.mxu0
      %v4655 = vadd.f32 0.0, %v4654
      %v4656 = vpop.f32.mrf.mxu0
      %v4657 = vadd.f32 0.0, %v4656
      %4658 = vmatmul.bf16.gmra.mxu0 %v4577
      %v4659 = vpop.f32.mrf.mxu0
      %v4660 = vadd.f32 0.0, %v4659
      %v4661 = vpop.f32.mrf.mxu0
      %v4662 = vadd.f32 0.0, %v4661
      %4663 = vmatmul.bf16.gmra.mxu0 %v4580
      %v4664 = vpop.f32.mrf.mxu0
      %v4665 = vadd.f32 0.0, %v4664
      %v4666 = vpop.f32.mrf.mxu0
      %v4667 = vadd.f32 0.0, %v4666
      %4668 = vmatmul.bf16.gmra.mxu0 %v4583
      %v4669 = vpop.f32.mrf.mxu0
      %v4670 = vadd.f32 0.0, %v4669
      %v4671 = vpop.f32.mrf.mxu0
      %v4672 = vadd.f32 0.0, %v4671
      %4673 = vdwg.mxu0
      %v4674 = vadd.f32 %v4264, %v4595
      %v4675 = vadd.f32 %v4265, %v4597
      %v4676 = vadd.f32 %v4266, %v4600
      %v4677 = vadd.f32 %v4267, %v4602
      %v4678 = vadd.f32 %v4268, %v4605
      %v4679 = vadd.f32 %v4269, %v4607
      %v4680 = vadd.f32 %v4270, %v4610
      %v4681 = vadd.f32 %v4271, %v4612
      %v4682 = vadd.f32 %v4272, %v4615
      %v4683 = vadd.f32 %v4273, %v4617
      %v4684 = vadd.f32 %v4274, %v4620
      %v4685 = vadd.f32 %v4275, %v4622
      %v4686 = vadd.f32 %v4276, %v4625
      %v4687 = vadd.f32 %v4277, %v4627
      %v4688 = vadd.f32 %v4278, %v4630
      %v4689 = vadd.f32 %v4279, %v4632
      %v4690 = vadd.f32 %v4280, %v4635
      %v4691 = vadd.f32 %v4281, %v4637
      %v4692 = vadd.f32 %v4282, %v4640
      %v4693 = vadd.f32 %v4283, %v4642
      %v4694 = vadd.f32 %v4284, %v4645
      %v4695 = vadd.f32 %v4285, %v4647
      %v4696 = vadd.f32 %v4286, %v4650
      %v4697 = vadd.f32 %v4287, %v4652
      %v4698 = vadd.f32 %v4288, %v4655
      %v4699 = vadd.f32 %v4289, %v4657
      %v4700 = vadd.f32 %v4290, %v4660
      %v4701 = vadd.f32 %v4291, %v4662
      %v4702 = vadd.f32 %v4292, %v4665
      %v4703 = vadd.f32 %v4293, %v4667
      %v4704 = vadd.f32 %v4294, %v4670
      %v4705 = vadd.f32 %v4295, %v4672
      %v4706 = vxor.u32 %v4674, 2147483648
      %v4707 = vxor.u32 %v4675, 2147483648
      %v4708 = vxor.u32 %v4676, 2147483648
      %v4709 = vxor.u32 %v4677, 2147483648
      %v4710 = vxor.u32 %v4678, 2147483648
      %v4711 = vxor.u32 %v4679, 2147483648
      %v4712 = vxor.u32 %v4680, 2147483648
      %v4713 = vxor.u32 %v4681, 2147483648
      %v4714 = vxor.u32 %v4682, 2147483648
      %v4715 = vxor.u32 %v4683, 2147483648
      %v4716 = vxor.u32 %v4684, 2147483648
      %v4717 = vxor.u32 %v4685, 2147483648
      %v4718 = vxor.u32 %v4686, 2147483648
      %v4719 = vxor.u32 %v4687, 2147483648
      %v4720 = vxor.u32 %v4688, 2147483648
      %v4721 = vxor.u32 %v4689, 2147483648
      %v4722 = vxor.u32 %v4690, 2147483648
      %v4723 = vxor.u32 %v4691, 2147483648
      %v4724 = vxor.u32 %v4692, 2147483648
      %v4725 = vxor.u32 %v4693, 2147483648
      %v4726 = vxor.u32 %v4694, 2147483648
      %v4727 = vxor.u32 %v4695, 2147483648
      %v4728 = vxor.u32 %v4696, 2147483648
      %v4729 = vxor.u32 %v4697, 2147483648
      %v4730 = vxor.u32 %v4698, 2147483648
      %v4731 = vxor.u32 %v4699, 2147483648
      %v4732 = vxor.u32 %v4700, 2147483648
      %v4733 = vxor.u32 %v4701, 2147483648
      %v4734 = vxor.u32 %v4702, 2147483648
      %v4735 = vxor.u32 %v4703, 2147483648
      %v4736 = vxor.u32 %v4704, 2147483648
      %v4737 = vxor.u32 %v4705, 2147483648
      %v4738 = vmul.f32 %v4706, 1.442695
      %v4739 = vpow.pop %v4738
      %v4740 = vmul.f32 %v4707, 1.442695
      %v4741 = vpow.pop %v4740
      %v4742 = vmul.f32 %v4708, 1.442695
      %v4743 = vpow.pop %v4742
      %v4744 = vmul.f32 %v4709, 1.442695
      %v4745 = vpow.pop %v4744
      %v4746 = vmul.f32 %v4710, 1.442695
      %v4747 = vpow.pop %v4746
      %v4748 = vmul.f32 %v4711, 1.442695
      %v4749 = vpow.pop %v4748
      %v4750 = vmul.f32 %v4712, 1.442695
      %v4751 = vpow.pop %v4750
      %v4752 = vmul.f32 %v4713, 1.442695
      %v4753 = vpow.pop %v4752
      %v4754 = vmul.f32 %v4714, 1.442695
      %v4755 = vpow.pop %v4754
      %v4756 = vmul.f32 %v4715, 1.442695
      %v4757 = vpow.pop %v4756
      %v4758 = vmul.f32 %v4716, 1.442695
      %v4759 = vpow.pop %v4758
      %v4760 = vmul.f32 %v4717, 1.442695
      %v4761 = vpow.pop %v4760
      %v4762 = vmul.f32 %v4718, 1.442695
      %v4763 = vpow.pop %v4762
      %v4764 = vmul.f32 %v4719, 1.442695
      %v4765 = vpow.pop %v4764
      %v4766 = vmul.f32 %v4720, 1.442695
      %v4767 = vpow.pop %v4766
      %v4768 = vmul.f32 %v4721, 1.442695
      %v4769 = vpow.pop %v4768
      %v4770 = vmul.f32 %v4722, 1.442695
      %v4771 = vpow.pop %v4770
      %v4772 = vmul.f32 %v4723, 1.442695
      %v4773 = vpow.pop %v4772
      %v4774 = vmul.f32 %v4724, 1.442695
      %v4775 = vpow.pop %v4774
      %v4776 = vmul.f32 %v4725, 1.442695
      %v4777 = vpow.pop %v4776
      %v4778 = vmul.f32 %v4726, 1.442695
      %v4779 = vpow.pop %v4778
      %v4780 = vmul.f32 %v4727, 1.442695
      %v4781 = vpow.pop %v4780
      %v4782 = vmul.f32 %v4728, 1.442695
      %v4783 = vpow.pop %v4782
      %v4784 = vmul.f32 %v4729, 1.442695
      %v4785 = vpow.pop %v4784
      %v4786 = vmul.f32 %v4730, 1.442695
      %v4787 = vpow.pop %v4786
      %v4788 = vmul.f32 %v4731, 1.442695
      %v4789 = vpow.pop %v4788
      %v4790 = vmul.f32 %v4732, 1.442695
      %v4791 = vpow.pop %v4790
      %v4792 = vmul.f32 %v4733, 1.442695
      %v4793 = vpow.pop %v4792
      %v4794 = vmul.f32 %v4734, 1.442695
      %v4795 = vpow.pop %v4794
      %v4796 = vmul.f32 %v4735, 1.442695
      %v4797 = vpow.pop %v4796
      %v4798 = vmul.f32 %v4736, 1.442695
      %v4799 = vpow.pop %v4798
      %v4800 = vmul.f32 %v4737, 1.442695
      %v4801 = vpow.pop %v4800
      %v4802 = vadd.f32 %v4739, 1.0
      %v4803 = vadd.f32 %v4741, 1.0
      %v4804 = vadd.f32 %v4743, 1.0
      %v4805 = vadd.f32 %v4745, 1.0
      %v4806 = vadd.f32 %v4747, 1.0
      %v4807 = vadd.f32 %v4749, 1.0
      %v4808 = vadd.f32 %v4751, 1.0
      %v4809 = vadd.f32 %v4753, 1.0
      %v4810 = vadd.f32 %v4755, 1.0
      %v4811 = vadd.f32 %v4757, 1.0
      %v4812 = vadd.f32 %v4759, 1.0
      %v4813 = vadd.f32 %v4761, 1.0
      %v4814 = vadd.f32 %v4763, 1.0
      %v4815 = vadd.f32 %v4765, 1.0
      %v4816 = vadd.f32 %v4767, 1.0
      %v4817 = vadd.f32 %v4769, 1.0
      %v4818 = vadd.f32 %v4771, 1.0
      %v4819 = vadd.f32 %v4773, 1.0
      %v4820 = vadd.f32 %v4775, 1.0
      %v4821 = vadd.f32 %v4777, 1.0
      %v4822 = vadd.f32 %v4779, 1.0
      %v4823 = vadd.f32 %v4781, 1.0
      %v4824 = vadd.f32 %v4783, 1.0
      %v4825 = vadd.f32 %v4785, 1.0
      %v4826 = vadd.f32 %v4787, 1.0
      %v4827 = vadd.f32 %v4789, 1.0
      %v4828 = vadd.f32 %v4791, 1.0
      %v4829 = vadd.f32 %v4793, 1.0
      %v4830 = vadd.f32 %v4795, 1.0
      %v4831 = vadd.f32 %v4797, 1.0
      %v4832 = vadd.f32 %v4799, 1.0
      %v4833 = vadd.f32 %v4801, 1.0
      %v4834 = vrcp.pop %v4802
      %v4835 = vmul.f32 %v4802, %v4834
      %v4836 = vsub.f32 1.0, %v4835
      %v4837 = vmul.f32 %v4834, %v4836
      %v4838 = vadd.f32 %v4834, %v4837
      %vm4839 = vweird.f32 %v4802
      %vm4840 = vweird.f32 %v4834
      %vm4841 = vmor %vm4839, %vm4840
      %v4842 = vsel %vm4841, %v4834, %v4838
      %v4843 = vand.u32 2147483647, %v4802
      %vm4844 = vcmp.eq.f32.partialorder %v4843, 8.507059e+37
      %v4845 = vand.u32 %v4802, 2147483648
      %v4846 = vor.u32 1.1754944e-38, %v4845
      %v4847 = vsel %vm4844, %v4846, %v4842
      %v4848 = vmul.f32 1.0, %v4847
      %v4849 = vrcp.pop %v4803
      %v4850 = vmul.f32 %v4803, %v4849
      %v4851 = vsub.f32 1.0, %v4850
      %v4852 = vmul.f32 %v4849, %v4851
      %v4853 = vadd.f32 %v4849, %v4852
      %vm4854 = vweird.f32 %v4803
      %vm4855 = vweird.f32 %v4849
      %vm4856 = vmor %vm4854, %vm4855
      %v4857 = vsel %vm4856, %v4849, %v4853
      %v4858 = vand.u32 2147483647, %v4803
      %vm4859 = vcmp.eq.f32.partialorder %v4858, 8.507059e+37
      %v4860 = vand.u32 %v4803, 2147483648
      %v4861 = vor.u32 1.1754944e-38, %v4860
      %v4862 = vsel %vm4859, %v4861, %v4857
      %v4863 = vmul.f32 1.0, %v4862
      %v4864 = vrcp.pop %v4804
      %v4865 = vmul.f32 %v4804, %v4864
      %v4866 = vsub.f32 1.0, %v4865
      %v4867 = vmul.f32 %v4864, %v4866
      %v4868 = vadd.f32 %v4864, %v4867
      %vm4869 = vweird.f32 %v4804
      %vm4870 = vweird.f32 %v4864
      %vm4871 = vmor %vm4869, %vm4870
      %v4872 = vsel %vm4871, %v4864, %v4868
      %v4873 = vand.u32 2147483647, %v4804
      %vm4874 = vcmp.eq.f32.partialorder %v4873, 8.507059e+37
      %v4875 = vand.u32 %v4804, 2147483648
      %v4876 = vor.u32 1.1754944e-38, %v4875
      %v4877 = vsel %vm4874, %v4876, %v4872
      %v4878 = vmul.f32 1.0, %v4877
      %v4879 = vrcp.pop %v4805
      %v4880 = vmul.f32 %v4805, %v4879
      %v4881 = vsub.f32 1.0, %v4880
      %v4882 = vmul.f32 %v4879, %v4881
      %v4883 = vadd.f32 %v4879, %v4882
      %vm4884 = vweird.f32 %v4805
      %vm4885 = vweird.f32 %v4879
      %vm4886 = vmor %vm4884, %vm4885
      %v4887 = vsel %vm4886, %v4879, %v4883
      %v4888 = vand.u32 2147483647, %v4805
      %vm4889 = vcmp.eq.f32.partialorder %v4888, 8.507059e+37
      %v4890 = vand.u32 %v4805, 2147483648
      %v4891 = vor.u32 1.1754944e-38, %v4890
      %v4892 = vsel %vm4889, %v4891, %v4887
      %v4893 = vmul.f32 1.0, %v4892
      %v4894 = vrcp.pop %v4806
      %v4895 = vmul.f32 %v4806, %v4894
      %v4896 = vsub.f32 1.0, %v4895
      %v4897 = vmul.f32 %v4894, %v4896
      %v4898 = vadd.f32 %v4894, %v4897
      %vm4899 = vweird.f32 %v4806
      %vm4900 = vweird.f32 %v4894
      %vm4901 = vmor %vm4899, %vm4900
      %v4902 = vsel %vm4901, %v4894, %v4898
      %v4903 = vand.u32 2147483647, %v4806
      %vm4904 = vcmp.eq.f32.partialorder %v4903, 8.507059e+37
      %v4905 = vand.u32 %v4806, 2147483648
      %v4906 = vor.u32 1.1754944e-38, %v4905
      %v4907 = vsel %vm4904, %v4906, %v4902
      %v4908 = vmul.f32 1.0, %v4907
      %v4909 = vrcp.pop %v4807
      %v4910 = vmul.f32 %v4807, %v4909
      %v4911 = vsub.f32 1.0, %v4910
      %v4912 = vmul.f32 %v4909, %v4911
      %v4913 = vadd.f32 %v4909, %v4912
      %vm4914 = vweird.f32 %v4807
      %vm4915 = vweird.f32 %v4909
      %vm4916 = vmor %vm4914, %vm4915
      %v4917 = vsel %vm4916, %v4909, %v4913
      %v4918 = vand.u32 2147483647, %v4807
      %vm4919 = vcmp.eq.f32.partialorder %v4918, 8.507059e+37
      %v4920 = vand.u32 %v4807, 2147483648
      %v4921 = vor.u32 1.1754944e-38, %v4920
      %v4922 = vsel %vm4919, %v4921, %v4917
      %v4923 = vmul.f32 1.0, %v4922
      %v4924 = vrcp.pop %v4808
      %v4925 = vmul.f32 %v4808, %v4924
      %v4926 = vsub.f32 1.0, %v4925
      %v4927 = vmul.f32 %v4924, %v4926
      %v4928 = vadd.f32 %v4924, %v4927
      %vm4929 = vweird.f32 %v4808
      %vm4930 = vweird.f32 %v4924
      %vm4931 = vmor %vm4929, %vm4930
      %v4932 = vsel %vm4931, %v4924, %v4928
      %v4933 = vand.u32 2147483647, %v4808
      %vm4934 = vcmp.eq.f32.partialorder %v4933, 8.507059e+37
      %v4935 = vand.u32 %v4808, 2147483648
      %v4936 = vor.u32 1.1754944e-38, %v4935
      %v4937 = vsel %vm4934, %v4936, %v4932
      %v4938 = vmul.f32 1.0, %v4937
      %v4939 = vrcp.pop %v4809
      %v4940 = vmul.f32 %v4809, %v4939
      %v4941 = vsub.f32 1.0, %v4940
      %v4942 = vmul.f32 %v4939, %v4941
      %v4943 = vadd.f32 %v4939, %v4942
      %vm4944 = vweird.f32 %v4809
      %vm4945 = vweird.f32 %v4939
      %vm4946 = vmor %vm4944, %vm4945
      %v4947 = vsel %vm4946, %v4939, %v4943
      %v4948 = vand.u32 2147483647, %v4809
      %vm4949 = vcmp.eq.f32.partialorder %v4948, 8.507059e+37
      %v4950 = vand.u32 %v4809, 2147483648
      %v4951 = vor.u32 1.1754944e-38, %v4950
      %v4952 = vsel %vm4949, %v4951, %v4947
      %v4953 = vmul.f32 1.0, %v4952
      %v4954 = vrcp.pop %v4810
      %v4955 = vmul.f32 %v4810, %v4954
      %v4956 = vsub.f32 1.0, %v4955
      %v4957 = vmul.f32 %v4954, %v4956
      %v4958 = vadd.f32 %v4954, %v4957
      %vm4959 = vweird.f32 %v4810
      %vm4960 = vweird.f32 %v4954
      %vm4961 = vmor %vm4959, %vm4960
      %v4962 = vsel %vm4961, %v4954, %v4958
      %v4963 = vand.u32 2147483647, %v4810
      %vm4964 = vcmp.eq.f32.partialorder %v4963, 8.507059e+37
      %v4965 = vand.u32 %v4810, 2147483648
      %v4966 = vor.u32 1.1754944e-38, %v4965
      %v4967 = vsel %vm4964, %v4966, %v4962
      %v4968 = vmul.f32 1.0, %v4967
      %v4969 = vrcp.pop %v4811
      %v4970 = vmul.f32 %v4811, %v4969
      %v4971 = vsub.f32 1.0, %v4970
      %v4972 = vmul.f32 %v4969, %v4971
      %v4973 = vadd.f32 %v4969, %v4972
      %vm4974 = vweird.f32 %v4811
      %vm4975 = vweird.f32 %v4969
      %vm4976 = vmor %vm4974, %vm4975
      %v4977 = vsel %vm4976, %v4969, %v4973
      %v4978 = vand.u32 2147483647, %v4811
      %vm4979 = vcmp.eq.f32.partialorder %v4978, 8.507059e+37
      %v4980 = vand.u32 %v4811, 2147483648
      %v4981 = vor.u32 1.1754944e-38, %v4980
      %v4982 = vsel %vm4979, %v4981, %v4977
      %v4983 = vmul.f32 1.0, %v4982
      %v4984 = vrcp.pop %v4812
      %v4985 = vmul.f32 %v4812, %v4984
      %v4986 = vsub.f32 1.0, %v4985
      %v4987 = vmul.f32 %v4984, %v4986
      %v4988 = vadd.f32 %v4984, %v4987
      %vm4989 = vweird.f32 %v4812
      %vm4990 = vweird.f32 %v4984
      %vm4991 = vmor %vm4989, %vm4990
      %v4992 = vsel %vm4991, %v4984, %v4988
      %v4993 = vand.u32 2147483647, %v4812
      %vm4994 = vcmp.eq.f32.partialorder %v4993, 8.507059e+37
      %v4995 = vand.u32 %v4812, 2147483648
      %v4996 = vor.u32 1.1754944e-38, %v4995
      %v4997 = vsel %vm4994, %v4996, %v4992
      %v4998 = vmul.f32 1.0, %v4997
      %v4999 = vrcp.pop %v4813
      %v5000 = vmul.f32 %v4813, %v4999
      %v5001 = vsub.f32 1.0, %v5000
      %v5002 = vmul.f32 %v4999, %v5001
      %v5003 = vadd.f32 %v4999, %v5002
      %vm5004 = vweird.f32 %v4813
      %vm5005 = vweird.f32 %v4999
      %vm5006 = vmor %vm5004, %vm5005
      %v5007 = vsel %vm5006, %v4999, %v5003
      %v5008 = vand.u32 2147483647, %v4813
      %vm5009 = vcmp.eq.f32.partialorder %v5008, 8.507059e+37
      %v5010 = vand.u32 %v4813, 2147483648
      %v5011 = vor.u32 1.1754944e-38, %v5010
      %v5012 = vsel %vm5009, %v5011, %v5007
      %v5013 = vmul.f32 1.0, %v5012
      %v5014 = vrcp.pop %v4814
      %v5015 = vmul.f32 %v4814, %v5014
      %v5016 = vsub.f32 1.0, %v5015
      %v5017 = vmul.f32 %v5014, %v5016
      %v5018 = vadd.f32 %v5014, %v5017
      %vm5019 = vweird.f32 %v4814
      %vm5020 = vweird.f32 %v5014
      %vm5021 = vmor %vm5019, %vm5020
      %v5022 = vsel %vm5021, %v5014, %v5018
      %v5023 = vand.u32 2147483647, %v4814
      %vm5024 = vcmp.eq.f32.partialorder %v5023, 8.507059e+37
      %v5025 = vand.u32 %v4814, 2147483648
      %v5026 = vor.u32 1.1754944e-38, %v5025
      %v5027 = vsel %vm5024, %v5026, %v5022
      %v5028 = vmul.f32 1.0, %v5027
      %v5029 = vrcp.pop %v4815
      %v5030 = vmul.f32 %v4815, %v5029
      %v5031 = vsub.f32 1.0, %v5030
      %v5032 = vmul.f32 %v5029, %v5031
      %v5033 = vadd.f32 %v5029, %v5032
      %vm5034 = vweird.f32 %v4815
      %vm5035 = vweird.f32 %v5029
      %vm5036 = vmor %vm5034, %vm5035
      %v5037 = vsel %vm5036, %v5029, %v5033
      %v5038 = vand.u32 2147483647, %v4815
      %vm5039 = vcmp.eq.f32.partialorder %v5038, 8.507059e+37
      %v5040 = vand.u32 %v4815, 2147483648
      %v5041 = vor.u32 1.1754944e-38, %v5040
      %v5042 = vsel %vm5039, %v5041, %v5037
      %v5043 = vmul.f32 1.0, %v5042
      %v5044 = vrcp.pop %v4816
      %v5045 = vmul.f32 %v4816, %v5044
      %v5046 = vsub.f32 1.0, %v5045
      %v5047 = vmul.f32 %v5044, %v5046
      %v5048 = vadd.f32 %v5044, %v5047
      %vm5049 = vweird.f32 %v4816
      %vm5050 = vweird.f32 %v5044
      %vm5051 = vmor %vm5049, %vm5050
      %v5052 = vsel %vm5051, %v5044, %v5048
      %v5053 = vand.u32 2147483647, %v4816
      %vm5054 = vcmp.eq.f32.partialorder %v5053, 8.507059e+37
      %v5055 = vand.u32 %v4816, 2147483648
      %v5056 = vor.u32 1.1754944e-38, %v5055
      %v5057 = vsel %vm5054, %v5056, %v5052
      %v5058 = vmul.f32 1.0, %v5057
      %v5059 = vrcp.pop %v4817
      %v5060 = vmul.f32 %v4817, %v5059
      %v5061 = vsub.f32 1.0, %v5060
      %v5062 = vmul.f32 %v5059, %v5061
      %v5063 = vadd.f32 %v5059, %v5062
      %vm5064 = vweird.f32 %v4817
      %vm5065 = vweird.f32 %v5059
      %vm5066 = vmor %vm5064, %vm5065
      %v5067 = vsel %vm5066, %v5059, %v5063
      %v5068 = vand.u32 2147483647, %v4817
      %vm5069 = vcmp.eq.f32.partialorder %v5068, 8.507059e+37
      %v5070 = vand.u32 %v4817, 2147483648
      %v5071 = vor.u32 1.1754944e-38, %v5070
      %v5072 = vsel %vm5069, %v5071, %v5067
      %v5073 = vmul.f32 1.0, %v5072
      %v5074 = vrcp.pop %v4818
      %v5075 = vmul.f32 %v4818, %v5074
      %v5076 = vsub.f32 1.0, %v5075
      %v5077 = vmul.f32 %v5074, %v5076
      %v5078 = vadd.f32 %v5074, %v5077
      %vm5079 = vweird.f32 %v4818
      %vm5080 = vweird.f32 %v5074
      %vm5081 = vmor %vm5079, %vm5080
      %v5082 = vsel %vm5081, %v5074, %v5078
      %v5083 = vand.u32 2147483647, %v4818
      %vm5084 = vcmp.eq.f32.partialorder %v5083, 8.507059e+37
      %v5085 = vand.u32 %v4818, 2147483648
      %v5086 = vor.u32 1.1754944e-38, %v5085
      %v5087 = vsel %vm5084, %v5086, %v5082
      %v5088 = vmul.f32 1.0, %v5087
      %v5089 = vrcp.pop %v4819
      %v5090 = vmul.f32 %v4819, %v5089
      %v5091 = vsub.f32 1.0, %v5090
      %v5092 = vmul.f32 %v5089, %v5091
      %v5093 = vadd.f32 %v5089, %v5092
      %vm5094 = vweird.f32 %v4819
      %vm5095 = vweird.f32 %v5089
      %vm5096 = vmor %vm5094, %vm5095
      %v5097 = vsel %vm5096, %v5089, %v5093
      %v5098 = vand.u32 2147483647, %v4819
      %vm5099 = vcmp.eq.f32.partialorder %v5098, 8.507059e+37
      %v5100 = vand.u32 %v4819, 2147483648
      %v5101 = vor.u32 1.1754944e-38, %v5100
      %v5102 = vsel %vm5099, %v5101, %v5097
      %v5103 = vmul.f32 1.0, %v5102
      %v5104 = vrcp.pop %v4820
      %v5105 = vmul.f32 %v4820, %v5104
      %v5106 = vsub.f32 1.0, %v5105
      %v5107 = vmul.f32 %v5104, %v5106
      %v5108 = vadd.f32 %v5104, %v5107
      %vm5109 = vweird.f32 %v4820
      %vm5110 = vweird.f32 %v5104
      %vm5111 = vmor %vm5109, %vm5110
      %v5112 = vsel %vm5111, %v5104, %v5108
      %v5113 = vand.u32 2147483647, %v4820
      %vm5114 = vcmp.eq.f32.partialorder %v5113, 8.507059e+37
      %v5115 = vand.u32 %v4820, 2147483648
      %v5116 = vor.u32 1.1754944e-38, %v5115
      %v5117 = vsel %vm5114, %v5116, %v5112
      %v5118 = vmul.f32 1.0, %v5117
      %v5119 = vrcp.pop %v4821
      %v5120 = vmul.f32 %v4821, %v5119
      %v5121 = vsub.f32 1.0, %v5120
      %v5122 = vmul.f32 %v5119, %v5121
      %v5123 = vadd.f32 %v5119, %v5122
      %vm5124 = vweird.f32 %v4821
      %vm5125 = vweird.f32 %v5119
      %vm5126 = vmor %vm5124, %vm5125
      %v5127 = vsel %vm5126, %v5119, %v5123
      %v5128 = vand.u32 2147483647, %v4821
      %vm5129 = vcmp.eq.f32.partialorder %v5128, 8.507059e+37
      %v5130 = vand.u32 %v4821, 2147483648
      %v5131 = vor.u32 1.1754944e-38, %v5130
      %v5132 = vsel %vm5129, %v5131, %v5127
      %v5133 = vmul.f32 1.0, %v5132
      %v5134 = vrcp.pop %v4822
      %v5135 = vmul.f32 %v4822, %v5134
      %v5136 = vsub.f32 1.0, %v5135
      %v5137 = vmul.f32 %v5134, %v5136
      %v5138 = vadd.f32 %v5134, %v5137
      %vm5139 = vweird.f32 %v4822
      %vm5140 = vweird.f32 %v5134
      %vm5141 = vmor %vm5139, %vm5140
      %v5142 = vsel %vm5141, %v5134, %v5138
      %v5143 = vand.u32 2147483647, %v4822
      %vm5144 = vcmp.eq.f32.partialorder %v5143, 8.507059e+37
      %v5145 = vand.u32 %v4822, 2147483648
      %v5146 = vor.u32 1.1754944e-38, %v5145
      %v5147 = vsel %vm5144, %v5146, %v5142
      %v5148 = vmul.f32 1.0, %v5147
      %v5149 = vrcp.pop %v4823
      %v5150 = vmul.f32 %v4823, %v5149
      %v5151 = vsub.f32 1.0, %v5150
      %v5152 = vmul.f32 %v5149, %v5151
      %v5153 = vadd.f32 %v5149, %v5152
      %vm5154 = vweird.f32 %v4823
      %vm5155 = vweird.f32 %v5149
      %vm5156 = vmor %vm5154, %vm5155
      %v5157 = vsel %vm5156, %v5149, %v5153
      %v5158 = vand.u32 2147483647, %v4823
      %vm5159 = vcmp.eq.f32.partialorder %v5158, 8.507059e+37
      %v5160 = vand.u32 %v4823, 2147483648
      %v5161 = vor.u32 1.1754944e-38, %v5160
      %v5162 = vsel %vm5159, %v5161, %v5157
      %v5163 = vmul.f32 1.0, %v5162
      %v5164 = vrcp.pop %v4824
      %v5165 = vmul.f32 %v4824, %v5164
      %v5166 = vsub.f32 1.0, %v5165
      %v5167 = vmul.f32 %v5164, %v5166
      %v5168 = vadd.f32 %v5164, %v5167
      %vm5169 = vweird.f32 %v4824
      %vm5170 = vweird.f32 %v5164
      %vm5171 = vmor %vm5169, %vm5170
      %v5172 = vsel %vm5171, %v5164, %v5168
      %v5173 = vand.u32 2147483647, %v4824
      %vm5174 = vcmp.eq.f32.partialorder %v5173, 8.507059e+37
      %v5175 = vand.u32 %v4824, 2147483648
      %v5176 = vor.u32 1.1754944e-38, %v5175
      %v5177 = vsel %vm5174, %v5176, %v5172
      %v5178 = vmul.f32 1.0, %v5177
      %v5179 = vrcp.pop %v4825
      %v5180 = vmul.f32 %v4825, %v5179
      %v5181 = vsub.f32 1.0, %v5180
      %v5182 = vmul.f32 %v5179, %v5181
      %v5183 = vadd.f32 %v5179, %v5182
      %vm5184 = vweird.f32 %v4825
      %vm5185 = vweird.f32 %v5179
      %vm5186 = vmor %vm5184, %vm5185
      %v5187 = vsel %vm5186, %v5179, %v5183
      %v5188 = vand.u32 2147483647, %v4825
      %vm5189 = vcmp.eq.f32.partialorder %v5188, 8.507059e+37
      %v5190 = vand.u32 %v4825, 2147483648
      %v5191 = vor.u32 1.1754944e-38, %v5190
      %v5192 = vsel %vm5189, %v5191, %v5187
      %v5193 = vmul.f32 1.0, %v5192
      %v5194 = vrcp.pop %v4826
      %v5195 = vmul.f32 %v4826, %v5194
      %v5196 = vsub.f32 1.0, %v5195
      %v5197 = vmul.f32 %v5194, %v5196
      %v5198 = vadd.f32 %v5194, %v5197
      %vm5199 = vweird.f32 %v4826
      %vm5200 = vweird.f32 %v5194
      %vm5201 = vmor %vm5199, %vm5200
      %v5202 = vsel %vm5201, %v5194, %v5198
      %v5203 = vand.u32 2147483647, %v4826
      %vm5204 = vcmp.eq.f32.partialorder %v5203, 8.507059e+37
      %v5205 = vand.u32 %v4826, 2147483648
      %v5206 = vor.u32 1.1754944e-38, %v5205
      %v5207 = vsel %vm5204, %v5206, %v5202
      %v5208 = vmul.f32 1.0, %v5207
      %v5209 = vrcp.pop %v4827
      %v5210 = vmul.f32 %v4827, %v5209
      %v5211 = vsub.f32 1.0, %v5210
      %v5212 = vmul.f32 %v5209, %v5211
      %v5213 = vadd.f32 %v5209, %v5212
      %vm5214 = vweird.f32 %v4827
      %vm5215 = vweird.f32 %v5209
      %vm5216 = vmor %vm5214, %vm5215
      %v5217 = vsel %vm5216, %v5209, %v5213
      %v5218 = vand.u32 2147483647, %v4827
      %vm5219 = vcmp.eq.f32.partialorder %v5218, 8.507059e+37
      %v5220 = vand.u32 %v4827, 2147483648
      %v5221 = vor.u32 1.1754944e-38, %v5220
      %v5222 = vsel %vm5219, %v5221, %v5217
      %v5223 = vmul.f32 1.0, %v5222
      %v5224 = vrcp.pop %v4828
      %v5225 = vmul.f32 %v4828, %v5224
      %v5226 = vsub.f32 1.0, %v5225
      %v5227 = vmul.f32 %v5224, %v5226
      %v5228 = vadd.f32 %v5224, %v5227
      %vm5229 = vweird.f32 %v4828
      %vm5230 = vweird.f32 %v5224
      %vm5231 = vmor %vm5229, %vm5230
      %v5232 = vsel %vm5231, %v5224, %v5228
      %v5233 = vand.u32 2147483647, %v4828
      %vm5234 = vcmp.eq.f32.partialorder %v5233, 8.507059e+37
      %v5235 = vand.u32 %v4828, 2147483648
      %v5236 = vor.u32 1.1754944e-38, %v5235
      %v5237 = vsel %vm5234, %v5236, %v5232
      %v5238 = vmul.f32 1.0, %v5237
      %v5239 = vrcp.pop %v4829
      %v5240 = vmul.f32 %v4829, %v5239
      %v5241 = vsub.f32 1.0, %v5240
      %v5242 = vmul.f32 %v5239, %v5241
      %v5243 = vadd.f32 %v5239, %v5242
      %vm5244 = vweird.f32 %v4829
      %vm5245 = vweird.f32 %v5239
      %vm5246 = vmor %vm5244, %vm5245
      %v5247 = vsel %vm5246, %v5239, %v5243
      %v5248 = vand.u32 2147483647, %v4829
      %vm5249 = vcmp.eq.f32.partialorder %v5248, 8.507059e+37
      %v5250 = vand.u32 %v4829, 2147483648
      %v5251 = vor.u32 1.1754944e-38, %v5250
      %v5252 = vsel %vm5249, %v5251, %v5247
      %v5253 = vmul.f32 1.0, %v5252
      %v5254 = vrcp.pop %v4830
      %v5255 = vmul.f32 %v4830, %v5254
      %v5256 = vsub.f32 1.0, %v5255
      %v5257 = vmul.f32 %v5254, %v5256
      %v5258 = vadd.f32 %v5254, %v5257
      %vm5259 = vweird.f32 %v4830
      %vm5260 = vweird.f32 %v5254
      %vm5261 = vmor %vm5259, %vm5260
      %v5262 = vsel %vm5261, %v5254, %v5258
      %v5263 = vand.u32 2147483647, %v4830
      %vm5264 = vcmp.eq.f32.partialorder %v5263, 8.507059e+37
      %v5265 = vand.u32 %v4830, 2147483648
      %v5266 = vor.u32 1.1754944e-38, %v5265
      %v5267 = vsel %vm5264, %v5266, %v5262
      %v5268 = vmul.f32 1.0, %v5267
      %v5269 = vrcp.pop %v4831
      %v5270 = vmul.f32 %v4831, %v5269
      %v5271 = vsub.f32 1.0, %v5270
      %v5272 = vmul.f32 %v5269, %v5271
      %v5273 = vadd.f32 %v5269, %v5272
      %vm5274 = vweird.f32 %v4831
      %vm5275 = vweird.f32 %v5269
      %vm5276 = vmor %vm5274, %vm5275
      %v5277 = vsel %vm5276, %v5269, %v5273
      %v5278 = vand.u32 2147483647, %v4831
      %vm5279 = vcmp.eq.f32.partialorder %v5278, 8.507059e+37
      %v5280 = vand.u32 %v4831, 2147483648
      %v5281 = vor.u32 1.1754944e-38, %v5280
      %v5282 = vsel %vm5279, %v5281, %v5277
      %v5283 = vmul.f32 1.0, %v5282
      %v5284 = vrcp.pop %v4832
      %v5285 = vmul.f32 %v4832, %v5284
      %v5286 = vsub.f32 1.0, %v5285
      %v5287 = vmul.f32 %v5284, %v5286
      %v5288 = vadd.f32 %v5284, %v5287
      %vm5289 = vweird.f32 %v4832
      %vm5290 = vweird.f32 %v5284
      %vm5291 = vmor %vm5289, %vm5290
      %v5292 = vsel %vm5291, %v5284, %v5288
      %v5293 = vand.u32 2147483647, %v4832
      %vm5294 = vcmp.eq.f32.partialorder %v5293, 8.507059e+37
      %v5295 = vand.u32 %v4832, 2147483648
      %v5296 = vor.u32 1.1754944e-38, %v5295
      %v5297 = vsel %vm5294, %v5296, %v5292
      %v5298 = vmul.f32 1.0, %v5297
      %v5299 = vrcp.pop %v4833
      %v5300 = vmul.f32 %v4833, %v5299
      %v5301 = vsub.f32 1.0, %v5300
      %v5302 = vmul.f32 %v5299, %v5301
      %v5303 = vadd.f32 %v5299, %v5302
      %vm5304 = vweird.f32 %v4833
      %vm5305 = vweird.f32 %v5299
      %vm5306 = vmor %vm5304, %vm5305
      %v5307 = vsel %vm5306, %v5299, %v5303
      %v5308 = vand.u32 2147483647, %v4833
      %vm5309 = vcmp.eq.f32.partialorder %v5308, 8.507059e+37
      %v5310 = vand.u32 %v4833, 2147483648
      %v5311 = vor.u32 1.1754944e-38, %v5310
      %v5312 = vsel %vm5309, %v5311, %v5307
      %v5313 = vmul.f32 1.0, %v5312
      %v5314 = vtanh.pop %v4674
      %v5315 = vtanh.pop %v4675
      %v5316 = vtanh.pop %v4676
      %v5317 = vtanh.pop %v4677
      %v5318 = vtanh.pop %v4678
      %v5319 = vtanh.pop %v4679
      %v5320 = vtanh.pop %v4680
      %v5321 = vtanh.pop %v4681
      %v5322 = vtanh.pop %v4682
      %v5323 = vtanh.pop %v4683
      %v5324 = vtanh.pop %v4684
      %v5325 = vtanh.pop %v4685
      %v5326 = vtanh.pop %v4686
      %v5327 = vtanh.pop %v4687
      %v5328 = vtanh.pop %v4688
      %v5329 = vtanh.pop %v4689
      %v5330 = vtanh.pop %v4690
      %v5331 = vtanh.pop %v4691
      %v5332 = vtanh.pop %v4692
      %v5333 = vtanh.pop %v4693
      %v5334 = vtanh.pop %v4694
      %v5335 = vtanh.pop %v4695
      %v5336 = vtanh.pop %v4696
      %v5337 = vtanh.pop %v4697
      %v5338 = vtanh.pop %v4698
      %v5339 = vtanh.pop %v4699
      %v5340 = vtanh.pop %v4700
      %v5341 = vtanh.pop %v4701
      %v5342 = vtanh.pop %v4702
      %v5343 = vtanh.pop %v4703
      %v5344 = vtanh.pop %v4704
      %v5345 = vtanh.pop %v4705
      %v5346 = vld [vmem:[%s289] sm:$0xff]
      %v5347 = vld [vmem:[%s289 + $0x8] sm:$0xff]
      %v5348 = vld [vmem:[%s289 + $0x10] sm:$0xff]
      %v5349 = vld [vmem:[%s289 + $0x18] sm:$0xff]
      %v5350 = vld [vmem:[%s289 + $0x20] sm:$0xff]
      %v5351 = vld [vmem:[%s289 + $0x28] sm:$0xff]
      %v5352 = vld [vmem:[%s289 + $0x30] sm:$0xff]
      %v5353 = vld [vmem:[%s289 + $0x38] sm:$0xff]
      %v5354 = vld [vmem:[%s289 + $0x40] sm:$0xff]
      %v5355 = vld [vmem:[%s289 + $0x48] sm:$0xff]
      %v5356 = vld [vmem:[%s289 + $0x50] sm:$0xff]
      %v5357 = vld [vmem:[%s289 + $0x58] sm:$0xff]
      %v5358 = vld [vmem:[%s289 + $0x60] sm:$0xff]
      %v5359 = vld [vmem:[%s289 + $0x68] sm:$0xff]
      %v5360 = vld [vmem:[%s289 + $0x70] sm:$0xff]
      %v5361 = vld [vmem:[%s289 + $0x78] sm:$0xff]
      %v5362 = vld [vmem:[%s289 + $0x80] sm:$0xff]
      %v5363 = vld [vmem:[%s289 + $0x88] sm:$0xff]
      %v5364 = vld [vmem:[%s289 + $0x90] sm:$0xff]
      %v5365 = vld [vmem:[%s289 + $0x98] sm:$0xff]
      %v5366 = vld [vmem:[%s289 + $0xa0] sm:$0xff]
      %v5367 = vld [vmem:[%s289 + $0xa8] sm:$0xff]
      %v5368 = vld [vmem:[%s289 + $0xb0] sm:$0xff]
      %v5369 = vld [vmem:[%s289 + $0xb8] sm:$0xff]
      %v5370 = vld [vmem:[%s289 + $0xc0] sm:$0xff]
      %v5371 = vld [vmem:[%s289 + $0xc8] sm:$0xff]
      %v5372 = vld [vmem:[%s289 + $0xd0] sm:$0xff]
      %v5373 = vld [vmem:[%s289 + $0xd8] sm:$0xff]
      %v5374 = vld [vmem:[%s289 + $0xe0] sm:$0xff]
      %v5375 = vld [vmem:[%s289 + $0xe8] sm:$0xff]
      %v5376 = vld [vmem:[%s289 + $0xf0] sm:$0xff]
      %v5377 = vld [vmem:[%s289 + $0xf8] sm:$0xff]
      %5410 = vrot.lane.b32.xlu0 %v5346, 32
      %v5411 = vpop.permute.xlu0 %5410
      %5412 = vrot.lane.b32.xlu0 %v5347, 32
      %v5413 = vpop.permute.xlu0 %5412
      %5414 = vrot.lane.b32.xlu0 %v5348, 32
      %v5415 = vpop.permute.xlu0 %5414
      %5416 = vrot.lane.b32.xlu0 %v5349, 32
      %v5417 = vpop.permute.xlu0 %5416
      %5418 = vrot.lane.b32.xlu0 %v5350, 32
      %v5419 = vpop.permute.xlu0 %5418
      %5420 = vrot.lane.b32.xlu0 %v5351, 32
      %v5421 = vpop.permute.xlu0 %5420
      %5422 = vrot.lane.b32.xlu0 %v5352, 32
      %v5423 = vpop.permute.xlu0 %5422
      %5424 = vrot.lane.b32.xlu0 %v5353, 32
      %v5425 = vpop.permute.xlu0 %5424
      %5426 = vrot.lane.b32.xlu0 %v5354, 32
      %v5427 = vpop.permute.xlu0 %5426
      %5428 = vrot.lane.b32.xlu0 %v5355, 32
      %v5429 = vpop.permute.xlu0 %5428
      %5430 = vrot.lane.b32.xlu0 %v5356, 32
      %v5431 = vpop.permute.xlu0 %5430
      %5432 = vrot.lane.b32.xlu0 %v5357, 32
      %v5433 = vpop.permute.xlu0 %5432
      %5434 = vrot.lane.b32.xlu0 %v5358, 32
      %v5435 = vpop.permute.xlu0 %5434
      %5436 = vrot.lane.b32.xlu0 %v5359, 32
      %v5437 = vpop.permute.xlu0 %5436
      %5438 = vrot.lane.b32.xlu0 %v5360, 32
      %v5439 = vpop.permute.xlu0 %5438
      %5440 = vrot.lane.b32.xlu0 %v5361, 32
      %v5441 = vpop.permute.xlu0 %5440
      %5442 = vrot.lane.b32.xlu0 %v5362, 32
      %v5443 = vpop.permute.xlu0 %5442
      %5444 = vrot.lane.b32.xlu0 %v5363, 32
      %v5445 = vpop.permute.xlu0 %5444
      %5446 = vrot.lane.b32.xlu0 %v5364, 32
      %v5447 = vpop.permute.xlu0 %5446
      %5448 = vrot.lane.b32.xlu0 %v5365, 32
      %v5449 = vpop.permute.xlu0 %5448
      %5450 = vrot.lane.b32.xlu0 %v5366, 32
      %v5451 = vpop.permute.xlu0 %5450
      %5452 = vrot.lane.b32.xlu0 %v5367, 32
      %v5453 = vpop.permute.xlu0 %5452
      %5454 = vrot.lane.b32.xlu0 %v5368, 32
      %v5455 = vpop.permute.xlu0 %5454
      %5456 = vrot.lane.b32.xlu0 %v5369, 32
      %v5457 = vpop.permute.xlu0 %5456
      %5458 = vrot.lane.b32.xlu0 %v5370, 32
      %v5459 = vpop.permute.xlu0 %5458
      %5460 = vrot.lane.b32.xlu0 %v5371, 32
      %v5461 = vpop.permute.xlu0 %5460
      %5462 = vrot.lane.b32.xlu0 %v5372, 32
      %v5463 = vpop.permute.xlu0 %5462
      %5464 = vrot.lane.b32.xlu0 %v5373, 32
      %v5465 = vpop.permute.xlu0 %5464
      %5466 = vrot.lane.b32.xlu0 %v5374, 32
      %v5467 = vpop.permute.xlu0 %5466
      %5468 = vrot.lane.b32.xlu0 %v5375, 32
      %v5469 = vpop.permute.xlu0 %5468
      %5470 = vrot.lane.b32.xlu0 %v5376, 32
      %v5471 = vpop.permute.xlu0 %5470
      %5472 = vrot.lane.b32.xlu0 %v5377, 32
      %v5473 = vpop.permute.xlu0 %5472
      %v5506 = vmul.f32 %v4848, %v5411
      %v5507 = vmul.f32 %v4863, %v5413
      %v5508 = vmul.f32 %v4878, %v5415
      %v5509 = vmul.f32 %v4893, %v5417
      %v5510 = vmul.f32 %v4908, %v5419
      %v5511 = vmul.f32 %v4923, %v5421
      %v5512 = vmul.f32 %v4938, %v5423
      %v5513 = vmul.f32 %v4953, %v5425
      %v5514 = vmul.f32 %v4968, %v5427
      %v5515 = vmul.f32 %v4983, %v5429
      %v5516 = vmul.f32 %v4998, %v5431
      %v5517 = vmul.f32 %v5013, %v5433
      %v5518 = vmul.f32 %v5028, %v5435
      %v5519 = vmul.f32 %v5043, %v5437
      %v5520 = vmul.f32 %v5058, %v5439
      %v5521 = vmul.f32 %v5073, %v5441
      %v5522 = vmul.f32 %v5088, %v5443
      %v5523 = vmul.f32 %v5103, %v5445
      %v5524 = vmul.f32 %v5118, %v5447
      %v5525 = vmul.f32 %v5133, %v5449
      %v5526 = vmul.f32 %v5148, %v5451
      %v5527 = vmul.f32 %v5163, %v5453
      %v5528 = vmul.f32 %v5178, %v5455
      %v5529 = vmul.f32 %v5193, %v5457
      %v5530 = vmul.f32 %v5208, %v5459
      %v5531 = vmul.f32 %v5223, %v5461
      %v5532 = vmul.f32 %v5238, %v5463
      %v5533 = vmul.f32 %v5253, %v5465
      %v5534 = vmul.f32 %v5268, %v5467
      %v5535 = vmul.f32 %v5283, %v5469
      %v5536 = vmul.f32 %v5298, %v5471
      %v5537 = vmul.f32 %v5313, %v5473
      %5570 = vrot.lane.b32.xlu0 %v5314, 32
      %v5571 = vpop.permute.xlu0 %5570
      %5572 = vrot.lane.b32.xlu0 %v5315, 32
      %v5573 = vpop.permute.xlu0 %5572
      %5574 = vrot.lane.b32.xlu0 %v5316, 32
      %v5575 = vpop.permute.xlu0 %5574
      %5576 = vrot.lane.b32.xlu0 %v5317, 32
      %v5577 = vpop.permute.xlu0 %5576
      %5578 = vrot.lane.b32.xlu0 %v5318, 32
      %v5579 = vpop.permute.xlu0 %5578
      %5580 = vrot.lane.b32.xlu0 %v5319, 32
      %v5581 = vpop.permute.xlu0 %5580
      %5582 = vrot.lane.b32.xlu0 %v5320, 32
      %v5583 = vpop.permute.xlu0 %5582
      %5584 = vrot.lane.b32.xlu0 %v5321, 32
      %v5585 = vpop.permute.xlu0 %5584
      %5586 = vrot.lane.b32.xlu0 %v5322, 32
      %v5587 = vpop.permute.xlu0 %5586
      %5588 = vrot.lane.b32.xlu0 %v5323, 32
      %v5589 = vpop.permute.xlu0 %5588
      %5590 = vrot.lane.b32.xlu0 %v5324, 32
      %v5591 = vpop.permute.xlu0 %5590
      %5592 = vrot.lane.b32.xlu0 %v5325, 32
      %v5593 = vpop.permute.xlu0 %5592
      %5594 = vrot.lane.b32.xlu0 %v5326, 32
      %v5595 = vpop.permute.xlu0 %5594
      %5596 = vrot.lane.b32.xlu0 %v5327, 32
      %v5597 = vpop.permute.xlu0 %5596
      %5598 = vrot.lane.b32.xlu0 %v5328, 32
      %v5599 = vpop.permute.xlu0 %5598
      %5600 = vrot.lane.b32.xlu0 %v5329, 32
      %v5601 = vpop.permute.xlu0 %5600
      %5602 = vrot.lane.b32.xlu0 %v5330, 32
      %v5603 = vpop.permute.xlu0 %5602
      %5604 = vrot.lane.b32.xlu0 %v5331, 32
      %v5605 = vpop.permute.xlu0 %5604
      %5606 = vrot.lane.b32.xlu0 %v5332, 32
      %v5607 = vpop.permute.xlu0 %5606
      %5608 = vrot.lane.b32.xlu0 %v5333, 32
      %v5609 = vpop.permute.xlu0 %5608
      %5610 = vrot.lane.b32.xlu0 %v5334, 32
      %v5611 = vpop.permute.xlu0 %5610
      %5612 = vrot.lane.b32.xlu0 %v5335, 32
      %v5613 = vpop.permute.xlu0 %5612
      %5614 = vrot.lane.b32.xlu0 %v5336, 32
      %v5615 = vpop.permute.xlu0 %5614
      %5616 = vrot.lane.b32.xlu0 %v5337, 32
      %v5617 = vpop.permute.xlu0 %5616
      %5618 = vrot.lane.b32.xlu0 %v5338, 32
      %v5619 = vpop.permute.xlu0 %5618
      %5620 = vrot.lane.b32.xlu0 %v5339, 32
      %v5621 = vpop.permute.xlu0 %5620
      %5622 = vrot.lane.b32.xlu0 %v5340, 32
      %v5623 = vpop.permute.xlu0 %5622
      %5624 = vrot.lane.b32.xlu0 %v5341, 32
      %v5625 = vpop.permute.xlu0 %5624
      %5626 = vrot.lane.b32.xlu0 %v5342, 32
      %v5627 = vpop.permute.xlu0 %5626
      %5628 = vrot.lane.b32.xlu0 %v5343, 32
      %v5629 = vpop.permute.xlu0 %5628
      %5630 = vrot.lane.b32.xlu0 %v5344, 32
      %v5631 = vpop.permute.xlu0 %5630
      %5632 = vrot.lane.b32.xlu0 %v5345, 32
      %v5633 = vpop.permute.xlu0 %5632
      %v5666 = vmul.f32 %v4848, %v5571
      %v5667 = vmul.f32 %v4863, %v5573
      %v5668 = vmul.f32 %v4878, %v5575
      %v5669 = vmul.f32 %v4893, %v5577
      %v5670 = vmul.f32 %v4908, %v5579
      %v5671 = vmul.f32 %v4923, %v5581
      %v5672 = vmul.f32 %v4938, %v5583
      %v5673 = vmul.f32 %v4953, %v5585
      %v5674 = vmul.f32 %v4968, %v5587
      %v5675 = vmul.f32 %v4983, %v5589
      %v5676 = vmul.f32 %v4998, %v5591
      %v5677 = vmul.f32 %v5013, %v5593
      %v5678 = vmul.f32 %v5028, %v5595
      %v5679 = vmul.f32 %v5043, %v5597
      %v5680 = vmul.f32 %v5058, %v5599
      %v5681 = vmul.f32 %v5073, %v5601
      %v5682 = vmul.f32 %v5088, %v5603
      %v5683 = vmul.f32 %v5103, %v5605
      %v5684 = vmul.f32 %v5118, %v5607
      %v5685 = vmul.f32 %v5133, %v5609
      %v5686 = vmul.f32 %v5148, %v5611
      %v5687 = vmul.f32 %v5163, %v5613
      %v5688 = vmul.f32 %v5178, %v5615
      %v5689 = vmul.f32 %v5193, %v5617
      %v5690 = vmul.f32 %v5208, %v5619
      %v5691 = vmul.f32 %v5223, %v5621
      %v5692 = vmul.f32 %v5238, %v5623
      %v5693 = vmul.f32 %v5253, %v5625
      %v5694 = vmul.f32 %v5268, %v5627
      %v5695 = vmul.f32 %v5283, %v5629
      %v5696 = vmul.f32 %v5298, %v5631
      %v5697 = vmul.f32 %v5313, %v5633
      %5730 = vrot.lane.b32.xlu0 %v5666, 32
      %v5731 = vpop.permute.xlu0 %5730
      %5732 = vrot.lane.b32.xlu0 %v5667, 32
      %v5733 = vpop.permute.xlu0 %5732
      %5734 = vrot.lane.b32.xlu0 %v5668, 32
      %v5735 = vpop.permute.xlu0 %5734
      %5736 = vrot.lane.b32.xlu0 %v5669, 32
      %v5737 = vpop.permute.xlu0 %5736
      %5738 = vrot.lane.b32.xlu0 %v5670, 32
      %v5739 = vpop.permute.xlu0 %5738
      %5740 = vrot.lane.b32.xlu0 %v5671, 32
      %v5741 = vpop.permute.xlu0 %5740
      %5742 = vrot.lane.b32.xlu0 %v5672, 32
      %v5743 = vpop.permute.xlu0 %5742
      %5744 = vrot.lane.b32.xlu0 %v5673, 32
      %v5745 = vpop.permute.xlu0 %5744
      %5746 = vrot.lane.b32.xlu0 %v5674, 32
      %v5747 = vpop.permute.xlu0 %5746
      %5748 = vrot.lane.b32.xlu0 %v5675, 32
      %v5749 = vpop.permute.xlu0 %5748
      %5750 = vrot.lane.b32.xlu0 %v5676, 32
      %v5751 = vpop.permute.xlu0 %5750
      %5752 = vrot.lane.b32.xlu0 %v5677, 32
      %v5753 = vpop.permute.xlu0 %5752
      %5754 = vrot.lane.b32.xlu0 %v5678, 32
      %v5755 = vpop.permute.xlu0 %5754
      %5756 = vrot.lane.b32.xlu0 %v5679, 32
      %v5757 = vpop.permute.xlu0 %5756
      %5758 = vrot.lane.b32.xlu0 %v5680, 32
      %v5759 = vpop.permute.xlu0 %5758
      %5760 = vrot.lane.b32.xlu0 %v5681, 32
      %v5761 = vpop.permute.xlu0 %5760
      %5762 = vrot.lane.b32.xlu0 %v5682, 32
      %v5763 = vpop.permute.xlu0 %5762
      %5764 = vrot.lane.b32.xlu0 %v5683, 32
      %v5765 = vpop.permute.xlu0 %5764
      %5766 = vrot.lane.b32.xlu0 %v5684, 32
      %v5767 = vpop.permute.xlu0 %5766
      %5768 = vrot.lane.b32.xlu0 %v5685, 32
      %v5769 = vpop.permute.xlu0 %5768
      %5770 = vrot.lane.b32.xlu0 %v5686, 32
      %v5771 = vpop.permute.xlu0 %5770
      %5772 = vrot.lane.b32.xlu0 %v5687, 32
      %v5773 = vpop.permute.xlu0 %5772
      %5774 = vrot.lane.b32.xlu0 %v5688, 32
      %v5775 = vpop.permute.xlu0 %5774
      %5776 = vrot.lane.b32.xlu0 %v5689, 32
      %v5777 = vpop.permute.xlu0 %5776
      %5778 = vrot.lane.b32.xlu0 %v5690, 32
      %v5779 = vpop.permute.xlu0 %5778
      %5780 = vrot.lane.b32.xlu0 %v5691, 32
      %v5781 = vpop.permute.xlu0 %5780
      %5782 = vrot.lane.b32.xlu0 %v5692, 32
      %v5783 = vpop.permute.xlu0 %5782
      %5784 = vrot.lane.b32.xlu0 %v5693, 32
      %v5785 = vpop.permute.xlu0 %5784
      %5786 = vrot.lane.b32.xlu0 %v5694, 32
      %v5787 = vpop.permute.xlu0 %5786
      %5788 = vrot.lane.b32.xlu0 %v5695, 32
      %v5789 = vpop.permute.xlu0 %5788
      %5790 = vrot.lane.b32.xlu0 %v5696, 32
      %v5791 = vpop.permute.xlu0 %5790
      %5792 = vrot.lane.b32.xlu0 %v5697, 32
      %v5793 = vpop.permute.xlu0 %5792
      %v5826 = vadd.f32 %v5506, %v5731
      %v5827 = vadd.f32 %v5507, %v5733
      %v5828 = vadd.f32 %v5508, %v5735
      %v5829 = vadd.f32 %v5509, %v5737
      %v5830 = vadd.f32 %v5510, %v5739
      %v5831 = vadd.f32 %v5511, %v5741
      %v5832 = vadd.f32 %v5512, %v5743
      %v5833 = vadd.f32 %v5513, %v5745
      %v5834 = vadd.f32 %v5514, %v5747
      %v5835 = vadd.f32 %v5515, %v5749
      %v5836 = vadd.f32 %v5516, %v5751
      %v5837 = vadd.f32 %v5517, %v5753
      %v5838 = vadd.f32 %v5518, %v5755
      %v5839 = vadd.f32 %v5519, %v5757
      %v5840 = vadd.f32 %v5520, %v5759
      %v5841 = vadd.f32 %v5521, %v5761
      %v5842 = vadd.f32 %v5522, %v5763
      %v5843 = vadd.f32 %v5523, %v5765
      %v5844 = vadd.f32 %v5524, %v5767
      %v5845 = vadd.f32 %v5525, %v5769
      %v5846 = vadd.f32 %v5526, %v5771
      %v5847 = vadd.f32 %v5527, %v5773
      %v5848 = vadd.f32 %v5528, %v5775
      %v5849 = vadd.f32 %v5529, %v5777
      %v5850 = vadd.f32 %v5530, %v5779
      %v5851 = vadd.f32 %v5531, %v5781
      %v5852 = vadd.f32 %v5532, %v5783
      %v5853 = vadd.f32 %v5533, %v5785
      %v5854 = vadd.f32 %v5534, %v5787
      %v5855 = vadd.f32 %v5535, %v5789
      %v5856 = vadd.f32 %v5536, %v5791
      %v5857 = vadd.f32 %v5537, %v5793
      %v5858 = vtanh.pop %v5826
      %v5859 = vtanh.pop %v5827
      %v5860 = vtanh.pop %v5828
      %v5861 = vtanh.pop %v5829
      %v5862 = vtanh.pop %v5830
      %v5863 = vtanh.pop %v5831
      %v5864 = vtanh.pop %v5832
      %v5865 = vtanh.pop %v5833
      %v5866 = vtanh.pop %v5834
      %v5867 = vtanh.pop %v5835
      %v5868 = vtanh.pop %v5836
      %v5869 = vtanh.pop %v5837
      %v5870 = vtanh.pop %v5838
      %v5871 = vtanh.pop %v5839
      %v5872 = vtanh.pop %v5840
      %v5873 = vtanh.pop %v5841
      %v5874 = vtanh.pop %v5842
      %v5875 = vtanh.pop %v5843
      %v5876 = vtanh.pop %v5844
      %v5877 = vtanh.pop %v5845
      %v5878 = vtanh.pop %v5846
      %v5879 = vtanh.pop %v5847
      %v5880 = vtanh.pop %v5848
      %v5881 = vtanh.pop %v5849
      %v5882 = vtanh.pop %v5850
      %v5883 = vtanh.pop %v5851
      %v5884 = vtanh.pop %v5852
      %v5885 = vtanh.pop %v5853
      %v5886 = vtanh.pop %v5854
      %v5887 = vtanh.pop %v5855
      %v5888 = vtanh.pop %v5856
      %v5889 = vtanh.pop %v5857
      %5922 = vrot.lane.b32.xlu0 %v5858, 32
      %v5923 = vpop.permute.xlu0 %5922
      %5924 = vrot.lane.b32.xlu0 %v5859, 32
      %v5925 = vpop.permute.xlu0 %5924
      %5926 = vrot.lane.b32.xlu0 %v5860, 32
      %v5927 = vpop.permute.xlu0 %5926
      %5928 = vrot.lane.b32.xlu0 %v5861, 32
      %v5929 = vpop.permute.xlu0 %5928
      %5930 = vrot.lane.b32.xlu0 %v5862, 32
      %v5931 = vpop.permute.xlu0 %5930
      %5932 = vrot.lane.b32.xlu0 %v5863, 32
      %v5933 = vpop.permute.xlu0 %5932
      %5934 = vrot.lane.b32.xlu0 %v5864, 32
      %v5935 = vpop.permute.xlu0 %5934
      %5936 = vrot.lane.b32.xlu0 %v5865, 32
      %v5937 = vpop.permute.xlu0 %5936
      %5938 = vrot.lane.b32.xlu0 %v5866, 32
      %v5939 = vpop.permute.xlu0 %5938
      %5940 = vrot.lane.b32.xlu0 %v5867, 32
      %v5941 = vpop.permute.xlu0 %5940
      %5942 = vrot.lane.b32.xlu0 %v5868, 32
      %v5943 = vpop.permute.xlu0 %5942
      %5944 = vrot.lane.b32.xlu0 %v5869, 32
      %v5945 = vpop.permute.xlu0 %5944
      %5946 = vrot.lane.b32.xlu0 %v5870, 32
      %v5947 = vpop.permute.xlu0 %5946
      %5948 = vrot.lane.b32.xlu0 %v5871, 32
      %v5949 = vpop.permute.xlu0 %5948
      %5950 = vrot.lane.b32.xlu0 %v5872, 32
      %v5951 = vpop.permute.xlu0 %5950
      %5952 = vrot.lane.b32.xlu0 %v5873, 32
      %v5953 = vpop.permute.xlu0 %5952
      %5954 = vrot.lane.b32.xlu0 %v5874, 32
      %v5955 = vpop.permute.xlu0 %5954
      %5956 = vrot.lane.b32.xlu0 %v5875, 32
      %v5957 = vpop.permute.xlu0 %5956
      %5958 = vrot.lane.b32.xlu0 %v5876, 32
      %v5959 = vpop.permute.xlu0 %5958
      %5960 = vrot.lane.b32.xlu0 %v5877, 32
      %v5961 = vpop.permute.xlu0 %5960
      %5962 = vrot.lane.b32.xlu0 %v5878, 32
      %v5963 = vpop.permute.xlu0 %5962
      %5964 = vrot.lane.b32.xlu0 %v5879, 32
      %v5965 = vpop.permute.xlu0 %5964
      %5966 = vrot.lane.b32.xlu0 %v5880, 32
      %v5967 = vpop.permute.xlu0 %5966
      %5968 = vrot.lane.b32.xlu0 %v5881, 32
      %v5969 = vpop.permute.xlu0 %5968
      %5970 = vrot.lane.b32.xlu0 %v5882, 32
      %v5971 = vpop.permute.xlu0 %5970
      %5972 = vrot.lane.b32.xlu0 %v5883, 32
      %v5973 = vpop.permute.xlu0 %5972
      %5974 = vrot.lane.b32.xlu0 %v5884, 32
      %v5975 = vpop.permute.xlu0 %5974
      %5976 = vrot.lane.b32.xlu0 %v5885, 32
      %v5977 = vpop.permute.xlu0 %5976
      %5978 = vrot.lane.b32.xlu0 %v5886, 32
      %v5979 = vpop.permute.xlu0 %5978
      %5980 = vrot.lane.b32.xlu0 %v5887, 32
      %v5981 = vpop.permute.xlu0 %5980
      %5982 = vrot.lane.b32.xlu0 %v5888, 32
      %v5983 = vpop.permute.xlu0 %5982
      %5984 = vrot.lane.b32.xlu0 %v5889, 32
      %v5985 = vpop.permute.xlu0 %5984
      %v6018 = vmul.f32 %v4848, %v5923
      %v6019 = vmul.f32 %v4863, %v5925
      %v6020 = vmul.f32 %v4878, %v5927
      %v6021 = vmul.f32 %v4893, %v5929
      %v6022 = vmul.f32 %v4908, %v5931
      %v6023 = vmul.f32 %v4923, %v5933
      %v6024 = vmul.f32 %v4938, %v5935
      %v6025 = vmul.f32 %v4953, %v5937
      %v6026 = vmul.f32 %v4968, %v5939
      %v6027 = vmul.f32 %v4983, %v5941
      %v6028 = vmul.f32 %v4998, %v5943
      %v6029 = vmul.f32 %v5013, %v5945
      %v6030 = vmul.f32 %v5028, %v5947
      %v6031 = vmul.f32 %v5043, %v5949
      %v6032 = vmul.f32 %v5058, %v5951
      %v6033 = vmul.f32 %v5073, %v5953
      %v6034 = vmul.f32 %v5088, %v5955
      %v6035 = vmul.f32 %v5103, %v5957
      %v6036 = vmul.f32 %v5118, %v5959
      %v6037 = vmul.f32 %v5133, %v5961
      %v6038 = vmul.f32 %v5148, %v5963
      %v6039 = vmul.f32 %v5163, %v5965
      %v6040 = vmul.f32 %v5178, %v5967
      %v6041 = vmul.f32 %v5193, %v5969
      %v6042 = vmul.f32 %v5208, %v5971
      %v6043 = vmul.f32 %v5223, %v5973
      %v6044 = vmul.f32 %v5238, %v5975
      %v6045 = vmul.f32 %v5253, %v5977
      %v6046 = vmul.f32 %v5268, %v5979
      %v6047 = vmul.f32 %v5283, %v5981
      %v6048 = vmul.f32 %v5298, %v5983
      %v6049 = vmul.f32 %v5313, %v5985
      %6082 = vrot.lane.b32.xlu0 %v6018, 64
      %v6083 = vpop.permute.xlu0 %6082
      %6084 = vrot.lane.b32.xlu0 %v6019, 64
      %v6085 = vpop.permute.xlu0 %6084
      %6086 = vrot.lane.b32.xlu0 %v6020, 64
      %v6087 = vpop.permute.xlu0 %6086
      %6088 = vrot.lane.b32.xlu0 %v6021, 64
      %v6089 = vpop.permute.xlu0 %6088
      %6090 = vrot.lane.b32.xlu0 %v6022, 64
      %v6091 = vpop.permute.xlu0 %6090
      %6092 = vrot.lane.b32.xlu0 %v6023, 64
      %v6093 = vpop.permute.xlu0 %6092
      %6094 = vrot.lane.b32.xlu0 %v6024, 64
      %v6095 = vpop.permute.xlu0 %6094
      %6096 = vrot.lane.b32.xlu0 %v6025, 64
      %v6097 = vpop.permute.xlu0 %6096
      %6098 = vrot.lane.b32.xlu0 %v6026, 64
      %v6099 = vpop.permute.xlu0 %6098
      %6100 = vrot.lane.b32.xlu0 %v6027, 64
      %v6101 = vpop.permute.xlu0 %6100
      %6102 = vrot.lane.b32.xlu0 %v6028, 64
      %v6103 = vpop.permute.xlu0 %6102
      %6104 = vrot.lane.b32.xlu0 %v6029, 64
      %v6105 = vpop.permute.xlu0 %6104
      %6106 = vrot.lane.b32.xlu0 %v6030, 64
      %v6107 = vpop.permute.xlu0 %6106
      %6108 = vrot.lane.b32.xlu0 %v6031, 64
      %v6109 = vpop.permute.xlu0 %6108
      %6110 = vrot.lane.b32.xlu0 %v6032, 64
      %v6111 = vpop.permute.xlu0 %6110
      %6112 = vrot.lane.b32.xlu0 %v6033, 64
      %v6113 = vpop.permute.xlu0 %6112
      %6114 = vrot.lane.b32.xlu0 %v6034, 64
      %v6115 = vpop.permute.xlu0 %6114
      %6116 = vrot.lane.b32.xlu0 %v6035, 64
      %v6117 = vpop.permute.xlu0 %6116
      %6118 = vrot.lane.b32.xlu0 %v6036, 64
      %v6119 = vpop.permute.xlu0 %6118
      %6120 = vrot.lane.b32.xlu0 %v6037, 64
      %v6121 = vpop.permute.xlu0 %6120
      %6122 = vrot.lane.b32.xlu0 %v6038, 64
      %v6123 = vpop.permute.xlu0 %6122
      %6124 = vrot.lane.b32.xlu0 %v6039, 64
      %v6125 = vpop.permute.xlu0 %6124
      %6126 = vrot.lane.b32.xlu0 %v6040, 64
      %v6127 = vpop.permute.xlu0 %6126
      %6128 = vrot.lane.b32.xlu0 %v6041, 64
      %v6129 = vpop.permute.xlu0 %6128
      %6130 = vrot.lane.b32.xlu0 %v6042, 64
      %v6131 = vpop.permute.xlu0 %6130
      %6132 = vrot.lane.b32.xlu0 %v6043, 64
      %v6133 = vpop.permute.xlu0 %6132
      %6134 = vrot.lane.b32.xlu0 %v6044, 64
      %v6135 = vpop.permute.xlu0 %6134
      %6136 = vrot.lane.b32.xlu0 %v6045, 64
      %v6137 = vpop.permute.xlu0 %6136
      %6138 = vrot.lane.b32.xlu0 %v6046, 64
      %v6139 = vpop.permute.xlu0 %6138
      %6140 = vrot.lane.b32.xlu0 %v6047, 64
      %v6141 = vpop.permute.xlu0 %6140
      %6142 = vrot.lane.b32.xlu0 %v6048, 64
      %v6143 = vpop.permute.xlu0 %6142
      %6144 = vrot.lane.b32.xlu0 %v6049, 64
      %v6145 = vpop.permute.xlu0 %6144
      %6178 = vst.msk [vmem:[%s295] sm:$0xff] %vm704, %v6083
      %6179 = vst.msk [vmem:[%s295 + $0x8] sm:$0xff] %vm704, %v6085
      %6180 = vst.msk [vmem:[%s295 + $0x10] sm:$0xff] %vm704, %v6087
      %6181 = vst.msk [vmem:[%s295 + $0x18] sm:$0xff] %vm704, %v6089
      %6182 = vst.msk [vmem:[%s295 + $0x20] sm:$0xff] %vm704, %v6091
      %6183 = vst.msk [vmem:[%s295 + $0x28] sm:$0xff] %vm704, %v6093
      %6184 = vst.msk [vmem:[%s295 + $0x30] sm:$0xff] %vm704, %v6095
      %6185 = vst.msk [vmem:[%s295 + $0x38] sm:$0xff] %vm704, %v6097
      %6186 = vst.msk [vmem:[%s295 + $0x40] sm:$0xff] %vm704, %v6099
      %6187 = vst.msk [vmem:[%s295 + $0x48] sm:$0xff] %vm704, %v6101
      %6188 = vst.msk [vmem:[%s295 + $0x50] sm:$0xff] %vm704, %v6103
      %6189 = vst.msk [vmem:[%s295 + $0x58] sm:$0xff] %vm704, %v6105
      %6190 = vst.msk [vmem:[%s295 + $0x60] sm:$0xff] %vm704, %v6107
      %6191 = vst.msk [vmem:[%s295 + $0x68] sm:$0xff] %vm704, %v6109
      %6192 = vst.msk [vmem:[%s295 + $0x70] sm:$0xff] %vm704, %v6111
      %6193 = vst.msk [vmem:[%s295 + $0x78] sm:$0xff] %vm704, %v6113
      %6194 = vst.msk [vmem:[%s295 + $0x80] sm:$0xff] %vm704, %v6115
      %6195 = vst.msk [vmem:[%s295 + $0x88] sm:$0xff] %vm704, %v6117
      %6196 = vst.msk [vmem:[%s295 + $0x90] sm:$0xff] %vm704, %v6119
      %6197 = vst.msk [vmem:[%s295 + $0x98] sm:$0xff] %vm704, %v6121
      %6198 = vst.msk [vmem:[%s295 + $0xa0] sm:$0xff] %vm704, %v6123
      %6199 = vst.msk [vmem:[%s295 + $0xa8] sm:$0xff] %vm704, %v6125
      %6200 = vst.msk [vmem:[%s295 + $0xb0] sm:$0xff] %vm704, %v6127
      %6201 = vst.msk [vmem:[%s295 + $0xb8] sm:$0xff] %vm704, %v6129
      %6202 = vst.msk [vmem:[%s295 + $0xc0] sm:$0xff] %vm704, %v6131
      %6203 = vst.msk [vmem:[%s295 + $0xc8] sm:$0xff] %vm704, %v6133
      %6204 = vst.msk [vmem:[%s295 + $0xd0] sm:$0xff] %vm704, %v6135
      %6205 = vst.msk [vmem:[%s295 + $0xd8] sm:$0xff] %vm704, %v6137
      %6206 = vst.msk [vmem:[%s295 + $0xe0] sm:$0xff] %vm704, %v6139
      %6207 = vst.msk [vmem:[%s295 + $0xe8] sm:$0xff] %vm704, %v6141
      %6208 = vst.msk [vmem:[%s295 + $0xf0] sm:$0xff] %vm704, %v6143
      %6209 = vst.msk [vmem:[%s295 + $0xf8] sm:$0xff] %vm704, %v6145
      %vm6210 = vcmask 523520
      %6211 = vst.msk [vmem:[%s295] sm:$0xff] %vm6210, %v5826
      %6212 = vst.msk [vmem:[%s295 + $0x8] sm:$0xff] %vm6210, %v5827
      %6213 = vst.msk [vmem:[%s295 + $0x10] sm:$0xff] %vm6210, %v5828
      %6214 = vst.msk [vmem:[%s295 + $0x18] sm:$0xff] %vm6210, %v5829
      %6215 = vst.msk [vmem:[%s295 + $0x20] sm:$0xff] %vm6210, %v5830
      %6216 = vst.msk [vmem:[%s295 + $0x28] sm:$0xff] %vm6210, %v5831
      %6217 = vst.msk [vmem:[%s295 + $0x30] sm:$0xff] %vm6210, %v5832
      %6218 = vst.msk [vmem:[%s295 + $0x38] sm:$0xff] %vm6210, %v5833
      %6219 = vst.msk [vmem:[%s295 + $0x40] sm:$0xff] %vm6210, %v5834
      %6220 = vst.msk [vmem:[%s295 + $0x48] sm:$0xff] %vm6210, %v5835
      %6221 = vst.msk [vmem:[%s295 + $0x50] sm:$0xff] %vm6210, %v5836
      %6222 = vst.msk [vmem:[%s295 + $0x58] sm:$0xff] %vm6210, %v5837
      %6223 = vst.msk [vmem:[%s295 + $0x60] sm:$0xff] %vm6210, %v5838
      %6224 = vst.msk [vmem:[%s295 + $0x68] sm:$0xff] %vm6210, %v5839
      %6225 = vst.msk [vmem:[%s295 + $0x70] sm:$0xff] %vm6210, %v5840
      %6226 = vst.msk [vmem:[%s295 + $0x78] sm:$0xff] %vm6210, %v5841
      %6227 = vst.msk [vmem:[%s295 + $0x80] sm:$0xff] %vm6210, %v5842
      %6228 = vst.msk [vmem:[%s295 + $0x88] sm:$0xff] %vm6210, %v5843
      %6229 = vst.msk [vmem:[%s295 + $0x90] sm:$0xff] %vm6210, %v5844
      %6230 = vst.msk [vmem:[%s295 + $0x98] sm:$0xff] %vm6210, %v5845
      %6231 = vst.msk [vmem:[%s295 + $0xa0] sm:$0xff] %vm6210, %v5846
      %6232 = vst.msk [vmem:[%s295 + $0xa8] sm:$0xff] %vm6210, %v5847
      %6233 = vst.msk [vmem:[%s295 + $0xb0] sm:$0xff] %vm6210, %v5848
      %6234 = vst.msk [vmem:[%s295 + $0xb8] sm:$0xff] %vm6210, %v5849
      %6235 = vst.msk [vmem:[%s295 + $0xc0] sm:$0xff] %vm6210, %v5850
      %6236 = vst.msk [vmem:[%s295 + $0xc8] sm:$0xff] %vm6210, %v5851
      %6237 = vst.msk [vmem:[%s295 + $0xd0] sm:$0xff] %vm6210, %v5852
      %6238 = vst.msk [vmem:[%s295 + $0xd8] sm:$0xff] %vm6210, %v5853
      %6239 = vst.msk [vmem:[%s295 + $0xe0] sm:$0xff] %vm6210, %v5854
      %6240 = vst.msk [vmem:[%s295 + $0xe8] sm:$0xff] %vm6210, %v5855
      %6241 = vst.msk [vmem:[%s295 + $0xf0] sm:$0xff] %vm6210, %v5856
      %6242 = vst.msk [vmem:[%s295 + $0xf8] sm:$0xff] %vm6210, %v5857
      %s6243 = smul.u32 32, %s17
      %p6244 = scmp.lt.s32.totalorder %s6243, 63
      %s6245 = scalar_select %p6244, %s6243, 63
      %s6246 = smul.addr %s6245, 8
      %s6247 = scalar_lea.vmem %s6, %s6246
      // Predicated region
      $region45: #{conv_lstm_cell_pallas.1} parent=43 // pred_check
        %p6248 = pneg %p176
      $region46: #{conv_lstm_cell_pallas.1} parent=43 // pred_check_branch
        %6250 = sbr.rel (%p6248) target = $region48
      $region47: #{conv_lstm_cell_pallas.1} parent=43 // pred_region
        %s6251 = smul.u32 32, %s17
      $region48: #{conv_lstm_cell_pallas.1} parent=43 // pred_fallthru
        _
    $region44: #{conv_lstm_cell_pallas.1} parent=5 // pred_fallthru
      _
    %p6252 = scmp.le.s32.totalorder 2, %s12
    // Predicated region
    $region49: #{conv_lstm_cell_pallas.1} parent=5 // pred_check
      %p6253 = pneg %p6252
    $region50: #{conv_lstm_cell_pallas.1} parent=5 // pred_check_branch
      %6255 = sbr.rel (%p6253) target = $region52
    $region51: #{conv_lstm_cell_pallas.1} parent=5 // pred_region
      %s6256 = ssub.s32 %s12, 2
      // Predicated region
      $region53: #{conv_lstm_cell_pallas.1} parent=51 // pred_check
        %p6257 = pneg %p182
      $region54: #{conv_lstm_cell_pallas.1} parent=51 // pred_check_branch
        %6259 = sbr.rel (%p6257) target = $region56
      $region55: #{conv_lstm_cell_pallas.1} parent=51 // pred_region
        %s6260 = smul.u32 32, %s18
        %p6261 = scmp.lt.s32.totalorder %s6260, 63
        %s6262 = scalar_select %p6261, %s6260, 63
        %s6263 = smul.addr %s6262, 8
        %s6264 = scalar_lea.vmem %s6, %s6263
      $region56: #{conv_lstm_cell_pallas.1} parent=51 // pred_fallthru
        _
    $region52: #{conv_lstm_cell_pallas.1} parent=5 // pred_fallthru
      _
  $region6: #{conv_lstm_cell_pallas.1} parent=0 // loop_footer
    %s16 = sadd.s32 1, %s12
  $region7: #{conv_lstm_cell_pallas.1} parent=0 // loop_footer_branch
    %11 = sbr.rel target = $region3
  $region8: #{conv_lstm_cell_pallas.1} parent=0 // loop_exit
    _

</llo_original>
